<compile_context>
chip_gen: v7x
topology: tpu7x:2x2x1
jax: 0.10.0
libtpu: 0.0.40
codegen_flags: <defaults>
</compile_context>

<pallas_src>
import functools
import math

import jax
import jax.numpy as jnp
from jax.experimental import pallas as pl
from jax.experimental.pallas import tpu as pltpu


# Tile targets (safe on v5e/v6e/v7x with the 40 MiB scoped-VMEM limits set below).
_LINEAR_ROW_TILE = 256   # sequence-row tile for the projection kernels
_Q_TILE = 256            # flash-attention q-row tile
_KV_TILE = 256           # flash-attention kv-row tile
_VMEM_LIMIT = 40 * 1024 * 1024


def _pick_tile(n, target):
    """Largest divisor of n that is <= target, preferring multiples of 16 (bf16 sublane
    packing), then multiples of 8; falls back to the whole axis."""
    if n <= target:
        return n
    for m in (16, 8):
        t = target - (target % m)
        while t >= m:
            if n % t == 0:
                return t
            t -= m
    return n  # fallback: whole axis in one block


# ----------------------------------------------------------------------------
# Kernel A: fused QKV projection + softmax-scale fold + head split.
#   x tile (tn, C) @ W (C, 3C) + b -> per-head stores into q/k/v (B, H, N, D).
#   q columns are pre-multiplied by scale so kernel B never rescales per kv step.
# ----------------------------------------------------------------------------
def _qkv_head_split_kernel(x_ref, w_ref, b_ref, q_ref, k_ref, v_ref, *,
                           num_heads, head_dim, scale):
    C = num_heads * head_dim
    x = x_ref[0]                                                       # (tn, C) compute dtype
    y = jnp.dot(x, w_ref[...], preferred_element_type=jnp.float32)     # (tn, 3C) f32
    y = y + b_ref[...]
    # One cast per third (instead of 3*H per-head casts); scale folded into q in f32.
    yq = (y[:, :C] * scale).astype(q_ref.dtype)
    yk = y[:, C:2 * C].astype(k_ref.dtype)
    yv = y[:, 2 * C:].astype(v_ref.dtype)
    for h in range(num_heads):
        lo = h * head_dim
        hi = lo + head_dim
        q_ref[0, h] = yq[:, lo:hi]
        k_ref[0, h] = yk[:, lo:hi]
        v_ref[0, h] = yv[:, lo:hi]


def _qkv_projection(x, w, b, *, num_heads, head_dim, scale, tn, compute_dtype):
    B, N, C = x.shape
    kernel = functools.partial(_qkv_head_split_kernel,
                               num_heads=num_heads, head_dim=head_dim, scale=scale)
    out_sd = jax.ShapeDtypeStruct((B, num_heads, N, head_dim), compute_dtype)
    hsplit_spec = pl.BlockSpec((1, num_heads, tn, head_dim),
                               lambda bb, i: (bb, 0, i, 0))
    return pl.pallas_call(
        kernel,
        out_shape=(out_sd, out_sd, out_sd),
        grid=(B, N // tn),
        in_specs=[
            pl.BlockSpec((1, tn, C), lambda bb, i: (bb, i, 0)),
            # Weight/bias have constant index maps -> single-buffer them.
            pl.BlockSpec((C, 3 * C), lambda bb, i: (0, 0),
                         pipeline_mode=pl.Buffered(1)),
            pl.BlockSpec((1, 3 * C), lambda bb, i: (0, 0),
                         pipeline_mode=pl.Buffered(1)),
        ],
        out_specs=(hsplit_spec, hsplit_spec, hsplit_spec),
        compiler_params=pltpu.CompilerParams(
            dimension_semantics=("parallel", "parallel"),
            vmem_limit_bytes=_VMEM_LIMIT),
    )(x, w, b)


# ----------------------------------------------------------------------------
# Kernel B: flash attention (all heads batched per block, online softmax).
#   grid = (B, N//tq, N//tk); kv axis is the reduction and MUST stay innermost
#   ("arbitrary") for the scratch init/finalize to be correct.
#   Finalize writes the head-merged, lane-dense (B, N, C) attention output.
# ----------------------------------------------------------------------------
def _flash_attn_kernel(q_ref, k_ref, v_ref, o_ref, m_sc, l_sc, acc_sc):
    ki = pl.program_id(2)

    @pl.when(ki == 0)
    def _():
        m_sc[...] = jnp.full_like(m_sc, -jnp.inf)
        l_sc[...] = jnp.zeros_like(l_sc)
        acc_sc[...] = jnp.zeros_like(acc_sc)

    q = q_ref[0]                                                       # (H, tq, D), pre-scaled
    k = k_ref[0]                                                       # (H, tk, D)
    v = v_ref[0]                                                       # (H, tk, D)

    s = jnp.einsum("hqd,hkd->hqk", q, k,
                   preferred_element_type=jnp.float32)                 # (H, tq, tk) f32

    m_prev = m_sc[...]
    m_new = jnp.maximum(m_prev, s.max(axis=-1, keepdims=True))
    alpha = jnp.exp(m_prev - m_new)
    p = jnp.exp(s - m_new)

    l_sc[...] = alpha * l_sc[...] + p.sum(axis=-1, keepdims=True)
    acc_sc[...] = alpha * acc_sc[...] + jnp.einsum(
        "hqk,hkd->hqd", p.astype(v.dtype), v, preferred_element_type=jnp.float32)
    m_sc[...] = m_new

    @pl.when(ki == pl.num_programs(2) - 1)
    def _():
        inv_l = pl.reciprocal(l_sc[...], approx=True)                  # EUP, ~free
        acc_n = acc_sc[...] * inv_l                                    # (H, tq, D) f32
        H = acc_n.shape[0]
        # Head-merge once per q tile (amortized over the whole kv loop); lane-dense store.
        o = jnp.concatenate([acc_n[h] for h in range(H)], axis=-1)     # (tq, H*D)
        o_ref[0] = o.astype(o_ref.dtype)


def _flash_attention(q, k, v, *, tq, tk, out_dtype):
    B, H, N, D = q.shape
    C = H * D
    q_spec = pl.BlockSpec((1, H, tq, D), lambda bb, qi, ki: (bb, 0, qi, 0))
    kv_spec = pl.BlockSpec((1, H, tk, D), lambda bb, qi, ki: (bb, 0, ki, 0))
    o_spec = pl.BlockSpec((1, tq, C), lambda bb, qi, ki: (bb, qi, 0))
    return pl.pallas_call(
        _flash_attn_kernel,
        out_shape=jax.ShapeDtypeStruct((B, N, C), out_dtype),
        grid=(B, N // tq, N // tk),
        in_specs=[q_spec, kv_spec, kv_spec],
        out_specs=o_spec,
        scratch_shapes=[
            pltpu.VMEM((H, tq, 1), jnp.float32),   # running max
            pltpu.VMEM((H, tq, 1), jnp.float32),   # running denominator
            pltpu.VMEM((H, tq, D), jnp.float32),   # output accumulator
        ],
        compiler_params=pltpu.CompilerParams(
            dimension_semantics=("parallel", "parallel", "arbitrary"),
            vmem_limit_bytes=_VMEM_LIMIT),
    )(q, k, v)


# ----------------------------------------------------------------------------
# Kernel C: output projection as one full-depth GEMM.
#   out(tn, C) = attn(tn, C) @ W_proj(C, C) + b    (lane-dense load + store).
# ----------------------------------------------------------------------------
def _proj_kernel(a_ref, w_ref, b_ref, o_ref):
    y = jnp.dot(a_ref[0], w_ref[...], preferred_element_type=jnp.float32)
    y = y + b_ref[...]
    o_ref[0] = y.astype(o_ref.dtype)


def _output_projection(a, w, b, *, tn, out_dtype):
    B, N, C = a.shape
    return pl.pallas_call(
        _proj_kernel,
        out_shape=jax.ShapeDtypeStruct((B, N, C), out_dtype),
        grid=(B, N // tn),
        in_specs=[
            pl.BlockSpec((1, tn, C), lambda bb, i: (bb, i, 0)),
            pl.BlockSpec((C, C), lambda bb, i: (0, 0),
                         pipeline_mode=pl.Buffered(1)),
            pl.BlockSpec((1, C), lambda bb, i: (0, 0),
                         pipeline_mode=pl.Buffered(1)),
        ],
        out_specs=pl.BlockSpec((1, tn, C), lambda bb, i: (bb, i, 0)),
        compiler_params=pltpu.CompilerParams(
            dimension_semantics=("parallel", "parallel"),
            vmem_limit_bytes=_VMEM_LIMIT),
    )(a, w, b)


# ----------------------------------------------------------------------------
# Full Attention module forward.
# ----------------------------------------------------------------------------
def attention_forward(x, params, num_heads, compute_dtype=jnp.bfloat16):
    B, N, C = x.shape
    assert C % num_heads == 0, "dim should be divisible by num_heads"
    H = num_heads
    D = C // H
    scale = D ** (-0.5)

    # Weights (and x) in compute dtype: halves VMEM residency + HBM traffic and feeds
    # the bf16 MXU on v5e/v6e/v7x.  Biases stay f32 (added to the f32 accumulators).
    x_c = x.astype(compute_dtype)
    w_qkv = params["qkv_w"].astype(compute_dtype)                       # (C, 3C)
    b_qkv = params["qkv_b"].reshape(1, 3 * C).astype(jnp.float32)
    w_proj = params["proj_w"].astype(compute_dtype)                     # (C, C)
    b_proj = params["proj_b"].reshape(1, C).astype(jnp.float32)

    tn = _pick_tile(N, _LINEAR_ROW_TILE)
    tq = _pick_tile(N, _Q_TILE)
    tk = _pick_tile(N, _KV_TILE)

    q, k, v = _qkv_projection(x_c, w_qkv, b_qkv, num_heads=H, head_dim=D,
                              scale=scale, tn=tn, compute_dtype=compute_dtype)
    attn = _flash_attention(q, k, v, tq=tq, tk=tk, out_dtype=compute_dtype)  # (B, N, C)
    out = _output_projection(attn, w_proj, b_proj, tn=tn, out_dtype=x.dtype)
    return out


# ----------------------------------------------------------------------------
# Deterministic parameter init (nn.Linear-shaped, stored as (in, out)).
# ----------------------------------------------------------------------------
def init_params(key, dim):
    k1, k2, k3, k4 = jax.random.split(key, 4)
    bound = 1.0 / math.sqrt(dim)
    return {
        "qkv_w": jax.random.uniform(k1, (dim, 3 * dim), jnp.float32, -bound, bound),
        "qkv_b": jax.random.uniform(k2, (3 * dim,), jnp.float32, -bound, bound),
        "proj_w": jax.random.uniform(k3, (dim, dim), jnp.float32, -bound, bound),
        "proj_b": jax.random.uniform(k4, (dim,), jnp.float32, -bound, bound),
    }


# ----------------------------------------------------------------------------
# Pure-JAX reference for validation.
# ----------------------------------------------------------------------------
def attention_forward_ref(x, params, num_heads):
    B, N, C = x.shape
    head_dim = C // num_heads
    scale = head_dim ** (-0.5)
    qkv = x @ params["qkv_w"] + params["qkv_b"]
    qkv = qkv.reshape(B, N, 3, num_heads, head_dim)
    qkv = jnp.transpose(qkv, (2, 0, 3, 1, 4))
    q, k, v = qkv[0], qkv[1], qkv[2]
    s = jnp.einsum("bhqd,bhkd->bhqk", q, k) * scale
    p = jax.nn.softmax(s, axis=-1)
    o = jnp.einsum("bhqk,bhkd->bhqd", p, v)
    o = jnp.transpose(o, (0, 2, 1, 3)).reshape(B, N, C)
    return o @ params["proj_w"] + params["proj_b"]


if __name__ == "__main__":
    B, N, C, num_heads = 2, 16, 64, 8

    key = jax.random.PRNGKey(0)
    kx, kp = jax.random.split(key)
    x = jax.random.normal(kx, (B, N, C), jnp.float32)
    params = init_params(kp, C)

    ref = attention_forward_ref(x, params, num_heads)

    fwd = jax.jit(attention_forward, static_argnames=("num_heads", "compute_dtype"))

    # Default path: bf16 MXU compute with f32 accumulation / softmax stats.
    out_bf16 = jax.block_until_ready(fwd(x, params, num_heads=num_heads))
    assert out_bf16.shape == (B, N, C)
    assert jnp.allclose(out_bf16, ref, atol=5e-2, rtol=5e-2), "bf16 path mismatch vs reference"

    # f32 compute path (tolerance accounts for the approx reciprocal in the softmax).
    out_f32 = jax.block_until_ready(
        fwd(x, params, num_heads=num_heads, compute_dtype=jnp.float32))
    assert out_f32.shape == (B, N, C)
    assert jnp.allclose(out_f32, ref, atol=2e-3, rtol=2e-3), "f32 path mismatch vs reference"

    print("KERNEL_OK")
</pallas_src>

<mosaic_0001>
module attributes {stable_mosaic.version = 11 : i64} {
  func.func @_flash_attn_kernel(%arg0: i32, %arg1: i32, %arg2: i32, %arg3: memref<1x8x16x8xbf16, #tpu.memory_space<vmem>>, %arg4: memref<1x8x16x8xbf16, #tpu.memory_space<vmem>>, %arg5: memref<1x8x16x8xbf16, #tpu.memory_space<vmem>>, %arg6: memref<1x16x64xbf16, #tpu.memory_space<vmem>>, %arg7: memref<8x16x1xf32, #tpu.memory_space<vmem>>, %arg8: memref<8x16x1xf32, #tpu.memory_space<vmem>>, %arg9: memref<8x16x8xf32, #tpu.memory_space<vmem>>) attributes {dimension_semantics = [#tpu.dimension_semantics<parallel>, #tpu.dimension_semantics<parallel>, #tpu.dimension_semantics<arbitrary>], iteration_bounds = array<i64: 2, 1, 1>, scalar_prefetch = 0 : i64, scratch_operands = 3 : i64, tpu.core_type = #tpu.core_type<tc>, window_params = [{transform_indices = @transform_0, window_bounds = array<i64: 1, 8, 16, 8>}, {transform_indices = @transform_1, window_bounds = array<i64: 1, 8, 16, 8>}, {transform_indices = @transform_2, window_bounds = array<i64: 1, 8, 16, 8>}, {transform_indices = @transform_3, window_bounds = array<i64: 1, 16, 64>}]} {
    %c0_i32 = arith.constant 0 : i32
    %0 = arith.cmpi eq, %arg2, %c0_i32 : i32
    %1 = arith.extui %0 : i1 to i32
    %c0_i32_0 = arith.constant 0 : i32
    %2 = arith.cmpi ne, %1, %c0_i32_0 : i32
    scf.if %2 {
      %cst_35 = arith.constant 0xFF800000 : f32
      %36 = vector.broadcast %cst_35 : f32 to vector<8x16x1xf32>
      %c0_36 = arith.constant 0 : index
      %c0_37 = arith.constant 0 : index
      %c0_38 = arith.constant 0 : index
      %37 = vector.load %arg7[%c0_36, %c0_37, %c0_38] : memref<8x16x1xf32, #tpu.memory_space<vmem>>, vector<8x16x1xf32>
      tpu.vector_store %arg7[%c0_36, %c0_37, %c0_38], %36 {strides = array<i32>} : memref<8x16x1xf32, #tpu.memory_space<vmem>>, vector<8x16x1xf32>,
      %cst_39 = arith.constant 0.000000e+00 : f32
      %38 = vector.broadcast %cst_39 : f32 to vector<8x16x1xf32>
      %c0_40 = arith.constant 0 : index
      %c0_41 = arith.constant 0 : index
      %c0_42 = arith.constant 0 : index
      %39 = vector.load %arg8[%c0_40, %c0_41, %c0_42] : memref<8x16x1xf32, #tpu.memory_space<vmem>>, vector<8x16x1xf32>
      tpu.vector_store %arg8[%c0_40, %c0_41, %c0_42], %38 {strides = array<i32>} : memref<8x16x1xf32, #tpu.memory_space<vmem>>, vector<8x16x1xf32>,
      %cst_43 = arith.constant 0.000000e+00 : f32
      %40 = vector.broadcast %cst_43 : f32 to vector<8x16x8xf32>
      %c0_44 = arith.constant 0 : index
      %c0_45 = arith.constant 0 : index
      %c0_46 = arith.constant 0 : index
      %41 = vector.load %arg9[%c0_44, %c0_45, %c0_46] : memref<8x16x8xf32, #tpu.memory_space<vmem>>, vector<8x16x8xf32>
      tpu.vector_store %arg9[%c0_44, %c0_45, %c0_46], %40 {strides = array<i32>} : memref<8x16x8xf32, #tpu.memory_space<vmem>>, vector<8x16x8xf32>,
    } else {
    }
    %c0 = arith.constant 0 : index
    %c0_1 = arith.constant 0 : index
    %c0_2 = arith.constant 0 : index
    %c0_3 = arith.constant 0 : index
    %3 = vector.load %arg3[%c0, %c0_1, %c0_2, %c0_3] : memref<1x8x16x8xbf16, #tpu.memory_space<vmem>>, vector<1x8x16x8xbf16>
    %4 = vector.shape_cast %3 : vector<1x8x16x8xbf16> to vector<8x16x8xbf16>
    %c0_4 = arith.constant 0 : index
    %c0_5 = arith.constant 0 : index
    %c0_6 = arith.constant 0 : index
    %c0_7 = arith.constant 0 : index
    %5 = vector.load %arg4[%c0_4, %c0_5, %c0_6, %c0_7] : memref<1x8x16x8xbf16, #tpu.memory_space<vmem>>, vector<1x8x16x8xbf16>
    %6 = vector.shape_cast %5 : vector<1x8x16x8xbf16> to vector<8x16x8xbf16>
    %c0_8 = arith.constant 0 : index
    %c0_9 = arith.constant 0 : index
    %c0_10 = arith.constant 0 : index
    %c0_11 = arith.constant 0 : index
    %7 = vector.load %arg5[%c0_8, %c0_9, %c0_10, %c0_11] : memref<1x8x16x8xbf16, #tpu.memory_space<vmem>>, vector<1x8x16x8xbf16>
    %8 = vector.shape_cast %7 : vector<1x8x16x8xbf16> to vector<8x16x8xbf16>
    "tpu.trace_start"() <{level = 10 : i32, message = "hqd,hkd->hqk"}> : () -> ()
    %cst = arith.constant dense<0.000000e+00> : vector<8x16x16xf32>
    %9 = tpu.matmul %4, %6, %cst {dimension_numbers = #tpu.dot_dimension_numbers<[2], [2], [1], [1], [0, 0, 0, 1, 1, 1], [0], [0]>} : vector<8x16x8xbf16>, vector<8x16x8xbf16>, vector<8x16x16xf32> -> vector<8x16x16xf32>
    "tpu.trace_stop"() : () -> ()
    %c0_12 = arith.constant 0 : index
    %c0_13 = arith.constant 0 : index
    %c0_14 = arith.constant 0 : index
    %10 = vector.load %arg7[%c0_12, %c0_13, %c0_14] : memref<8x16x1xf32, #tpu.memory_space<vmem>>, vector<8x16x1xf32>
    %cst_15 = arith.constant dense<0xFF800000> : vector<8x16xf32>
    %11 = vector.multi_reduction <maximumf>, %9, %cst_15 [2] : vector<8x16x16xf32> to vector<8x16xf32>
    %12 = vector.shape_cast %11 : vector<8x16xf32> to vector<8x16x1xf32>
    %13 = arith.maximumf %10, %12 : vector<8x16x1xf32>
    %14 = arith.subf %10, %13 : vector<8x16x1xf32>
    %15 = math.exp %14 : vector<8x16x1xf32>
    %16 = vector.broadcast %13 : vector<8x16x1xf32> to vector<8x16x16xf32>
    %17 = arith.subf %9, %16 : vector<8x16x16xf32>
    %18 = math.exp %17 : vector<8x16x16xf32>
    %c0_16 = arith.constant 0 : index
    %c0_17 = arith.constant 0 : index
    %c0_18 = arith.constant 0 : index
    %19 = vector.load %arg8[%c0_16, %c0_17, %c0_18] : memref<8x16x1xf32, #tpu.memory_space<vmem>>, vector<8x16x1xf32>
    %20 = arith.mulf %15, %19 : vector<8x16x1xf32>
    %cst_19 = arith.constant dense<0.000000e+00> : vector<8x16xf32>
    %21 = vector.multi_reduction <add>, %18, %cst_19 [2] : vector<8x16x16xf32> to vector<8x16xf32>
    %22 = vector.shape_cast %21 : vector<8x16xf32> to vector<8x16x1xf32>
    %23 = arith.addf %20, %22 : vector<8x16x1xf32>
    %c0_20 = arith.constant 0 : index
    %c0_21 = arith.constant 0 : index
    %c0_22 = arith.constant 0 : index
    %24 = vector.load %arg8[%c0_20, %c0_21, %c0_22] : memref<8x16x1xf32, #tpu.memory_space<vmem>>, vector<8x16x1xf32>
    tpu.vector_store %arg8[%c0_20, %c0_21, %c0_22], %23 {strides = array<i32>} : memref<8x16x1xf32, #tpu.memory_space<vmem>>, vector<8x16x1xf32>,
    %c0_23 = arith.constant 0 : index
    %c0_24 = arith.constant 0 : index
    %c0_25 = arith.constant 0 : index
    %25 = vector.load %arg9[%c0_23, %c0_24, %c0_25] : memref<8x16x8xf32, #tpu.memory_space<vmem>>, vector<8x16x8xf32>
    %26 = vector.broadcast %15 : vector<8x16x1xf32> to vector<8x16x8xf32>
    %27 = arith.mulf %26, %25 : vector<8x16x8xf32>
    %28 = arith.truncf %18 : vector<8x16x16xf32> to vector<8x16x16xbf16>
    "tpu.trace_start"() <{level = 10 : i32, message = "hqk,hkd->hqd"}> : () -> ()
    %cst_26 = arith.constant dense<0.000000e+00> : vector<8x16x8xf32>
    %29 = tpu.matmul %28, %8, %cst_26 {dimension_numbers = #tpu.dot_dimension_numbers<[2], [1], [1], [2], [0, 0, 0, 1, 1, 2], [0], [0]>} : vector<8x16x16xbf16>, vector<8x16x8xbf16>, vector<8x16x8xf32> -> vector<8x16x8xf32>
    "tpu.trace_stop"() : () -> ()
    %30 = arith.addf %27, %29 : vector<8x16x8xf32>
    %c0_27 = arith.constant 0 : index
    %c0_28 = arith.constant 0 : index
    %c0_29 = arith.constant 0 : index
    %31 = vector.load %arg9[%c0_27, %c0_28, %c0_29] : memref<8x16x8xf32, #tpu.memory_space<vmem>>, vector<8x16x8xf32>
    tpu.vector_store %arg9[%c0_27, %c0_28, %c0_29], %30 {strides = array<i32>} : memref<8x16x8xf32, #tpu.memory_space<vmem>>, vector<8x16x8xf32>,
    %c0_30 = arith.constant 0 : index
    %c0_31 = arith.constant 0 : index
    %c0_32 = arith.constant 0 : index
    %32 = vector.load %arg7[%c0_30, %c0_31, %c0_32] : memref<8x16x1xf32, #tpu.memory_space<vmem>>, vector<8x16x1xf32>
    tpu.vector_store %arg7[%c0_30, %c0_31, %c0_32], %13 {strides = array<i32>} : memref<8x16x1xf32, #tpu.memory_space<vmem>>, vector<8x16x1xf32>,
    %c0_i32_33 = arith.constant 0 : i32
    %33 = arith.cmpi eq, %arg2, %c0_i32_33 : i32
    %34 = arith.extui %33 : i1 to i32
    %c0_i32_34 = arith.constant 0 : i32
    %35 = arith.cmpi ne, %34, %c0_i32_34 : i32
    scf.if %35 {
      %c0_35 = arith.constant 0 : index
      %c0_36 = arith.constant 0 : index
      %c0_37 = arith.constant 0 : index
      %36 = vector.load %arg8[%c0_35, %c0_36, %c0_37] : memref<8x16x1xf32, #tpu.memory_space<vmem>>, vector<8x16x1xf32>
      %37 = tpu.reciprocal %36 {approx = true} : vector<8x16x1xf32> -> vector<8x16x1xf32>
      %c0_38 = arith.constant 0 : index
      %c0_39 = arith.constant 0 : index
      %c0_40 = arith.constant 0 : index
      %38 = vector.load %arg9[%c0_38, %c0_39, %c0_40] : memref<8x16x8xf32, #tpu.memory_space<vmem>>, vector<8x16x8xf32>
      %39 = vector.broadcast %37 : vector<8x16x1xf32> to vector<8x16x8xf32>
      %40 = arith.mulf %38, %39 : vector<8x16x8xf32>
      %41 = vector.extract_strided_slice %40 {offsets = [0, 0, 0], sizes = [1, 16, 8], strides = [1, 1, 1]} : vector<8x16x8xf32> to vector<1x16x8xf32>
      %42 = vector.shape_cast %41 : vector<1x16x8xf32> to vector<16x8xf32>
      %43 = vector.extract_strided_slice %40 {offsets = [1, 0, 0], sizes = [1, 16, 8], strides = [1, 1, 1]} : vector<8x16x8xf32> to vector<1x16x8xf32>
      %44 = vector.shape_cast %43 : vector<1x16x8xf32> to vector<16x8xf32>
      %45 = vector.extract_strided_slice %40 {offsets = [2, 0, 0], sizes = [1, 16, 8], strides = [1, 1, 1]} : vector<8x16x8xf32> to vector<1x16x8xf32>
      %46 = vector.shape_cast %45 : vector<1x16x8xf32> to vector<16x8xf32>
      %47 = vector.extract_strided_slice %40 {offsets = [3, 0, 0], sizes = [1, 16, 8], strides = [1, 1, 1]} : vector<8x16x8xf32> to vector<1x16x8xf32>
      %48 = vector.shape_cast %47 : vector<1x16x8xf32> to vector<16x8xf32>
      %49 = vector.extract_strided_slice %40 {offsets = [4, 0, 0], sizes = [1, 16, 8], strides = [1, 1, 1]} : vector<8x16x8xf32> to vector<1x16x8xf32>
      %50 = vector.shape_cast %49 : vector<1x16x8xf32> to vector<16x8xf32>
      %51 = vector.extract_strided_slice %40 {offsets = [5, 0, 0], sizes = [1, 16, 8], strides = [1, 1, 1]} : vector<8x16x8xf32> to vector<1x16x8xf32>
      %52 = vector.shape_cast %51 : vector<1x16x8xf32> to vector<16x8xf32>
      %53 = vector.extract_strided_slice %40 {offsets = [6, 0, 0], sizes = [1, 16, 8], strides = [1, 1, 1]} : vector<8x16x8xf32> to vector<1x16x8xf32>
      %54 = vector.shape_cast %53 : vector<1x16x8xf32> to vector<16x8xf32>
      %55 = vector.extract_strided_slice %40 {offsets = [7, 0, 0], sizes = [1, 16, 8], strides = [1, 1, 1]} : vector<8x16x8xf32> to vector<1x16x8xf32>
      %56 = vector.shape_cast %55 : vector<1x16x8xf32> to vector<16x8xf32>
      %57 = tpu.concatenate %42, %44, %46, %48, %50, %52, %54, %56 in 1 : vector<16x8xf32>, vector<16x8xf32>, vector<16x8xf32>, vector<16x8xf32>, vector<16x8xf32>, vector<16x8xf32>, vector<16x8xf32>, vector<16x8xf32> -> vector<16x64xf32>
      %58 = arith.truncf %57 : vector<16x64xf32> to vector<16x64xbf16>
      %c0_41 = arith.constant 0 : index
      %c0_42 = arith.constant 0 : index
      %c0_43 = arith.constant 0 : index
      %59 = vector.load %arg6[%c0_41, %c0_42, %c0_43] : memref<1x16x64xbf16, #tpu.memory_space<vmem>>, vector<1x16x64xbf16>
      %60 = vector.shape_cast %59 : vector<1x16x64xbf16> to vector<16x64xbf16>
      %61 = vector.shape_cast %58 : vector<16x64xbf16> to vector<1x16x64xbf16>
      tpu.vector_store %arg6[%c0_41, %c0_42, %c0_43], %61 {strides = array<i32>} : memref<1x16x64xbf16, #tpu.memory_space<vmem>>, vector<1x16x64xbf16>,
    } else {
    }
    return
  }
  func.func @transform_0(%arg0: i32, %arg1: i32, %arg2: i32) -> (i32, i32, i32, i32) {
    %c0_i32 = arith.constant 0 : i32
    %c0_i32_0 = arith.constant 0 : i32
    %c0_i32_1 = arith.constant 0 : i32
    return %arg0, %c0_i32, %arg1, %c0_i32_0 : i32, i32, i32, i32
  }
  func.func @transform_1(%arg0: i32, %arg1: i32, %arg2: i32) -> (i32, i32, i32, i32) {
    %c0_i32 = arith.constant 0 : i32
    %c0_i32_0 = arith.constant 0 : i32
    %c0_i32_1 = arith.constant 0 : i32
    return %arg0, %c0_i32, %arg2, %c0_i32_0 : i32, i32, i32, i32
  }
  func.func @transform_2(%arg0: i32, %arg1: i32, %arg2: i32) -> (i32, i32, i32, i32) {
    %c0_i32 = arith.constant 0 : i32
    %c0_i32_0 = arith.constant 0 : i32
    %c0_i32_1 = arith.constant 0 : i32
    return %arg0, %c0_i32, %arg2, %c0_i32_0 : i32, i32, i32, i32
  }
  func.func @transform_3(%arg0: i32, %arg1: i32, %arg2: i32) -> (i32, i32, i32) {
    %c0_i32 = arith.constant 0 : i32
    %c0_i32_0 = arith.constant 0 : i32
    return %arg0, %arg1, %c0_i32 : i32, i32, i32
  }
}

module attributes {stable_mosaic.version = 11 : i64} {
  func.func @_qkv_head_split_kernel(%arg0: i32, %arg1: i32, %arg2: memref<1x16x64xbf16, #tpu.memory_space<vmem>>, %arg3: memref<64x192xbf16, #tpu.memory_space<vmem>>, %arg4: memref<1x192xf32, #tpu.memory_space<vmem>>, %arg5: memref<1x8x16x8xbf16, #tpu.memory_space<vmem>>, %arg6: memref<1x8x16x8xbf16, #tpu.memory_space<vmem>>, %arg7: memref<1x8x16x8xbf16, #tpu.memory_space<vmem>>) attributes {dimension_semantics = [#tpu.dimension_semantics<parallel>, #tpu.dimension_semantics<parallel>], iteration_bounds = array<i64: 2, 1>, scalar_prefetch = 0 : i64, scratch_operands = 0 : i64, tpu.core_type = #tpu.core_type<tc>, window_params = [{transform_indices = @transform_0, window_bounds = array<i64: 1, 16, 64>}, {pipeline_mode = #tpu.pipeline_mode<synchronous>, transform_indices = @transform_1, window_bounds = array<i64: 64, 192>}, {pipeline_mode = #tpu.pipeline_mode<synchronous>, transform_indices = @transform_2, window_bounds = array<i64: 1, 192>}, {transform_indices = @transform_3, window_bounds = array<i64: 1, 8, 16, 8>}, {transform_indices = @transform_4, window_bounds = array<i64: 1, 8, 16, 8>}, {transform_indices = @transform_5, window_bounds = array<i64: 1, 8, 16, 8>}]} {
    %c0 = arith.constant 0 : index
    %c0_0 = arith.constant 0 : index
    %c0_1 = arith.constant 0 : index
    %0 = vector.load %arg2[%c0, %c0_0, %c0_1] : memref<1x16x64xbf16, #tpu.memory_space<vmem>>, vector<1x16x64xbf16>
    %1 = vector.shape_cast %0 : vector<1x16x64xbf16> to vector<16x64xbf16>
    %c0_2 = arith.constant 0 : index
    %c0_3 = arith.constant 0 : index
    %2 = vector.load %arg3[%c0_2, %c0_3] : memref<64x192xbf16, #tpu.memory_space<vmem>>, vector<64x192xbf16>
    %cst = arith.constant dense<0.000000e+00> : vector<16x192xf32>
    %3 = tpu.matmul %1, %2, %cst {dimension_numbers = #tpu.dot_dimension_numbers<[1], [0], [0], [1], [0, 0, 1, 1], [], []>} : vector<16x64xbf16>, vector<64x192xbf16>, vector<16x192xf32> -> vector<16x192xf32>
    %c0_4 = arith.constant 0 : index
    %c0_5 = arith.constant 0 : index
    %4 = vector.load %arg4[%c0_4, %c0_5] : memref<1x192xf32, #tpu.memory_space<vmem>>, vector<1x192xf32>
    %5 = vector.broadcast %4 : vector<1x192xf32> to vector<16x192xf32>
    %6 = arith.addf %3, %5 : vector<16x192xf32>
    %7 = vector.extract_strided_slice %6 {offsets = [0, 0], sizes = [16, 64], strides = [1, 1]} : vector<16x192xf32> to vector<16x64xf32>
    %cst_6 = arith.constant 0.353553385 : f32
    %8 = vector.broadcast %cst_6 : f32 to vector<16x64xf32>
    %9 = arith.mulf %7, %8 : vector<16x64xf32>
    %10 = arith.truncf %9 : vector<16x64xf32> to vector<16x64xbf16>
    %11 = vector.extract_strided_slice %6 {offsets = [0, 64], sizes = [16, 64], strides = [1, 1]} : vector<16x192xf32> to vector<16x64xf32>
    %12 = arith.truncf %11 : vector<16x64xf32> to vector<16x64xbf16>
    %13 = vector.extract_strided_slice %6 {offsets = [0, 128], sizes = [16, 64], strides = [1, 1]} : vector<16x192xf32> to vector<16x64xf32>
    %14 = arith.truncf %13 : vector<16x64xf32> to vector<16x64xbf16>
    %15 = vector.extract_strided_slice %10 {offsets = [0, 0], sizes = [16, 8], strides = [1, 1]} : vector<16x64xbf16> to vector<16x8xbf16>
    %c0_7 = arith.constant 0 : index
    %c0_8 = arith.constant 0 : index
    %c0_9 = arith.constant 0 : index
    %c0_10 = arith.constant 0 : index
    %16 = vector.load %arg5[%c0_7, %c0_8, %c0_9, %c0_10] : memref<1x8x16x8xbf16, #tpu.memory_space<vmem>>, vector<1x1x16x8xbf16>
    %17 = vector.shape_cast %16 : vector<1x1x16x8xbf16> to vector<16x8xbf16>
    %18 = vector.shape_cast %15 : vector<16x8xbf16> to vector<1x1x16x8xbf16>
    tpu.vector_store %arg5[%c0_7, %c0_8, %c0_9, %c0_10], %18 {strides = array<i32>} : memref<1x8x16x8xbf16, #tpu.memory_space<vmem>>, vector<1x1x16x8xbf16>,
    %19 = vector.extract_strided_slice %12 {offsets = [0, 0], sizes = [16, 8], strides = [1, 1]} : vector<16x64xbf16> to vector<16x8xbf16>
    %c0_11 = arith.constant 0 : index
    %c0_12 = arith.constant 0 : index
    %c0_13 = arith.constant 0 : index
    %c0_14 = arith.constant 0 : index
    %20 = vector.load %arg6[%c0_11, %c0_12, %c0_13, %c0_14] : memref<1x8x16x8xbf16, #tpu.memory_space<vmem>>, vector<1x1x16x8xbf16>
    %21 = vector.shape_cast %20 : vector<1x1x16x8xbf16> to vector<16x8xbf16>
    %22 = vector.shape_cast %19 : vector<16x8xbf16> to vector<1x1x16x8xbf16>
    tpu.vector_store %arg6[%c0_11, %c0_12, %c0_13, %c0_14], %22 {strides = array<i32>} : memref<1x8x16x8xbf16, #tpu.memory_space<vmem>>, vector<1x1x16x8xbf16>,
    %23 = vector.extract_strided_slice %14 {offsets = [0, 0], sizes = [16, 8], strides = [1, 1]} : vector<16x64xbf16> to vector<16x8xbf16>
    %c0_15 = arith.constant 0 : index
    %c0_16 = arith.constant 0 : index
    %c0_17 = arith.constant 0 : index
    %c0_18 = arith.constant 0 : index
    %24 = vector.load %arg7[%c0_15, %c0_16, %c0_17, %c0_18] : memref<1x8x16x8xbf16, #tpu.memory_space<vmem>>, vector<1x1x16x8xbf16>
    %25 = vector.shape_cast %24 : vector<1x1x16x8xbf16> to vector<16x8xbf16>
    %26 = vector.shape_cast %23 : vector<16x8xbf16> to vector<1x1x16x8xbf16>
    tpu.vector_store %arg7[%c0_15, %c0_16, %c0_17, %c0_18], %26 {strides = array<i32>} : memref<1x8x16x8xbf16, #tpu.memory_space<vmem>>, vector<1x1x16x8xbf16>,
    %27 = vector.extract_strided_slice %10 {offsets = [0, 8], sizes = [16, 8], strides = [1, 1]} : vector<16x64xbf16> to vector<16x8xbf16>
    %c0_19 = arith.constant 0 : index
    %c1 = arith.constant 1 : index
    %c0_20 = arith.constant 0 : index
    %c0_21 = arith.constant 0 : index
    %28 = vector.load %arg5[%c0_19, %c1, %c0_20, %c0_21] : memref<1x8x16x8xbf16, #tpu.memory_space<vmem>>, vector<1x1x16x8xbf16>
    %29 = vector.shape_cast %28 : vector<1x1x16x8xbf16> to vector<16x8xbf16>
    %30 = vector.shape_cast %27 : vector<16x8xbf16> to vector<1x1x16x8xbf16>
    tpu.vector_store %arg5[%c0_19, %c1, %c0_20, %c0_21], %30 {strides = array<i32>} : memref<1x8x16x8xbf16, #tpu.memory_space<vmem>>, vector<1x1x16x8xbf16>,
    %31 = vector.extract_strided_slice %12 {offsets = [0, 8], sizes = [16, 8], strides = [1, 1]} : vector<16x64xbf16> to vector<16x8xbf16>
    %c0_22 = arith.constant 0 : index
    %c1_23 = arith.constant 1 : index
    %c0_24 = arith.constant 0 : index
    %c0_25 = arith.constant 0 : index
    %32 = vector.load %arg6[%c0_22, %c1_23, %c0_24, %c0_25] : memref<1x8x16x8xbf16, #tpu.memory_space<vmem>>, vector<1x1x16x8xbf16>
    %33 = vector.shape_cast %32 : vector<1x1x16x8xbf16> to vector<16x8xbf16>
    %34 = vector.shape_cast %31 : vector<16x8xbf16> to vector<1x1x16x8xbf16>
    tpu.vector_store %arg6[%c0_22, %c1_23, %c0_24, %c0_25], %34 {strides = array<i32>} : memref<1x8x16x8xbf16, #tpu.memory_space<vmem>>, vector<1x1x16x8xbf16>,
    %35 = vector.extract_strided_slice %14 {offsets = [0, 8], sizes = [16, 8], strides = [1, 1]} : vector<16x64xbf16> to vector<16x8xbf16>
    %c0_26 = arith.constant 0 : index
    %c1_27 = arith.constant 1 : index
    %c0_28 = arith.constant 0 : index
    %c0_29 = arith.constant 0 : index
    %36 = vector.load %arg7[%c0_26, %c1_27, %c0_28, %c0_29] : memref<1x8x16x8xbf16, #tpu.memory_space<vmem>>, vector<1x1x16x8xbf16>
    %37 = vector.shape_cast %36 : vector<1x1x16x8xbf16> to vector<16x8xbf16>
    %38 = vector.shape_cast %35 : vector<16x8xbf16> to vector<1x1x16x8xbf16>
    tpu.vector_store %arg7[%c0_26, %c1_27, %c0_28, %c0_29], %38 {strides = array<i32>} : memref<1x8x16x8xbf16, #tpu.memory_space<vmem>>, vector<1x1x16x8xbf16>,
    %39 = vector.extract_strided_slice %10 {offsets = [0, 16], sizes = [16, 8], strides = [1, 1]} : vector<16x64xbf16> to vector<16x8xbf16>
    %c0_30 = arith.constant 0 : index
    %c2 = arith.constant 2 : index
    %c0_31 = arith.constant 0 : index
    %c0_32 = arith.constant 0 : index
    %40 = vector.load %arg5[%c0_30, %c2, %c0_31, %c0_32] : memref<1x8x16x8xbf16, #tpu.memory_space<vmem>>, vector<1x1x16x8xbf16>
    %41 = vector.shape_cast %40 : vector<1x1x16x8xbf16> to vector<16x8xbf16>
    %42 = vector.shape_cast %39 : vector<16x8xbf16> to vector<1x1x16x8xbf16>
    tpu.vector_store %arg5[%c0_30, %c2, %c0_31, %c0_32], %42 {strides = array<i32>} : memref<1x8x16x8xbf16, #tpu.memory_space<vmem>>, vector<1x1x16x8xbf16>,
    %43 = vector.extract_strided_slice %12 {offsets = [0, 16], sizes = [16, 8], strides = [1, 1]} : vector<16x64xbf16> to vector<16x8xbf16>
    %c0_33 = arith.constant 0 : index
    %c2_34 = arith.constant 2 : index
    %c0_35 = arith.constant 0 : index
    %c0_36 = arith.constant 0 : index
    %44 = vector.load %arg6[%c0_33, %c2_34, %c0_35, %c0_36] : memref<1x8x16x8xbf16, #tpu.memory_space<vmem>>, vector<1x1x16x8xbf16>
    %45 = vector.shape_cast %44 : vector<1x1x16x8xbf16> to vector<16x8xbf16>
    %46 = vector.shape_cast %43 : vector<16x8xbf16> to vector<1x1x16x8xbf16>
    tpu.vector_store %arg6[%c0_33, %c2_34, %c0_35, %c0_36], %46 {strides = array<i32>} : memref<1x8x16x8xbf16, #tpu.memory_space<vmem>>, vector<1x1x16x8xbf16>,
    %47 = vector.extract_strided_slice %14 {offsets = [0, 16], sizes = [16, 8], strides = [1, 1]} : vector<16x64xbf16> to vector<16x8xbf16>
    %c0_37 = arith.constant 0 : index
    %c2_38 = arith.constant 2 : index
    %c0_39 = arith.constant 0 : index
    %c0_40 = arith.constant 0 : index
    %48 = vector.load %arg7[%c0_37, %c2_38, %c0_39, %c0_40] : memref<1x8x16x8xbf16, #tpu.memory_space<vmem>>, vector<1x1x16x8xbf16>
    %49 = vector.shape_cast %48 : vector<1x1x16x8xbf16> to vector<16x8xbf16>
    %50 = vector.shape_cast %47 : vector<16x8xbf16> to vector<1x1x16x8xbf16>
    tpu.vector_store %arg7[%c0_37, %c2_38, %c0_39, %c0_40], %50 {strides = array<i32>} : memref<1x8x16x8xbf16, #tpu.memory_space<vmem>>, vector<1x1x16x8xbf16>,
    %51 = vector.extract_strided_slice %10 {offsets = [0, 24], sizes = [16, 8], strides = [1, 1]} : vector<16x64xbf16> to vector<16x8xbf16>
    %c0_41 = arith.constant 0 : index
    %c3 = arith.constant 3 : index
    %c0_42 = arith.constant 0 : index
    %c0_43 = arith.constant 0 : index
    %52 = vector.load %arg5[%c0_41, %c3, %c0_42, %c0_43] : memref<1x8x16x8xbf16, #tpu.memory_space<vmem>>, vector<1x1x16x8xbf16>
    %53 = vector.shape_cast %52 : vector<1x1x16x8xbf16> to vector<16x8xbf16>
    %54 = vector.shape_cast %51 : vector<16x8xbf16> to vector<1x1x16x8xbf16>
    tpu.vector_store %arg5[%c0_41, %c3, %c0_42, %c0_43], %54 {strides = array<i32>} : memref<1x8x16x8xbf16, #tpu.memory_space<vmem>>, vector<1x1x16x8xbf16>,
    %55 = vector.extract_strided_slice %12 {offsets = [0, 24], sizes = [16, 8], strides = [1, 1]} : vector<16x64xbf16> to vector<16x8xbf16>
    %c0_44 = arith.constant 0 : index
    %c3_45 = arith.constant 3 : index
    %c0_46 = arith.constant 0 : index
    %c0_47 = arith.constant 0 : index
    %56 = vector.load %arg6[%c0_44, %c3_45, %c0_46, %c0_47] : memref<1x8x16x8xbf16, #tpu.memory_space<vmem>>, vector<1x1x16x8xbf16>
    %57 = vector.shape_cast %56 : vector<1x1x16x8xbf16> to vector<16x8xbf16>
    %58 = vector.shape_cast %55 : vector<16x8xbf16> to vector<1x1x16x8xbf16>
    tpu.vector_store %arg6[%c0_44, %c3_45, %c0_46, %c0_47], %58 {strides = array<i32>} : memref<1x8x16x8xbf16, #tpu.memory_space<vmem>>, vector<1x1x16x8xbf16>,
    %59 = vector.extract_strided_slice %14 {offsets = [0, 24], sizes = [16, 8], strides = [1, 1]} : vector<16x64xbf16> to vector<16x8xbf16>
    %c0_48 = arith.constant 0 : index
    %c3_49 = arith.constant 3 : index
    %c0_50 = arith.constant 0 : index
    %c0_51 = arith.constant 0 : index
    %60 = vector.load %arg7[%c0_48, %c3_49, %c0_50, %c0_51] : memref<1x8x16x8xbf16, #tpu.memory_space<vmem>>, vector<1x1x16x8xbf16>
    %61 = vector.shape_cast %60 : vector<1x1x16x8xbf16> to vector<16x8xbf16>
    %62 = vector.shape_cast %59 : vector<16x8xbf16> to vector<1x1x16x8xbf16>
    tpu.vector_store %arg7[%c0_48, %c3_49, %c0_50, %c0_51], %62 {strides = array<i32>} : memref<1x8x16x8xbf16, #tpu.memory_space<vmem>>, vector<1x1x16x8xbf16>,
    %63 = vector.extract_strided_slice %10 {offsets = [0, 32], sizes = [16, 8], strides = [1, 1]} : vector<16x64xbf16> to vector<16x8xbf16>
    %c0_52 = arith.constant 0 : index
    %c4 = arith.constant 4 : index
    %c0_53 = arith.constant 0 : index
    %c0_54 = arith.constant 0 : index
    %64 = vector.load %arg5[%c0_52, %c4, %c0_53, %c0_54] : memref<1x8x16x8xbf16, #tpu.memory_space<vmem>>, vector<1x1x16x8xbf16>
    %65 = vector.shape_cast %64 : vector<1x1x16x8xbf16> to vector<16x8xbf16>
    %66 = vector.shape_cast %63 : vector<16x8xbf16> to vector<1x1x16x8xbf16>
    tpu.vector_store %arg5[%c0_52, %c4, %c0_53, %c0_54], %66 {strides = array<i32>} : memref<1x8x16x8xbf16, #tpu.memory_space<vmem>>, vector<1x1x16x8xbf16>,
    %67 = vector.extract_strided_slice %12 {offsets = [0, 32], sizes = [16, 8], strides = [1, 1]} : vector<16x64xbf16> to vector<16x8xbf16>
    %c0_55 = arith.constant 0 : index
    %c4_56 = arith.constant 4 : index
    %c0_57 = arith.constant 0 : index
    %c0_58 = arith.constant 0 : index
    %68 = vector.load %arg6[%c0_55, %c4_56, %c0_57, %c0_58] : memref<1x8x16x8xbf16, #tpu.memory_space<vmem>>, vector<1x1x16x8xbf16>
    %69 = vector.shape_cast %68 : vector<1x1x16x8xbf16> to vector<16x8xbf16>
    %70 = vector.shape_cast %67 : vector<16x8xbf16> to vector<1x1x16x8xbf16>
    tpu.vector_store %arg6[%c0_55, %c4_56, %c0_57, %c0_58], %70 {strides = array<i32>} : memref<1x8x16x8xbf16, #tpu.memory_space<vmem>>, vector<1x1x16x8xbf16>,
    %71 = vector.extract_strided_slice %14 {offsets = [0, 32], sizes = [16, 8], strides = [1, 1]} : vector<16x64xbf16> to vector<16x8xbf16>
    %c0_59 = arith.constant 0 : index
    %c4_60 = arith.constant 4 : index
    %c0_61 = arith.constant 0 : index
    %c0_62 = arith.constant 0 : index
    %72 = vector.load %arg7[%c0_59, %c4_60, %c0_61, %c0_62] : memref<1x8x16x8xbf16, #tpu.memory_space<vmem>>, vector<1x1x16x8xbf16>
    %73 = vector.shape_cast %72 : vector<1x1x16x8xbf16> to vector<16x8xbf16>
    %74 = vector.shape_cast %71 : vector<16x8xbf16> to vector<1x1x16x8xbf16>
    tpu.vector_store %arg7[%c0_59, %c4_60, %c0_61, %c0_62], %74 {strides = array<i32>} : memref<1x8x16x8xbf16, #tpu.memory_space<vmem>>, vector<1x1x16x8xbf16>,
    %75 = vector.extract_strided_slice %10 {offsets = [0, 40], sizes = [16, 8], strides = [1, 1]} : vector<16x64xbf16> to vector<16x8xbf16>
    %c0_63 = arith.constant 0 : index
    %c5 = arith.constant 5 : index
    %c0_64 = arith.constant 0 : index
    %c0_65 = arith.constant 0 : index
    %76 = vector.load %arg5[%c0_63, %c5, %c0_64, %c0_65] : memref<1x8x16x8xbf16, #tpu.memory_space<vmem>>, vector<1x1x16x8xbf16>
    %77 = vector.shape_cast %76 : vector<1x1x16x8xbf16> to vector<16x8xbf16>
    %78 = vector.shape_cast %75 : vector<16x8xbf16> to vector<1x1x16x8xbf16>
    tpu.vector_store %arg5[%c0_63, %c5, %c0_64, %c0_65], %78 {strides = array<i32>} : memref<1x8x16x8xbf16, #tpu.memory_space<vmem>>, vector<1x1x16x8xbf16>,
    %79 = vector.extract_strided_slice %12 {offsets = [0, 40], sizes = [16, 8], strides = [1, 1]} : vector<16x64xbf16> to vector<16x8xbf16>
    %c0_66 = arith.constant 0 : index
    %c5_67 = arith.constant 5 : index
    %c0_68 = arith.constant 0 : index
    %c0_69 = arith.constant 0 : index
    %80 = vector.load %arg6[%c0_66, %c5_67, %c0_68, %c0_69] : memref<1x8x16x8xbf16, #tpu.memory_space<vmem>>, vector<1x1x16x8xbf16>
    %81 = vector.shape_cast %80 : vector<1x1x16x8xbf16> to vector<16x8xbf16>
    %82 = vector.shape_cast %79 : vector<16x8xbf16> to vector<1x1x16x8xbf16>
    tpu.vector_store %arg6[%c0_66, %c5_67, %c0_68, %c0_69], %82 {strides = array<i32>} : memref<1x8x16x8xbf16, #tpu.memory_space<vmem>>, vector<1x1x16x8xbf16>,
    %83 = vector.extract_strided_slice %14 {offsets = [0, 40], sizes = [16, 8], strides = [1, 1]} : vector<16x64xbf16> to vector<16x8xbf16>
    %c0_70 = arith.constant 0 : index
    %c5_71 = arith.constant 5 : index
    %c0_72 = arith.constant 0 : index
    %c0_73 = arith.constant 0 : index
    %84 = vector.load %arg7[%c0_70, %c5_71, %c0_72, %c0_73] : memref<1x8x16x8xbf16, #tpu.memory_space<vmem>>, vector<1x1x16x8xbf16>
    %85 = vector.shape_cast %84 : vector<1x1x16x8xbf16> to vector<16x8xbf16>
    %86 = vector.shape_cast %83 : vector<16x8xbf16> to vector<1x1x16x8xbf16>
    tpu.vector_store %arg7[%c0_70, %c5_71, %c0_72, %c0_73], %86 {strides = array<i32>} : memref<1x8x16x8xbf16, #tpu.memory_space<vmem>>, vector<1x1x16x8xbf16>,
    %87 = vector.extract_strided_slice %10 {offsets = [0, 48], sizes = [16, 8], strides = [1, 1]} : vector<16x64xbf16> to vector<16x8xbf16>
    %c0_74 = arith.constant 0 : index
    %c6 = arith.constant 6 : index
    %c0_75 = arith.constant 0 : index
    %c0_76 = arith.constant 0 : index
    %88 = vector.load %arg5[%c0_74, %c6, %c0_75, %c0_76] : memref<1x8x16x8xbf16, #tpu.memory_space<vmem>>, vector<1x1x16x8xbf16>
    %89 = vector.shape_cast %88 : vector<1x1x16x8xbf16> to vector<16x8xbf16>
    %90 = vector.shape_cast %87 : vector<16x8xbf16> to vector<1x1x16x8xbf16>
    tpu.vector_store %arg5[%c0_74, %c6, %c0_75, %c0_76], %90 {strides = array<i32>} : memref<1x8x16x8xbf16, #tpu.memory_space<vmem>>, vector<1x1x16x8xbf16>,
    %91 = vector.extract_strided_slice %12 {offsets = [0, 48], sizes = [16, 8], strides = [1, 1]} : vector<16x64xbf16> to vector<16x8xbf16>
    %c0_77 = arith.constant 0 : index
    %c6_78 = arith.constant 6 : index
    %c0_79 = arith.constant 0 : index
    %c0_80 = arith.constant 0 : index
    %92 = vector.load %arg6[%c0_77, %c6_78, %c0_79, %c0_80] : memref<1x8x16x8xbf16, #tpu.memory_space<vmem>>, vector<1x1x16x8xbf16>
    %93 = vector.shape_cast %92 : vector<1x1x16x8xbf16> to vector<16x8xbf16>
    %94 = vector.shape_cast %91 : vector<16x8xbf16> to vector<1x1x16x8xbf16>
    tpu.vector_store %arg6[%c0_77, %c6_78, %c0_79, %c0_80], %94 {strides = array<i32>} : memref<1x8x16x8xbf16, #tpu.memory_space<vmem>>, vector<1x1x16x8xbf16>,
    %95 = vector.extract_strided_slice %14 {offsets = [0, 48], sizes = [16, 8], strides = [1, 1]} : vector<16x64xbf16> to vector<16x8xbf16>
    %c0_81 = arith.constant 0 : index
    %c6_82 = arith.constant 6 : index
    %c0_83 = arith.constant 0 : index
    %c0_84 = arith.constant 0 : index
    %96 = vector.load %arg7[%c0_81, %c6_82, %c0_83, %c0_84] : memref<1x8x16x8xbf16, #tpu.memory_space<vmem>>, vector<1x1x16x8xbf16>
    %97 = vector.shape_cast %96 : vector<1x1x16x8xbf16> to vector<16x8xbf16>
    %98 = vector.shape_cast %95 : vector<16x8xbf16> to vector<1x1x16x8xbf16>
    tpu.vector_store %arg7[%c0_81, %c6_82, %c0_83, %c0_84], %98 {strides = array<i32>} : memref<1x8x16x8xbf16, #tpu.memory_space<vmem>>, vector<1x1x16x8xbf16>,
    %99 = vector.extract_strided_slice %10 {offsets = [0, 56], sizes = [16, 8], strides = [1, 1]} : vector<16x64xbf16> to vector<16x8xbf16>
    %c0_85 = arith.constant 0 : index
    %c7 = arith.constant 7 : index
    %c0_86 = arith.constant 0 : index
    %c0_87 = arith.constant 0 : index
    %100 = vector.load %arg5[%c0_85, %c7, %c0_86, %c0_87] : memref<1x8x16x8xbf16, #tpu.memory_space<vmem>>, vector<1x1x16x8xbf16>
    %101 = vector.shape_cast %100 : vector<1x1x16x8xbf16> to vector<16x8xbf16>
    %102 = vector.shape_cast %99 : vector<16x8xbf16> to vector<1x1x16x8xbf16>
    tpu.vector_store %arg5[%c0_85, %c7, %c0_86, %c0_87], %102 {strides = array<i32>} : memref<1x8x16x8xbf16, #tpu.memory_space<vmem>>, vector<1x1x16x8xbf16>,
    %103 = vector.extract_strided_slice %12 {offsets = [0, 56], sizes = [16, 8], strides = [1, 1]} : vector<16x64xbf16> to vector<16x8xbf16>
    %c0_88 = arith.constant 0 : index
    %c7_89 = arith.constant 7 : index
    %c0_90 = arith.constant 0 : index
    %c0_91 = arith.constant 0 : index
    %104 = vector.load %arg6[%c0_88, %c7_89, %c0_90, %c0_91] : memref<1x8x16x8xbf16, #tpu.memory_space<vmem>>, vector<1x1x16x8xbf16>
    %105 = vector.shape_cast %104 : vector<1x1x16x8xbf16> to vector<16x8xbf16>
    %106 = vector.shape_cast %103 : vector<16x8xbf16> to vector<1x1x16x8xbf16>
    tpu.vector_store %arg6[%c0_88, %c7_89, %c0_90, %c0_91], %106 {strides = array<i32>} : memref<1x8x16x8xbf16, #tpu.memory_space<vmem>>, vector<1x1x16x8xbf16>,
    %107 = vector.extract_strided_slice %14 {offsets = [0, 56], sizes = [16, 8], strides = [1, 1]} : vector<16x64xbf16> to vector<16x8xbf16>
    %c0_92 = arith.constant 0 : index
    %c7_93 = arith.constant 7 : index
    %c0_94 = arith.constant 0 : index
    %c0_95 = arith.constant 0 : index
    %108 = vector.load %arg7[%c0_92, %c7_93, %c0_94, %c0_95] : memref<1x8x16x8xbf16, #tpu.memory_space<vmem>>, vector<1x1x16x8xbf16>
    %109 = vector.shape_cast %108 : vector<1x1x16x8xbf16> to vector<16x8xbf16>
    %110 = vector.shape_cast %107 : vector<16x8xbf16> to vector<1x1x16x8xbf16>
    tpu.vector_store %arg7[%c0_92, %c7_93, %c0_94, %c0_95], %110 {strides = array<i32>} : memref<1x8x16x8xbf16, #tpu.memory_space<vmem>>, vector<1x1x16x8xbf16>,
    return
  }
  func.func @transform_0(%arg0: i32, %arg1: i32) -> (i32, i32, i32) {
    %c0_i32 = arith.constant 0 : i32
    %c0_i32_0 = arith.constant 0 : i32
    return %arg0, %arg1, %c0_i32 : i32, i32, i32
  }
  func.func @transform_1(%arg0: i32, %arg1: i32) -> (i32, i32) {
    %c0_i32 = arith.constant 0 : i32
    %c0_i32_0 = arith.constant 0 : i32
    %c0_i32_1 = arith.constant 0 : i32
    return %c0_i32, %c0_i32_0 : i32, i32
  }
  func.func @transform_2(%arg0: i32, %arg1: i32) -> (i32, i32) {
    %c0_i32 = arith.constant 0 : i32
    %c0_i32_0 = arith.constant 0 : i32
    %c0_i32_1 = arith.constant 0 : i32
    return %c0_i32, %c0_i32_0 : i32, i32
  }
  func.func @transform_3(%arg0: i32, %arg1: i32) -> (i32, i32, i32, i32) {
    %c0_i32 = arith.constant 0 : i32
    %c0_i32_0 = arith.constant 0 : i32
    %c0_i32_1 = arith.constant 0 : i32
    return %arg0, %c0_i32, %arg1, %c0_i32_0 : i32, i32, i32, i32
  }
  func.func @transform_4(%arg0: i32, %arg1: i32) -> (i32, i32, i32, i32) {
    %c0_i32 = arith.constant 0 : i32
    %c0_i32_0 = arith.constant 0 : i32
    %c0_i32_1 = arith.constant 0 : i32
    return %arg0, %c0_i32, %arg1, %c0_i32_0 : i32, i32, i32, i32
  }
  func.func @transform_5(%arg0: i32, %arg1: i32) -> (i32, i32, i32, i32) {
    %c0_i32 = arith.constant 0 : i32
    %c0_i32_0 = arith.constant 0 : i32
    %c0_i32_1 = arith.constant 0 : i32
    return %arg0, %c0_i32, %arg1, %c0_i32_0 : i32, i32, i32, i32
  }
}

module attributes {stable_mosaic.version = 11 : i64} {
  func.func @_proj_kernel(%arg0: i32, %arg1: i32, %arg2: memref<1x16x64xbf16, #tpu.memory_space<vmem>>, %arg3: memref<64x64xbf16, #tpu.memory_space<vmem>>, %arg4: memref<1x64xf32, #tpu.memory_space<vmem>>, %arg5: memref<1x16x64xf32, #tpu.memory_space<vmem>>) attributes {dimension_semantics = [#tpu.dimension_semantics<parallel>, #tpu.dimension_semantics<parallel>], iteration_bounds = array<i64: 2, 1>, scalar_prefetch = 0 : i64, scratch_operands = 0 : i64, tpu.core_type = #tpu.core_type<tc>, window_params = [{transform_indices = @transform_0, window_bounds = array<i64: 1, 16, 64>}, {pipeline_mode = #tpu.pipeline_mode<synchronous>, transform_indices = @transform_1, window_bounds = array<i64: 64, 64>}, {pipeline_mode = #tpu.pipeline_mode<synchronous>, transform_indices = @transform_2, window_bounds = array<i64: 1, 64>}, {transform_indices = @transform_3, window_bounds = array<i64: 1, 16, 64>}]} {
    %c0 = arith.constant 0 : index
    %c0_0 = arith.constant 0 : index
    %c0_1 = arith.constant 0 : index
    %0 = vector.load %arg2[%c0, %c0_0, %c0_1] : memref<1x16x64xbf16, #tpu.memory_space<vmem>>, vector<1x16x64xbf16>
    %1 = vector.shape_cast %0 : vector<1x16x64xbf16> to vector<16x64xbf16>
    %c0_2 = arith.constant 0 : index
    %c0_3 = arith.constant 0 : index
    %2 = vector.load %arg3[%c0_2, %c0_3] : memref<64x64xbf16, #tpu.memory_space<vmem>>, vector<64x64xbf16>
    %cst = arith.constant dense<0.000000e+00> : vector<16x64xf32>
    %3 = tpu.matmul %1, %2, %cst {dimension_numbers = #tpu.dot_dimension_numbers<[1], [0], [0], [1], [0, 0, 1, 1], [], []>} : vector<16x64xbf16>, vector<64x64xbf16>, vector<16x64xf32> -> vector<16x64xf32>
    %c0_4 = arith.constant 0 : index
    %c0_5 = arith.constant 0 : index
    %4 = vector.load %arg4[%c0_4, %c0_5] : memref<1x64xf32, #tpu.memory_space<vmem>>, vector<1x64xf32>
    %5 = vector.broadcast %4 : vector<1x64xf32> to vector<16x64xf32>
    %6 = arith.addf %3, %5 : vector<16x64xf32>
    %c0_6 = arith.constant 0 : index
    %c0_7 = arith.constant 0 : index
    %c0_8 = arith.constant 0 : index
    %7 = vector.load %arg5[%c0_6, %c0_7, %c0_8] : memref<1x16x64xf32, #tpu.memory_space<vmem>>, vector<1x16x64xf32>
    %8 = vector.shape_cast %7 : vector<1x16x64xf32> to vector<16x64xf32>
    %9 = vector.shape_cast %6 : vector<16x64xf32> to vector<1x16x64xf32>
    tpu.vector_store %arg5[%c0_6, %c0_7, %c0_8], %9 {strides = array<i32>} : memref<1x16x64xf32, #tpu.memory_space<vmem>>, vector<1x16x64xf32>,
    return
  }
  func.func @transform_0(%arg0: i32, %arg1: i32) -> (i32, i32, i32) {
    %c0_i32 = arith.constant 0 : i32
    %c0_i32_0 = arith.constant 0 : i32
    return %arg0, %arg1, %c0_i32 : i32, i32, i32
  }
  func.func @transform_1(%arg0: i32, %arg1: i32) -> (i32, i32) {
    %c0_i32 = arith.constant 0 : i32
    %c0_i32_0 = arith.constant 0 : i32
    %c0_i32_1 = arith.constant 0 : i32
    return %c0_i32, %c0_i32_0 : i32, i32
  }
  func.func @transform_2(%arg0: i32, %arg1: i32) -> (i32, i32) {
    %c0_i32 = arith.constant 0 : i32
    %c0_i32_0 = arith.constant 0 : i32
    %c0_i32_1 = arith.constant 0 : i32
    return %c0_i32, %c0_i32_0 : i32, i32
  }
  func.func @transform_3(%arg0: i32, %arg1: i32) -> (i32, i32, i32) {
    %c0_i32 = arith.constant 0 : i32
    %c0_i32_0 = arith.constant 0 : i32
    return %arg0, %arg1, %c0_i32 : i32, i32, i32
  }
}

</mosaic_0001>

<llo_original>
// kernel: attention_forward.5
$region0: #{attention_forward.5}
  #allocation0 [shape = 'u32[]', space=smem, size = 0x4, offset = 0x4, fixed_abs, tag = 'smem constant byte address 0x4 - core index']
  #allocation1 [shape = 'u32[144,128]{1,0:T(1,128)}', space=vmem, size = 0x12000, scoped, tag = 'internal scratch']
  %s0 = inlined_call_operand.vmem [shape: bf16[2,16,64], index: 0, kind: input, shape index: {}]
  %s1 = inlined_call_operand.vmem [shape: bf16[64,64], index: 1, kind: input, shape index: {}]
  %s2 = inlined_call_operand.vmem [shape: f32[1,64], index: 2, kind: input, shape index: {}]
  %s3 = inlined_call_operand.hbm [shape: f32[2,16,64], index: 3, kind: output, shape index: {}]
  %s4 = sld [smem:[#allocation0]]
  $region45: #{attention_forward.5} parent=0
    _
  %s6 = ssub.s32 1, %s4
  %s7 = scalar_select 0, %s6, %s4
  $region1: #{attention_forward.5} parent=0
    #allocation2 [shape = 'u8[16384]{0}', space=vmem, size = 0x4000, scoped, tag = 'output window, operand 0']
    #allocation3 [shape = 's32[2]{0}', space=sflag, size = 0x8, scoped, tag = 'scoped memory for attention_forward.5']
    %8 = vsyncpa [#allocation3], 0
    %s9 = scalar_lea.sflag [#allocation3], 1
    %10 = vsyncpa %s9, 0
    loop: start=0, step=1, limit=4
    $region2: #{attention_forward.5} parent=1 // loop_pre_header
      _
    $region3: #{attention_forward.5} parent=1 // loop_header
      %s12 = sphi 0, %s16
      %p13 = scmp.ge.s32.totalorder %s12, 4
      %s19 = sphi 0, %s31
      %s20 = sphi 0, %s27
      %s21 = sphi 0, %s19
      %s22 = sphi 0, %s20
      %s23 = sphi 0, %s21
      %s24 = sphi 0, %s22
      %s36 = sphi 0, %s38
      %s39 = sphi 0, %s36
      %s40 = sphi 0, %s39
      %s56 = sphi 0, %s40
      %s60 = sphi 0, %s60
      %s62 = sphi 0, %s60
      %s63 = sphi 0, %s62
      %s77 = sphi 0, %s63
      %s81 = sphi 0, %s81
      %s83 = sphi 0, %s81
      %s84 = sphi 0, %s83
      %s98 = sphi 0, %s84
      %s106 = sphi 0, %s108
      %s109 = sphi 0, %s106
      %s110 = sphi 0, %s109
      %s126 = sphi 0, %s110
    $region4: #{attention_forward.5} parent=1 // loop_header_branch
      %15 = sbr.rel (%p13) target = $region8
    $region5: #{attention_forward.5} parent=1 // loop_body
      %s17 = ssub.s32 %s12, 1
      %s18 = ssub.s32 %s12, 2
      %s25 = sadd.s32 1, %s20
      %p26 = scmp.ge.s32.totalorder %s25, 1
      %s27 = scalar_select %p26, 0, %s25
      %s28 = sadd.s32 1, %s19
      %s29 = scalar_select %p26, %s28, %s19
      %p30 = scmp.ge.s32.totalorder %s29, 2
      %s31 = scalar_select %p30, 0, %s29
      %s32 = ssub.s32 %s19, %s31
      %s33 = ssub.s32 %s20, %s27
      %s34 = sor.u32 %s32, %s33
      %p35 = scmp.eq.s32.totalorder %s34, 0
      %s37 = sadd.s32 %s36, 1
      %s38 = scalar_select %p35, %s36, %s37
      %p41 = pneg %p35
      %p42 = scmp.eq.s32.totalorder %s12, 1
      %p43 = por %p41, %p42
      %p44 = scmp.ne.s32.totalorder %s36, %s39
      %p45 = scmp.eq.s32.totalorder %s12, 0
      %p46 = por %p44, %p45
      %p47 = scmp.ne.s32.totalorder %s36, %s39
      %p48 = scmp.eq.s32.totalorder %s17, 1
      %p49 = por %p47, %p48
      %p50 = scmp.ne.s32.totalorder %s39, %s40
      %p51 = scmp.eq.s32.totalorder %s17, 0
      %p52 = por %p50, %p51
      %p53 = scmp.ne.s32.totalorder %s39, %s40
      %p54 = scmp.eq.s32.totalorder %s18, 1
      %p55 = por %p53, %p54
      %p57 = scmp.ne.s32.totalorder %s40, %s56
      %p58 = scmp.eq.s32.totalorder %s18, 0
      %p59 = por %p57, %p58
      %s61 = sadd.s32 %s60, 1
      %p64 = scmp.eq.s32.totalorder %s12, 1
      %p65 = scmp.ne.s32.totalorder %s60, %s62
      %p66 = scmp.eq.s32.totalorder %s12, 0
      %p67 = por %p65, %p66
      %p68 = scmp.ne.s32.totalorder %s60, %s62
      %p69 = scmp.eq.s32.totalorder %s17, 1
      %p70 = por %p68, %p69
      %p71 = scmp.ne.s32.totalorder %s62, %s63
      %p72 = scmp.eq.s32.totalorder %s17, 0
      %p73 = por %p71, %p72
      %p74 = scmp.ne.s32.totalorder %s62, %s63
      %p75 = scmp.eq.s32.totalorder %s18, 1
      %p76 = por %p74, %p75
      %p78 = scmp.ne.s32.totalorder %s63, %s77
      %p79 = scmp.eq.s32.totalorder %s18, 0
      %p80 = por %p78, %p79
      %s82 = sadd.s32 %s81, 1
      %p85 = scmp.eq.s32.totalorder %s12, 1
      %p86 = scmp.ne.s32.totalorder %s81, %s83
      %p87 = scmp.eq.s32.totalorder %s12, 0
      %p88 = por %p86, %p87
      %p89 = scmp.ne.s32.totalorder %s81, %s83
      %p90 = scmp.eq.s32.totalorder %s17, 1
      %p91 = por %p89, %p90
      %p92 = scmp.ne.s32.totalorder %s83, %s84
      %p93 = scmp.eq.s32.totalorder %s17, 0
      %p94 = por %p92, %p93
      %p95 = scmp.ne.s32.totalorder %s83, %s84
      %p96 = scmp.eq.s32.totalorder %s18, 1
      %p97 = por %p95, %p96
      %p99 = scmp.ne.s32.totalorder %s84, %s98
      %p100 = scmp.eq.s32.totalorder %s18, 0
      %p101 = por %p99, %p100
      %s102 = ssub.s32 %s19, %s31
      %s103 = ssub.s32 %s20, %s27
      %s104 = sor.u32 %s102, %s103
      %p105 = scmp.eq.s32.totalorder %s104, 0
      %s107 = sadd.s32 %s106, 1
      %s108 = scalar_select %p105, %s106, %s107
      %p111 = pneg %p105
      %p112 = scmp.eq.s32.totalorder %s12, 1
      %p113 = por %p111, %p112
      %p114 = scmp.ne.s32.totalorder %s106, %s109
      %p115 = scmp.eq.s32.totalorder %s12, 0
      %p116 = por %p114, %p115
      %p117 = scmp.ne.s32.totalorder %s106, %s109
      %p118 = scmp.eq.s32.totalorder %s17, 1
      %p119 = por %p117, %p118
      %p120 = scmp.ne.s32.totalorder %s109, %s110
      %p121 = scmp.eq.s32.totalorder %s17, 0
      %p122 = por %p120, %p121
      %p123 = scmp.ne.s32.totalorder %s109, %s110
      %p124 = scmp.eq.s32.totalorder %s18, 1
      %p125 = por %p123, %p124
      %p127 = scmp.ne.s32.totalorder %s110, %s126
      %p128 = scmp.eq.s32.totalorder %s18, 0
      %p129 = por %p127, %p128
      %p130 = scmp.le.s32.totalorder 1, %s12
      %p131 = scmp.lt.s32.totalorder %s12, 3
      %p132 = pnand %p130, %p131
      %p133 = pneg %p132
      // Predicated region
      $region9: #{attention_forward.5} parent=5 // pred_check
        _
      $region10: #{attention_forward.5} parent=5 // pred_check_branch
        %135 = sbr.rel (%p132) target = $region12
      $region11: #{attention_forward.5} parent=5 // pred_region
        %s136 = ssub.s32 %s12, 1
        // Predicated region
        $region13: #{attention_forward.5} parent=11 // pred_check
          %p137 = pneg %p73
        $region14: #{attention_forward.5} parent=11 // pred_check_branch
          %139 = sbr.rel (%p137) target = $region16
        $region15: #{attention_forward.5} parent=11 // pred_region
          _
        $region16: #{attention_forward.5} parent=11 // pred_fallthru
          _
        // Predicated region
        $region17: #{attention_forward.5} parent=11 // pred_check
          %p140 = pneg %p94
        $region18: #{attention_forward.5} parent=11 // pred_check_branch
          %142 = sbr.rel (%p140) target = $region20
        $region19: #{attention_forward.5} parent=11 // pred_region
          _
        $region20: #{attention_forward.5} parent=11 // pred_fallthru
          _
      $region12: #{attention_forward.5} parent=5 // pred_fallthru
        _
      %p143 = scmp.lt.s32.totalorder %s12, 2
      // Predicated region
      $region21: #{attention_forward.5} parent=5 // pred_check
        %p144 = pneg %p143
      $region22: #{attention_forward.5} parent=5 // pred_check_branch
        %146 = sbr.rel (%p144) target = $region24
      $region23: #{attention_forward.5} parent=5 // pred_region
        // Predicated region
        $region25: #{attention_forward.5} parent=23 // pred_check
          %p147 = pneg %p46
        $region26: #{attention_forward.5} parent=23 // pred_check_branch
          %149 = sbr.rel (%p147) target = $region28
        $region27: #{attention_forward.5} parent=23 // pred_region
          %s150 = smul.u32 2, %s20
          %p151 = scmp.lt.s32.totalorder %s19, 1
          %s152 = scalar_select %p151, %s19, 1
          %p153 = scmp.lt.s32.totalorder %s150, 1
          %s154 = scalar_select %p153, %s150, 1
          %s155 = smul.addr %s152, 2
          %s156 = sadd.s32 %s154, %s155
          %s157 = smul.addr %s156, 4
          %s158 = scalar_lea.vmem %s0, %s157
          %s159 = smul.u32 2, %s20
        $region28: #{attention_forward.5} parent=23 // pred_fallthru
          _
      $region24: #{attention_forward.5} parent=5 // pred_fallthru
        _
      %p160 = scmp.le.s32.totalorder 1, %s12
      %p161 = scmp.lt.s32.totalorder %s12, 3
      %p162 = pnand %p160, %p161
      %p163 = pneg %p162
      // Predicated region
      $region29: #{attention_forward.5} parent=5 // pred_check
        _
      $region30: #{attention_forward.5} parent=5 // pred_check_branch
        %165 = sbr.rel (%p162) target = $region32
      $region31: #{attention_forward.5} parent=5 // pred_region
        %s166 = ssub.s32 %s12, 1
        %s167 = smul.u32 2, %s22
        %p168 = scmp.lt.s32.totalorder %s21, 1
        %s169 = scalar_select %p168, %s21, 1
        %p170 = scmp.lt.s32.totalorder %s167, 1
        %s171 = scalar_select %p170, %s167, 1
        %s172 = smul.addr %s169, 2
        %s173 = sadd.s32 %s171, %s172
        %s174 = smul.addr %s173, 4
        %s175 = scalar_lea.vmem %s0, %s174
        %p176 = pneg %p52
        %p177 = pneg %p49
        %p178 = pneg %p73
        %p179 = pneg %p70
        %p180 = pneg %p94
        %p181 = pneg %p91
        %p182 = pneg %p122
        %p183 = pneg %p119
        %s184 = sand.u32 %s109, 1
        %s185 = scalar_lea.sflag [#allocation3], %s184
        %s186 = sand.u32 %s109, 1
        %s187 = smul.addr %s186, 16
        %s188 = scalar_lea.vmem [#allocation2], %s187
        %s189 = smul.u32 2, %s22
        %p190 = scmp.lt.s32.totalorder %s21, 1
        %s191 = scalar_select %p190, %s21, 1
        %p192 = scmp.lt.s32.totalorder %s189, 1
        %s193 = scalar_select %p192, %s189, 1
        %s194 = smul.addr %s191, 2
        %s195 = sadd.s32 %s193, %s194
        %s196 = smul.addr %s195, 4
        %s197 = scalar_lea.vmem %s0, %s196
        %s198 = smul.u32 2, %s22
        %s199 = smul.u32 2, %s22
        %v201 = vld [vmem:[%s197] sm:$0xf]
        %v202 = vld [vmem:[%s197 + $0x4] sm:$0xf]
        %v203 = vld [vmem:[%s1] sm:$0xf]
        %v204 = vld [vmem:[%s1 + $0x4] sm:$0xf]
        %v205 = vld [vmem:[%s1 + $0x8] sm:$0xf]
        %v206 = vld [vmem:[%s1 + $0xc] sm:$0xf]
        %v207 = vld [vmem:[%s1 + $0x10] sm:$0xf]
        %v208 = vld [vmem:[%s1 + $0x14] sm:$0xf]
        %v209 = vld [vmem:[%s1 + $0x18] sm:$0xf]
        %v210 = vld [vmem:[%s1 + $0x1c] sm:$0xf]
        %v211 = vld [vmem:[%s2] sm:$0x1]
        %v213 = vlaneseq
        %v214 = vshrl.u32 %v213, 7
        %v215 = vsub.s32 0, %v214
        %v216 = vrot.slane %v211, %v215
        %v220 = vunpack.c.l.b16 %v201
        %v221 = vunpack.c.l.b16 %v202
        %v222 = vpack.c.b16 %v221, %v220
        %v231 = vunpack.c.l.b16 %v203
        %v232 = vunpack.c.l.b16 %v204
        %v233 = vunpack.c.l.b16 %v205
        %v234 = vunpack.c.l.b16 %v206
        %v235 = vunpack.c.l.b16 %v207
        %v236 = vunpack.c.l.b16 %v208
        %v237 = vunpack.c.l.b16 %v209
        %v238 = vunpack.c.l.b16 %v210
        %v239 = vpack.c.b16 %v232, %v231
        %v240 = vpack.c.b16 %v234, %v233
        %v241 = vpack.c.b16 %v236, %v235
        %v242 = vpack.c.b16 %v238, %v237
        %vm247 = vcmask 523264
        %v249 = vsel %vm247, %v222, 0
        %251 = vmatprep.subr.bf16.mxu0 0
        %252 = vmatpush1.bf16.msra.mxu0 %v239
        %253 = vmatprep.subr.bf16.mxu0 0
        %254 = vmatpush1.bf16.msra.mxu0 %v240
        %255 = vmatprep.subr.bf16.mxu0 0
        %256 = vmatpush1.bf16.msra.mxu0 %v241
        %257 = vmatprep.subr.bf16.mxu0 0
        %258 = vmatpush1.bf16.msra.mxu0 %v242
        %259 = vmatprep.subr.bf16.mxu0 0
        %260 = vmatpush1.bf16.msra.mxu0 0
        %261 = vmatprep.subr.bf16.mxu0 0
        %262 = vmatpush1.bf16.msra.mxu0 0
        %263 = vmatprep.subr.bf16.mxu0 0
        %264 = vmatpush1.bf16.msra.mxu0 0
        %265 = vmatprep.subr.bf16.mxu0 0
        %266 = vmatpush1.bf16.msra.mxu0 0
        %267 = vmatprep.subr.bf16.mxu0 0
        %268 = vmatpush1.bf16.msra.mxu0 0
        %269 = vmatprep.subr.bf16.mxu0 0
        %270 = vmatpush1.bf16.msra.mxu0 0
        %271 = vmatprep.subr.bf16.mxu0 0
        %272 = vmatpush1.bf16.msra.mxu0 0
        %273 = vmatprep.subr.bf16.mxu0 0
        %274 = vmatpush1.bf16.msra.mxu0 0
        %275 = vmatprep.subr.bf16.mxu0 0
        %276 = vmatpush1.bf16.msra.mxu0 0
        %277 = vmatprep.subr.bf16.mxu0 0
        %278 = vmatpush1.bf16.msra.mxu0 0
        %279 = vmatprep.subr.bf16.mxu0 0
        %280 = vmatpush1.bf16.msra.mxu0 0
        %281 = vmatprep.subr.bf16.mxu0 0
        %282 = vmatpush1.bf16.msra.mxu0 0
        %283 = vmatprep.mubr.bf16.mxu0 0
        %284 = vmatmul.mubr.bf16.gmra.mrb[0].mxu0 %v249
        %v285 = vpop.f32.mrb[0].mxu0
        %v286 = vadd.f32 %v216, %v285
        %v287 = vpop.f32.mrb[0].mxu0
        %v288 = vpop.f32.mrb[0].mxu0
        %v289 = vadd.f32 %v216, %v288
        %v290 = vpop.f32.mrb[0].mxu0
        %291 = vdwg.mxu0
        %292 = vst.msk [vmem:[%s188] sm:$0xff] %vm247, %v286
        %293 = vst.msk [vmem:[%s188 + $0x8] sm:$0xff] %vm247, %v289
        %s294 = sand.u32 %s109, 1
        %s295 = scalar_lea.sflag [#allocation3], %s294
        %s296 = sand.u32 %s109, 1
        %s297 = smul.addr %s296, 16
        %s298 = scalar_lea.vmem [#allocation2], %s297
        // Predicated region
        $region33: #{attention_forward.5} parent=31 // pred_check
          %p299 = pneg %p119
        $region34: #{attention_forward.5} parent=31 // pred_check_branch
          %301 = sbr.rel (%p299) target = $region36
        $region35: #{attention_forward.5} parent=31 // pred_region
          %s302 = smul.u32 2, %s22
          %s304 = ssub.s32 256, 256
          %305 = vsyncadd %s295, %s304
          %s306 = smul.addr %s21, 2
          %s307 = sadd.s32 %s302, %s306
          %s308 = smul.addr %s307, 128
          %s309 = scalar_lea.hbm %s3, %s308
          %s310 = sshll.u32 %s298, 4
          %s311 = int_to_ptr.vmem [resolvable:$true] %s310
          %316 = dma.vmem_to_hbm [thread:$0]  %s311, 256, %s309, %s295, 128, 128, 8
        $region36: #{attention_forward.5} parent=31 // pred_fallthru
          _
      $region32: #{attention_forward.5} parent=5 // pred_fallthru
        _
      %p317 = scmp.le.s32.totalorder 2, %s12
      // Predicated region
      $region37: #{attention_forward.5} parent=5 // pred_check
        %p318 = pneg %p317
      $region38: #{attention_forward.5} parent=5 // pred_check_branch
        %320 = sbr.rel (%p318) target = $region40
      $region39: #{attention_forward.5} parent=5 // pred_region
        %s321 = ssub.s32 %s12, 2
        // Predicated region
        $region41: #{attention_forward.5} parent=39 // pred_check
          %p322 = pneg %p125
        $region42: #{attention_forward.5} parent=39 // pred_check_branch
          %324 = sbr.rel (%p322) target = $region44
        $region43: #{attention_forward.5} parent=39 // pred_region
          %s325 = sand.u32 %s110, 1
          %s326 = scalar_lea.sflag [#allocation3], %s325
          %s327 = sand.u32 %s110, 1
          %s328 = smul.addr %s327, 16
          %s329 = scalar_lea.vmem [#allocation2], %s328
          %330 = dma.done %s326, 256
        $region44: #{attention_forward.5} parent=39 // pred_fallthru
          _
      $region40: #{attention_forward.5} parent=5 // pred_fallthru
        _
    $region6: #{attention_forward.5} parent=1 // loop_footer
      %s16 = sadd.s32 1, %s12
    $region7: #{attention_forward.5} parent=1 // loop_footer_branch
      %11 = sbr.rel target = $region3
    $region8: #{attention_forward.5} parent=1 // loop_exit
      _
    %331 = vsyncpa [#allocation3], 1
    %s332 = scalar_lea.sflag [#allocation3], 1
    %333 = vsyncpa %s332, 1

// kernel: attention_forward.3
$region0: #{attention_forward.3}
  #allocation0 [shape = 'u32[]', space=smem, size = 0x4, offset = 0x4, fixed_abs, tag = 'smem constant byte address 0x4 - core index']
  #allocation1 [shape = 'u32[144,128]{1,0:T(1,128)}', space=vmem, size = 0x12000, scoped, tag = 'internal scratch']
  %s0 = inlined_call_operand.vmem [shape: bf16[2,16,64], index: 0, kind: input, shape index: {}]
  %s1 = inlined_call_operand.vmem [shape: bf16[64,192], index: 1, kind: input, shape index: {}]
  %s2 = inlined_call_operand.vmem [shape: f32[1,192], index: 2, kind: input, shape index: {}]
  %s3 = inlined_call_operand.vmem [shape: bf16[2,8,16,8], index: 3, kind: output, shape index: {0}]
  %s4 = inlined_call_operand.vmem [shape: bf16[2,8,16,8], index: 4, kind: output, shape index: {1}]
  %s5 = inlined_call_operand.vmem [shape: bf16[2,8,16,8], index: 5, kind: output, shape index: {2}]
  %6 = xla_tuple %s3, %s4, %s5
  %s7 = sld [smem:[#allocation0]]
  $region61: #{attention_forward.3} parent=0
    _
  %s9 = ssub.s32 1, %s7
  %s10 = scalar_select 0, %s9, %s7
  loop: start=0, step=1, limit=4
  $region2: #{attention_forward.3} parent=0 // loop_pre_header
    _
  $region3: #{attention_forward.3} parent=0 // loop_header
    %s12 = sphi 0, %s16
    %p13 = scmp.ge.s32.totalorder %s12, 4
    %s19 = sphi 0, %s31
    %s20 = sphi 0, %s27
    %s21 = sphi 0, %s19
    %s22 = sphi 0, %s20
    %s23 = sphi 0, %s21
    %s24 = sphi 0, %s22
    %s36 = sphi 0, %s38
    %s39 = sphi 0, %s36
    %s40 = sphi 0, %s39
    %s56 = sphi 0, %s40
    %s60 = sphi 0, %s60
    %s62 = sphi 0, %s60
    %s63 = sphi 0, %s62
    %s77 = sphi 0, %s63
    %s81 = sphi 0, %s81
    %s83 = sphi 0, %s81
    %s84 = sphi 0, %s83
    %s98 = sphi 0, %s84
    %s106 = sphi 0, %s108
    %s109 = sphi 0, %s106
    %s110 = sphi 0, %s109
    %s126 = sphi 0, %s110
    %s134 = sphi 0, %s136
    %s137 = sphi 0, %s134
    %s138 = sphi 0, %s137
    %s154 = sphi 0, %s138
    %s162 = sphi 0, %s164
    %s165 = sphi 0, %s162
    %s166 = sphi 0, %s165
    %s182 = sphi 0, %s166
  $region4: #{attention_forward.3} parent=0 // loop_header_branch
    %15 = sbr.rel (%p13) target = $region8
  $region5: #{attention_forward.3} parent=0 // loop_body
    %s17 = ssub.s32 %s12, 1
    %s18 = ssub.s32 %s12, 2
    %s25 = sadd.s32 1, %s20
    %p26 = scmp.ge.s32.totalorder %s25, 1
    %s27 = scalar_select %p26, 0, %s25
    %s28 = sadd.s32 1, %s19
    %s29 = scalar_select %p26, %s28, %s19
    %p30 = scmp.ge.s32.totalorder %s29, 2
    %s31 = scalar_select %p30, 0, %s29
    %s32 = ssub.s32 %s19, %s31
    %s33 = ssub.s32 %s20, %s27
    %s34 = sor.u32 %s32, %s33
    %p35 = scmp.eq.s32.totalorder %s34, 0
    %s37 = sadd.s32 %s36, 1
    %s38 = scalar_select %p35, %s36, %s37
    %p41 = pneg %p35
    %p42 = scmp.eq.s32.totalorder %s12, 1
    %p43 = por %p41, %p42
    %p44 = scmp.ne.s32.totalorder %s36, %s39
    %p45 = scmp.eq.s32.totalorder %s12, 0
    %p46 = por %p44, %p45
    %p47 = scmp.ne.s32.totalorder %s36, %s39
    %p48 = scmp.eq.s32.totalorder %s17, 1
    %p49 = por %p47, %p48
    %p50 = scmp.ne.s32.totalorder %s39, %s40
    %p51 = scmp.eq.s32.totalorder %s17, 0
    %p52 = por %p50, %p51
    %p53 = scmp.ne.s32.totalorder %s39, %s40
    %p54 = scmp.eq.s32.totalorder %s18, 1
    %p55 = por %p53, %p54
    %p57 = scmp.ne.s32.totalorder %s40, %s56
    %p58 = scmp.eq.s32.totalorder %s18, 0
    %p59 = por %p57, %p58
    %s61 = sadd.s32 %s60, 1
    %p64 = scmp.eq.s32.totalorder %s12, 1
    %p65 = scmp.ne.s32.totalorder %s60, %s62
    %p66 = scmp.eq.s32.totalorder %s12, 0
    %p67 = por %p65, %p66
    %p68 = scmp.ne.s32.totalorder %s60, %s62
    %p69 = scmp.eq.s32.totalorder %s17, 1
    %p70 = por %p68, %p69
    %p71 = scmp.ne.s32.totalorder %s62, %s63
    %p72 = scmp.eq.s32.totalorder %s17, 0
    %p73 = por %p71, %p72
    %p74 = scmp.ne.s32.totalorder %s62, %s63
    %p75 = scmp.eq.s32.totalorder %s18, 1
    %p76 = por %p74, %p75
    %p78 = scmp.ne.s32.totalorder %s63, %s77
    %p79 = scmp.eq.s32.totalorder %s18, 0
    %p80 = por %p78, %p79
    %s82 = sadd.s32 %s81, 1
    %p85 = scmp.eq.s32.totalorder %s12, 1
    %p86 = scmp.ne.s32.totalorder %s81, %s83
    %p87 = scmp.eq.s32.totalorder %s12, 0
    %p88 = por %p86, %p87
    %p89 = scmp.ne.s32.totalorder %s81, %s83
    %p90 = scmp.eq.s32.totalorder %s17, 1
    %p91 = por %p89, %p90
    %p92 = scmp.ne.s32.totalorder %s83, %s84
    %p93 = scmp.eq.s32.totalorder %s17, 0
    %p94 = por %p92, %p93
    %p95 = scmp.ne.s32.totalorder %s83, %s84
    %p96 = scmp.eq.s32.totalorder %s18, 1
    %p97 = por %p95, %p96
    %p99 = scmp.ne.s32.totalorder %s84, %s98
    %p100 = scmp.eq.s32.totalorder %s18, 0
    %p101 = por %p99, %p100
    %s102 = ssub.s32 %s19, %s31
    %s103 = ssub.s32 %s20, %s27
    %s104 = sor.u32 %s102, %s103
    %p105 = scmp.eq.s32.totalorder %s104, 0
    %s107 = sadd.s32 %s106, 1
    %s108 = scalar_select %p105, %s106, %s107
    %p111 = pneg %p105
    %p112 = scmp.eq.s32.totalorder %s12, 1
    %p113 = por %p111, %p112
    %p114 = scmp.ne.s32.totalorder %s106, %s109
    %p115 = scmp.eq.s32.totalorder %s12, 0
    %p116 = por %p114, %p115
    %p117 = scmp.ne.s32.totalorder %s106, %s109
    %p118 = scmp.eq.s32.totalorder %s17, 1
    %p119 = por %p117, %p118
    %p120 = scmp.ne.s32.totalorder %s109, %s110
    %p121 = scmp.eq.s32.totalorder %s17, 0
    %p122 = por %p120, %p121
    %p123 = scmp.ne.s32.totalorder %s109, %s110
    %p124 = scmp.eq.s32.totalorder %s18, 1
    %p125 = por %p123, %p124
    %p127 = scmp.ne.s32.totalorder %s110, %s126
    %p128 = scmp.eq.s32.totalorder %s18, 0
    %p129 = por %p127, %p128
    %s130 = ssub.s32 %s19, %s31
    %s131 = ssub.s32 %s20, %s27
    %s132 = sor.u32 %s130, %s131
    %p133 = scmp.eq.s32.totalorder %s132, 0
    %s135 = sadd.s32 %s134, 1
    %s136 = scalar_select %p133, %s134, %s135
    %p139 = pneg %p133
    %p140 = scmp.eq.s32.totalorder %s12, 1
    %p141 = por %p139, %p140
    %p142 = scmp.ne.s32.totalorder %s134, %s137
    %p143 = scmp.eq.s32.totalorder %s12, 0
    %p144 = por %p142, %p143
    %p145 = scmp.ne.s32.totalorder %s134, %s137
    %p146 = scmp.eq.s32.totalorder %s17, 1
    %p147 = por %p145, %p146
    %p148 = scmp.ne.s32.totalorder %s137, %s138
    %p149 = scmp.eq.s32.totalorder %s17, 0
    %p150 = por %p148, %p149
    %p151 = scmp.ne.s32.totalorder %s137, %s138
    %p152 = scmp.eq.s32.totalorder %s18, 1
    %p153 = por %p151, %p152
    %p155 = scmp.ne.s32.totalorder %s138, %s154
    %p156 = scmp.eq.s32.totalorder %s18, 0
    %p157 = por %p155, %p156
    %s158 = ssub.s32 %s19, %s31
    %s159 = ssub.s32 %s20, %s27
    %s160 = sor.u32 %s158, %s159
    %p161 = scmp.eq.s32.totalorder %s160, 0
    %s163 = sadd.s32 %s162, 1
    %s164 = scalar_select %p161, %s162, %s163
    %p167 = pneg %p161
    %p168 = scmp.eq.s32.totalorder %s12, 1
    %p169 = por %p167, %p168
    %p170 = scmp.ne.s32.totalorder %s162, %s165
    %p171 = scmp.eq.s32.totalorder %s12, 0
    %p172 = por %p170, %p171
    %p173 = scmp.ne.s32.totalorder %s162, %s165
    %p174 = scmp.eq.s32.totalorder %s17, 1
    %p175 = por %p173, %p174
    %p176 = scmp.ne.s32.totalorder %s165, %s166
    %p177 = scmp.eq.s32.totalorder %s17, 0
    %p178 = por %p176, %p177
    %p179 = scmp.ne.s32.totalorder %s165, %s166
    %p180 = scmp.eq.s32.totalorder %s18, 1
    %p181 = por %p179, %p180
    %p183 = scmp.ne.s32.totalorder %s166, %s182
    %p184 = scmp.eq.s32.totalorder %s18, 0
    %p185 = por %p183, %p184
    %p186 = scmp.le.s32.totalorder 1, %s12
    %p187 = scmp.lt.s32.totalorder %s12, 3
    %p188 = pnand %p186, %p187
    %p189 = pneg %p188
    // Predicated region
    $region9: #{attention_forward.3} parent=5 // pred_check
      _
    $region10: #{attention_forward.3} parent=5 // pred_check_branch
      %191 = sbr.rel (%p188) target = $region12
    $region11: #{attention_forward.3} parent=5 // pred_region
      %s192 = ssub.s32 %s12, 1
      // Predicated region
      $region13: #{attention_forward.3} parent=11 // pred_check
        %p193 = pneg %p73
      $region14: #{attention_forward.3} parent=11 // pred_check_branch
        %195 = sbr.rel (%p193) target = $region16
      $region15: #{attention_forward.3} parent=11 // pred_region
        _
      $region16: #{attention_forward.3} parent=11 // pred_fallthru
        _
      // Predicated region
      $region17: #{attention_forward.3} parent=11 // pred_check
        %p196 = pneg %p94
      $region18: #{attention_forward.3} parent=11 // pred_check_branch
        %198 = sbr.rel (%p196) target = $region20
      $region19: #{attention_forward.3} parent=11 // pred_region
        _
      $region20: #{attention_forward.3} parent=11 // pred_fallthru
        _
    $region12: #{attention_forward.3} parent=5 // pred_fallthru
      _
    %p199 = scmp.lt.s32.totalorder %s12, 2
    // Predicated region
    $region21: #{attention_forward.3} parent=5 // pred_check
      %p200 = pneg %p199
    $region22: #{attention_forward.3} parent=5 // pred_check_branch
      %202 = sbr.rel (%p200) target = $region24
    $region23: #{attention_forward.3} parent=5 // pred_region
      // Predicated region
      $region25: #{attention_forward.3} parent=23 // pred_check
        %p203 = pneg %p46
      $region26: #{attention_forward.3} parent=23 // pred_check_branch
        %205 = sbr.rel (%p203) target = $region28
      $region27: #{attention_forward.3} parent=23 // pred_region
        %s206 = smul.u32 2, %s20
        %p207 = scmp.lt.s32.totalorder %s19, 1
        %s208 = scalar_select %p207, %s19, 1
        %p209 = scmp.lt.s32.totalorder %s206, 1
        %s210 = scalar_select %p209, %s206, 1
        %s211 = smul.addr %s208, 2
        %s212 = sadd.s32 %s210, %s211
        %s213 = smul.addr %s212, 4
        %s214 = scalar_lea.vmem %s0, %s213
        %s215 = smul.u32 2, %s20
      $region28: #{attention_forward.3} parent=23 // pred_fallthru
        _
    $region24: #{attention_forward.3} parent=5 // pred_fallthru
      _
    %p216 = scmp.le.s32.totalorder 1, %s12
    %p217 = scmp.lt.s32.totalorder %s12, 3
    %p218 = pnand %p216, %p217
    %p219 = pneg %p218
    // Predicated region
    $region29: #{attention_forward.3} parent=5 // pred_check
      _
    $region30: #{attention_forward.3} parent=5 // pred_check_branch
      %221 = sbr.rel (%p218) target = $region32
    $region31: #{attention_forward.3} parent=5 // pred_region
      %s222 = ssub.s32 %s12, 1
      %s223 = smul.u32 2, %s22
      %p224 = scmp.lt.s32.totalorder %s21, 1
      %s225 = scalar_select %p224, %s21, 1
      %p226 = scmp.lt.s32.totalorder %s223, 1
      %s227 = scalar_select %p226, %s223, 1
      %s228 = smul.addr %s225, 2
      %s229 = sadd.s32 %s227, %s228
      %s230 = smul.addr %s229, 4
      %s231 = scalar_lea.vmem %s0, %s230
      %p232 = pneg %p52
      %p233 = pneg %p49
      %p234 = pneg %p73
      %p235 = pneg %p70
      %p236 = pneg %p94
      %p237 = pneg %p91
      %p238 = pneg %p122
      %p239 = pneg %p119
      %s240 = smul.u32 2, %s22
      %p241 = scmp.lt.s32.totalorder %s21, 1
      %s242 = scalar_select %p241, %s21, 1
      %p243 = scmp.lt.s32.totalorder %s240, 1
      %s244 = scalar_select %p243, %s240, 1
      %s245 = smul.addr %s242, 16
      %s246 = sadd.s32 %s244, %s245
      %s247 = smul.addr %s246, 4
      %s248 = scalar_lea.vmem %s3, %s247
      %p249 = pneg %p150
      %p250 = pneg %p147
      %s251 = smul.u32 2, %s22
      %p252 = scmp.lt.s32.totalorder %s21, 1
      %s253 = scalar_select %p252, %s21, 1
      %p254 = scmp.lt.s32.totalorder %s251, 1
      %s255 = scalar_select %p254, %s251, 1
      %s256 = smul.addr %s253, 16
      %s257 = sadd.s32 %s255, %s256
      %s258 = smul.addr %s257, 4
      %s259 = scalar_lea.vmem %s4, %s258
      %p260 = pneg %p178
      %p261 = pneg %p175
      %s262 = smul.u32 2, %s22
      %p263 = scmp.lt.s32.totalorder %s21, 1
      %s264 = scalar_select %p263, %s21, 1
      %p265 = scmp.lt.s32.totalorder %s262, 1
      %s266 = scalar_select %p265, %s262, 1
      %s267 = smul.addr %s264, 16
      %s268 = sadd.s32 %s266, %s267
      %s269 = smul.addr %s268, 4
      %s270 = scalar_lea.vmem %s5, %s269
      %s271 = smul.u32 2, %s22
      %p272 = scmp.lt.s32.totalorder %s21, 1
      %s273 = scalar_select %p272, %s21, 1
      %p274 = scmp.lt.s32.totalorder %s271, 1
      %s275 = scalar_select %p274, %s271, 1
      %s276 = smul.addr %s273, 2
      %s277 = sadd.s32 %s275, %s276
      %s278 = smul.addr %s277, 4
      %s279 = scalar_lea.vmem %s0, %s278
      %s280 = smul.u32 2, %s22
      %s281 = smul.u32 2, %s22
      %p282 = scmp.lt.s32.totalorder %s21, 1
      %s283 = scalar_select %p282, %s21, 1
      %p284 = scmp.lt.s32.totalorder %s281, 1
      %s285 = scalar_select %p284, %s281, 1
      %s286 = smul.addr %s283, 16
      %s287 = sadd.s32 %s285, %s286
      %s288 = smul.addr %s287, 4
      %s289 = scalar_lea.vmem %s3, %s288
      %s290 = smul.u32 2, %s22
      %s291 = smul.u32 2, %s22
      %p292 = scmp.lt.s32.totalorder %s21, 1
      %s293 = scalar_select %p292, %s21, 1
      %p294 = scmp.lt.s32.totalorder %s291, 1
      %s295 = scalar_select %p294, %s291, 1
      %s296 = smul.addr %s293, 16
      %s297 = sadd.s32 %s295, %s296
      %s298 = smul.addr %s297, 4
      %s299 = scalar_lea.vmem %s4, %s298
      %s300 = smul.u32 2, %s22
      %s301 = smul.u32 2, %s22
      %p302 = scmp.lt.s32.totalorder %s21, 1
      %s303 = scalar_select %p302, %s21, 1
      %p304 = scmp.lt.s32.totalorder %s301, 1
      %s305 = scalar_select %p304, %s301, 1
      %s306 = smul.addr %s303, 16
      %s307 = sadd.s32 %s305, %s306
      %s308 = smul.addr %s307, 4
      %s309 = scalar_lea.vmem %s5, %s308
      %s310 = smul.u32 2, %s22
      %v312 = vld [vmem:[%s279] sm:$0xf]
      %v313 = vld [vmem:[%s279 + $0x4] sm:$0xf]
      %v314 = vld [vmem:[%s1] sm:$0xff]
      %v315 = vld [vmem:[%s1 + $0x8] sm:$0xff]
      %v316 = vld [vmem:[%s1 + $0x10] sm:$0xff]
      %v317 = vld [vmem:[%s1 + $0x18] sm:$0xff]
      %v318 = vld [vmem:[%s1 + $0x20] sm:$0xff]
      %v319 = vld [vmem:[%s1 + $0x28] sm:$0xff]
      %v320 = vld [vmem:[%s1 + $0x30] sm:$0xff]
      %v321 = vld [vmem:[%s1 + $0x38] sm:$0xff]
      %v322 = vld [vmem:[%s2] sm:$0x3]
      %v324 = vlaneseq
      %v325 = vshrl.u32 %v324, 7
      %v326 = vsub.s32 0, %v325
      %v327 = vrot.slane %v322, %v326
      %v328 = vlaneseq
      %v329 = vshrl.u32 %v328, 7
      %v330 = vsub.s32 1, %v329
      %v331 = vrot.slane %v322, %v330
      %v336 = vunpack.c.l.b16 %v312
      %v337 = vunpack.c.l.b16 %v313
      %v338 = vpack.c.b16 %v337, %v336
      %v347 = vunpack.c.l.b16 %v314
      %v348 = vunpack.c.h.b16 %v314
      %v349 = vunpack.c.l.b16 %v315
      %v350 = vunpack.c.h.b16 %v315
      %v351 = vunpack.c.l.b16 %v316
      %v352 = vunpack.c.h.b16 %v316
      %v353 = vunpack.c.l.b16 %v317
      %v354 = vunpack.c.h.b16 %v317
      %v355 = vunpack.c.l.b16 %v318
      %v356 = vunpack.c.h.b16 %v318
      %v357 = vunpack.c.l.b16 %v319
      %v358 = vunpack.c.h.b16 %v319
      %v359 = vunpack.c.l.b16 %v320
      %v360 = vunpack.c.h.b16 %v320
      %v361 = vunpack.c.l.b16 %v321
      %v362 = vunpack.c.h.b16 %v321
      %v363 = vpack.c.b16 %v349, %v347
      %v364 = vpack.c.b16 %v350, %v348
      %v365 = vpack.c.b16 %v353, %v351
      %v366 = vpack.c.b16 %v354, %v352
      %v367 = vpack.c.b16 %v357, %v355
      %v368 = vpack.c.b16 %v358, %v356
      %v369 = vpack.c.b16 %v361, %v359
      %v370 = vpack.c.b16 %v362, %v360
      %vm379 = vcmask 523264
      %v381 = vsel %vm379, %v338, 0
      %383 = vmatprep.subr.bf16.mxu0 %v364
      %384 = vmatpush1.bf16.msra.mxu0 %v363
      %385 = vmatprep.subr.bf16.mxu0 %v366
      %386 = vmatpush1.bf16.msra.mxu0 %v365
      %387 = vmatprep.subr.bf16.mxu0 %v368
      %388 = vmatpush1.bf16.msra.mxu0 %v367
      %389 = vmatprep.subr.bf16.mxu0 %v370
      %390 = vmatpush1.bf16.msra.mxu0 %v369
      %391 = vmatprep.subr.bf16.mxu0 0
      %392 = vmatpush1.bf16.msra.mxu0 0
      %393 = vmatprep.subr.bf16.mxu0 0
      %394 = vmatpush1.bf16.msra.mxu0 0
      %395 = vmatprep.subr.bf16.mxu0 0
      %396 = vmatpush1.bf16.msra.mxu0 0
      %397 = vmatprep.subr.bf16.mxu0 0
      %398 = vmatpush1.bf16.msra.mxu0 0
      %399 = vmatprep.subr.bf16.mxu0 0
      %400 = vmatpush1.bf16.msra.mxu0 0
      %401 = vmatprep.subr.bf16.mxu0 0
      %402 = vmatpush1.bf16.msra.mxu0 0
      %403 = vmatprep.subr.bf16.mxu0 0
      %404 = vmatpush1.bf16.msra.mxu0 0
      %405 = vmatprep.subr.bf16.mxu0 0
      %406 = vmatpush1.bf16.msra.mxu0 0
      %407 = vmatprep.subr.bf16.mxu0 0
      %408 = vmatpush1.bf16.msra.mxu0 0
      %409 = vmatprep.subr.bf16.mxu0 0
      %410 = vmatpush1.bf16.msra.mxu0 0
      %411 = vmatprep.subr.bf16.mxu0 0
      %412 = vmatpush1.bf16.msra.mxu0 0
      %413 = vmatprep.subr.bf16.mxu0 0
      %414 = vmatpush1.bf16.msra.mxu0 0
      %415 = vmatprep.mubr.bf16.mxu0 0
      %416 = vmatmul.mubr.bf16.gmra.mrb[0].mxu0 %v381
      %v417 = vpop.f32.mrb[0].mxu0
      %v418 = vadd.f32 %v327, %v417
      %v419 = vpop.f32.mrb[0].mxu0
      %v420 = vadd.f32 %v331, %v419
      %v421 = vpop.f32.mrb[0].mxu0
      %v422 = vadd.f32 %v327, %v421
      %v423 = vpop.f32.mrb[0].mxu0
      %v424 = vadd.f32 %v331, %v423
      %425 = vdwg.mxu0
      %v426 = vmul.f32 %v418, 0.35355338
      %v427 = vmul.f32 %v422, 0.35355338
      %v428 = vpack.c.bf16 %v427, %v426
      %v429 = vpack.c.bf16 %v422, %v418
      %v430 = vpack.c.bf16 %v424, %v420
      %v432 = vunpack.c.l.b16 %v428
      %v433 = vunpack.c.h.b16 %v428
      %v434 = vpack.c.b16 %v432, %v432
      %v435 = vpack.c.b16 %v433, %v433
      %vm438 = vcmask 60416
      %439 = vst.msk [vmem:[%s289] sm:$0xf] %vm438, %v434
      %440 = vst.msk [vmem:[%s289 + $0x4] sm:$0xf] %vm438, %v435
      %v442 = vunpack.c.l.b16 %v429
      %v443 = vunpack.c.h.b16 %v429
      %v444 = vpack.c.b16 %v442, %v442
      %v445 = vpack.c.b16 %v443, %v443
      %446 = vrot.lane.b32.xlu0 %v444, 64
      %v447 = vpop.permute.xlu0 %446
      %448 = vrot.lane.b32.xlu0 %v445, 64
      %v449 = vpop.permute.xlu0 %448
      %452 = vst.msk [vmem:[%s299] sm:$0xf] %vm438, %v447
      %453 = vst.msk [vmem:[%s299 + $0x4] sm:$0xf] %vm438, %v449
      %v455 = vunpack.c.l.b16 %v430
      %v456 = vunpack.c.h.b16 %v430
      %v457 = vpack.c.b16 %v455, %v455
      %v458 = vpack.c.b16 %v456, %v456
      %461 = vst.msk [vmem:[%s309] sm:$0xf] %vm438, %v457
      %462 = vst.msk [vmem:[%s309 + $0x4] sm:$0xf] %vm438, %v458
      %463 = vrot.lane.b32.xlu0 %v434, 120
      %v464 = vpop.permute.xlu0 %463
      %465 = vrot.lane.b32.xlu0 %v435, 120
      %v466 = vpop.permute.xlu0 %465
      %s469 = scalar_lea.vmem %s289, 8
      %470 = vst.msk [vmem:[%s469] sm:$0xf] %vm438, %v464
      %471 = vst.msk [vmem:[%s469 + $0x4] sm:$0xf] %vm438, %v466
      %472 = vrot.lane.b32.xlu0 %v444, 56
      %v473 = vpop.permute.xlu0 %472
      %474 = vrot.lane.b32.xlu0 %v445, 56
      %v475 = vpop.permute.xlu0 %474
      %s478 = scalar_lea.vmem %s299, 8
      %479 = vst.msk [vmem:[%s478] sm:$0xf] %vm438, %v473
      %480 = vst.msk [vmem:[%s478 + $0x4] sm:$0xf] %vm438, %v475
      %481 = vrot.lane.b32.xlu0 %v457, 120
      %v482 = vpop.permute.xlu0 %481
      %483 = vrot.lane.b32.xlu0 %v458, 120
      %v484 = vpop.permute.xlu0 %483
      %s487 = scalar_lea.vmem %s309, 8
      %488 = vst.msk [vmem:[%s487] sm:$0xf] %vm438, %v482
      %489 = vst.msk [vmem:[%s487 + $0x4] sm:$0xf] %vm438, %v484
      %490 = vrot.lane.b32.xlu0 %v434, 112
      %v491 = vpop.permute.xlu0 %490
      %492 = vrot.lane.b32.xlu0 %v435, 112
      %v493 = vpop.permute.xlu0 %492
      %s496 = scalar_lea.vmem %s289, 16
      %497 = vst.msk [vmem:[%s496] sm:$0xf] %vm438, %v491
      %498 = vst.msk [vmem:[%s496 + $0x4] sm:$0xf] %vm438, %v493
      %499 = vrot.lane.b32.xlu0 %v444, 48
      %v500 = vpop.permute.xlu0 %499
      %501 = vrot.lane.b32.xlu0 %v445, 48
      %v502 = vpop.permute.xlu0 %501
      %s505 = scalar_lea.vmem %s299, 16
      %506 = vst.msk [vmem:[%s505] sm:$0xf] %vm438, %v500
      %507 = vst.msk [vmem:[%s505 + $0x4] sm:$0xf] %vm438, %v502
      %508 = vrot.lane.b32.xlu0 %v457, 112
      %v509 = vpop.permute.xlu0 %508
      %510 = vrot.lane.b32.xlu0 %v458, 112
      %v511 = vpop.permute.xlu0 %510
      %s514 = scalar_lea.vmem %s309, 16
      %515 = vst.msk [vmem:[%s514] sm:$0xf] %vm438, %v509
      %516 = vst.msk [vmem:[%s514 + $0x4] sm:$0xf] %vm438, %v511
      %517 = vrot.lane.b32.xlu0 %v434, 104
      %v518 = vpop.permute.xlu0 %517
      %519 = vrot.lane.b32.xlu0 %v435, 104
      %v520 = vpop.permute.xlu0 %519
      %s523 = scalar_lea.vmem %s289, 24
      %524 = vst.msk [vmem:[%s523] sm:$0xf] %vm438, %v518
      %525 = vst.msk [vmem:[%s523 + $0x4] sm:$0xf] %vm438, %v520
      %526 = vrot.lane.b32.xlu0 %v444, 40
      %v527 = vpop.permute.xlu0 %526
      %528 = vrot.lane.b32.xlu0 %v445, 40
      %v529 = vpop.permute.xlu0 %528
      %s532 = scalar_lea.vmem %s299, 24
      %533 = vst.msk [vmem:[%s532] sm:$0xf] %vm438, %v527
      %534 = vst.msk [vmem:[%s532 + $0x4] sm:$0xf] %vm438, %v529
      %535 = vrot.lane.b32.xlu0 %v457, 104
      %v536 = vpop.permute.xlu0 %535
      %537 = vrot.lane.b32.xlu0 %v458, 104
      %v538 = vpop.permute.xlu0 %537
      %s541 = scalar_lea.vmem %s309, 24
      %542 = vst.msk [vmem:[%s541] sm:$0xf] %vm438, %v536
      %543 = vst.msk [vmem:[%s541 + $0x4] sm:$0xf] %vm438, %v538
      %544 = vrot.lane.b32.xlu0 %v434, 96
      %v545 = vpop.permute.xlu0 %544
      %546 = vrot.lane.b32.xlu0 %v435, 96
      %v547 = vpop.permute.xlu0 %546
      %s550 = scalar_lea.vmem %s289, 32
      %551 = vst.msk [vmem:[%s550] sm:$0xf] %vm438, %v545
      %552 = vst.msk [vmem:[%s550 + $0x4] sm:$0xf] %vm438, %v547
      %553 = vrot.lane.b32.xlu0 %v444, 32
      %v554 = vpop.permute.xlu0 %553
      %555 = vrot.lane.b32.xlu0 %v445, 32
      %v556 = vpop.permute.xlu0 %555
      %s559 = scalar_lea.vmem %s299, 32
      %560 = vst.msk [vmem:[%s559] sm:$0xf] %vm438, %v554
      %561 = vst.msk [vmem:[%s559 + $0x4] sm:$0xf] %vm438, %v556
      %562 = vrot.lane.b32.xlu0 %v457, 96
      %v563 = vpop.permute.xlu0 %562
      %564 = vrot.lane.b32.xlu0 %v458, 96
      %v565 = vpop.permute.xlu0 %564
      %s568 = scalar_lea.vmem %s309, 32
      %569 = vst.msk [vmem:[%s568] sm:$0xf] %vm438, %v563
      %570 = vst.msk [vmem:[%s568 + $0x4] sm:$0xf] %vm438, %v565
      %571 = vrot.lane.b32.xlu0 %v434, 88
      %v572 = vpop.permute.xlu0 %571
      %573 = vrot.lane.b32.xlu0 %v435, 88
      %v574 = vpop.permute.xlu0 %573
      %s577 = scalar_lea.vmem %s289, 40
      %578 = vst.msk [vmem:[%s577] sm:$0xf] %vm438, %v572
      %579 = vst.msk [vmem:[%s577 + $0x4] sm:$0xf] %vm438, %v574
      %580 = vrot.lane.b32.xlu0 %v444, 24
      %v581 = vpop.permute.xlu0 %580
      %582 = vrot.lane.b32.xlu0 %v445, 24
      %v583 = vpop.permute.xlu0 %582
      %s586 = scalar_lea.vmem %s299, 40
      %587 = vst.msk [vmem:[%s586] sm:$0xf] %vm438, %v581
      %588 = vst.msk [vmem:[%s586 + $0x4] sm:$0xf] %vm438, %v583
      %589 = vrot.lane.b32.xlu0 %v457, 88
      %v590 = vpop.permute.xlu0 %589
      %591 = vrot.lane.b32.xlu0 %v458, 88
      %v592 = vpop.permute.xlu0 %591
      %s595 = scalar_lea.vmem %s309, 40
      %596 = vst.msk [vmem:[%s595] sm:$0xf] %vm438, %v590
      %597 = vst.msk [vmem:[%s595 + $0x4] sm:$0xf] %vm438, %v592
      %598 = vrot.lane.b32.xlu0 %v434, 80
      %v599 = vpop.permute.xlu0 %598
      %600 = vrot.lane.b32.xlu0 %v435, 80
      %v601 = vpop.permute.xlu0 %600
      %s604 = scalar_lea.vmem %s289, 48
      %605 = vst.msk [vmem:[%s604] sm:$0xf] %vm438, %v599
      %606 = vst.msk [vmem:[%s604 + $0x4] sm:$0xf] %vm438, %v601
      %607 = vrot.lane.b32.xlu0 %v444, 16
      %v608 = vpop.permute.xlu0 %607
      %609 = vrot.lane.b32.xlu0 %v445, 16
      %v610 = vpop.permute.xlu0 %609
      %s613 = scalar_lea.vmem %s299, 48
      %614 = vst.msk [vmem:[%s613] sm:$0xf] %vm438, %v608
      %615 = vst.msk [vmem:[%s613 + $0x4] sm:$0xf] %vm438, %v610
      %616 = vrot.lane.b32.xlu0 %v457, 80
      %v617 = vpop.permute.xlu0 %616
      %618 = vrot.lane.b32.xlu0 %v458, 80
      %v619 = vpop.permute.xlu0 %618
      %s622 = scalar_lea.vmem %s309, 48
      %623 = vst.msk [vmem:[%s622] sm:$0xf] %vm438, %v617
      %624 = vst.msk [vmem:[%s622 + $0x4] sm:$0xf] %vm438, %v619
      %625 = vrot.lane.b32.xlu0 %v434, 72
      %v626 = vpop.permute.xlu0 %625
      %627 = vrot.lane.b32.xlu0 %v435, 72
      %v628 = vpop.permute.xlu0 %627
      %s631 = scalar_lea.vmem %s289, 56
      %632 = vst.msk [vmem:[%s631] sm:$0xf] %vm438, %v626
      %633 = vst.msk [vmem:[%s631 + $0x4] sm:$0xf] %vm438, %v628
      %634 = vrot.lane.b32.xlu0 %v444, 8
      %v635 = vpop.permute.xlu0 %634
      %636 = vrot.lane.b32.xlu0 %v445, 8
      %v637 = vpop.permute.xlu0 %636
      %s640 = scalar_lea.vmem %s299, 56
      %641 = vst.msk [vmem:[%s640] sm:$0xf] %vm438, %v635
      %642 = vst.msk [vmem:[%s640 + $0x4] sm:$0xf] %vm438, %v637
      %643 = vrot.lane.b32.xlu0 %v457, 72
      %v644 = vpop.permute.xlu0 %643
      %645 = vrot.lane.b32.xlu0 %v458, 72
      %v646 = vpop.permute.xlu0 %645
      %s649 = scalar_lea.vmem %s309, 56
      %650 = vst.msk [vmem:[%s649] sm:$0xf] %vm438, %v644
      %651 = vst.msk [vmem:[%s649 + $0x4] sm:$0xf] %vm438, %v646
      %s652 = smul.u32 2, %s22
      %p653 = scmp.lt.s32.totalorder %s21, 1
      %s654 = scalar_select %p653, %s21, 1
      %p655 = scmp.lt.s32.totalorder %s652, 1
      %s656 = scalar_select %p655, %s652, 1
      %s657 = smul.addr %s654, 16
      %s658 = sadd.s32 %s656, %s657
      %s659 = smul.addr %s658, 4
      %s660 = scalar_lea.vmem %s3, %s659
      %s661 = smul.u32 2, %s22
      %p662 = scmp.lt.s32.totalorder %s21, 1
      %s663 = scalar_select %p662, %s21, 1
      %p664 = scmp.lt.s32.totalorder %s661, 1
      %s665 = scalar_select %p664, %s661, 1
      %s666 = smul.addr %s663, 16
      %s667 = sadd.s32 %s665, %s666
      %s668 = smul.addr %s667, 4
      %s669 = scalar_lea.vmem %s4, %s668
      %s670 = smul.u32 2, %s22
      %p671 = scmp.lt.s32.totalorder %s21, 1
      %s672 = scalar_select %p671, %s21, 1
      %p673 = scmp.lt.s32.totalorder %s670, 1
      %s674 = scalar_select %p673, %s670, 1
      %s675 = smul.addr %s672, 16
      %s676 = sadd.s32 %s674, %s675
      %s677 = smul.addr %s676, 4
      %s678 = scalar_lea.vmem %s5, %s677
      // Predicated region
      $region33: #{attention_forward.3} parent=31 // pred_check
        %p679 = pneg %p119
      $region34: #{attention_forward.3} parent=31 // pred_check_branch
        %681 = sbr.rel (%p679) target = $region36
      $region35: #{attention_forward.3} parent=31 // pred_region
        %s682 = smul.u32 2, %s22
      $region36: #{attention_forward.3} parent=31 // pred_fallthru
        _
      // Predicated region
      $region37: #{attention_forward.3} parent=31 // pred_check
        %p683 = pneg %p147
      $region38: #{attention_forward.3} parent=31 // pred_check_branch
        %685 = sbr.rel (%p683) target = $region40
      $region39: #{attention_forward.3} parent=31 // pred_region
        %s686 = smul.u32 2, %s22
      $region40: #{attention_forward.3} parent=31 // pred_fallthru
        _
      // Predicated region
      $region41: #{attention_forward.3} parent=31 // pred_check
        %p687 = pneg %p175
      $region42: #{attention_forward.3} parent=31 // pred_check_branch
        %689 = sbr.rel (%p687) target = $region44
      $region43: #{attention_forward.3} parent=31 // pred_region
        %s690 = smul.u32 2, %s22
      $region44: #{attention_forward.3} parent=31 // pred_fallthru
        _
    $region32: #{attention_forward.3} parent=5 // pred_fallthru
      _
    %p691 = scmp.le.s32.totalorder 2, %s12
    // Predicated region
    $region45: #{attention_forward.3} parent=5 // pred_check
      %p692 = pneg %p691
    $region46: #{attention_forward.3} parent=5 // pred_check_branch
      %694 = sbr.rel (%p692) target = $region48
    $region47: #{attention_forward.3} parent=5 // pred_region
      %s695 = ssub.s32 %s12, 2
      // Predicated region
      $region49: #{attention_forward.3} parent=47 // pred_check
        %p696 = pneg %p125
      $region50: #{attention_forward.3} parent=47 // pred_check_branch
        %698 = sbr.rel (%p696) target = $region52
      $region51: #{attention_forward.3} parent=47 // pred_region
        %s699 = smul.u32 2, %s24
        %p700 = scmp.lt.s32.totalorder %s23, 1
        %s701 = scalar_select %p700, %s23, 1
        %p702 = scmp.lt.s32.totalorder %s699, 1
        %s703 = scalar_select %p702, %s699, 1
        %s704 = smul.addr %s701, 16
        %s705 = sadd.s32 %s703, %s704
        %s706 = smul.addr %s705, 4
        %s707 = scalar_lea.vmem %s3, %s706
      $region52: #{attention_forward.3} parent=47 // pred_fallthru
        _
      // Predicated region
      $region53: #{attention_forward.3} parent=47 // pred_check
        %p708 = pneg %p153
      $region54: #{attention_forward.3} parent=47 // pred_check_branch
        %710 = sbr.rel (%p708) target = $region56
      $region55: #{attention_forward.3} parent=47 // pred_region
        %s711 = smul.u32 2, %s24
        %p712 = scmp.lt.s32.totalorder %s23, 1
        %s713 = scalar_select %p712, %s23, 1
        %p714 = scmp.lt.s32.totalorder %s711, 1
        %s715 = scalar_select %p714, %s711, 1
        %s716 = smul.addr %s713, 16
        %s717 = sadd.s32 %s715, %s716
        %s718 = smul.addr %s717, 4
        %s719 = scalar_lea.vmem %s4, %s718
      $region56: #{attention_forward.3} parent=47 // pred_fallthru
        _
      // Predicated region
      $region57: #{attention_forward.3} parent=47 // pred_check
        %p720 = pneg %p181
      $region58: #{attention_forward.3} parent=47 // pred_check_branch
        %722 = sbr.rel (%p720) target = $region60
      $region59: #{attention_forward.3} parent=47 // pred_region
        %s723 = smul.u32 2, %s24
        %p724 = scmp.lt.s32.totalorder %s23, 1
        %s725 = scalar_select %p724, %s23, 1
        %p726 = scmp.lt.s32.totalorder %s723, 1
        %s727 = scalar_select %p726, %s723, 1
        %s728 = smul.addr %s725, 16
        %s729 = sadd.s32 %s727, %s728
        %s730 = smul.addr %s729, 4
        %s731 = scalar_lea.vmem %s5, %s730
      $region60: #{attention_forward.3} parent=47 // pred_fallthru
        _
    $region48: #{attention_forward.3} parent=5 // pred_fallthru
      _
  $region6: #{attention_forward.3} parent=0 // loop_footer
    %s16 = sadd.s32 1, %s12
  $region7: #{attention_forward.3} parent=0 // loop_footer_branch
    %11 = sbr.rel target = $region3
  $region8: #{attention_forward.3} parent=0 // loop_exit
    _

// kernel: attention_forward.4
$region0: #{attention_forward.4}
  #allocation0 [shape = 'u32[]', space=smem, size = 0x4, offset = 0x4, fixed_abs, tag = 'smem constant byte address 0x4 - core index']
  #allocation1 [shape = 'u32[144,128]{1,0:T(1,128)}', space=vmem, size = 0x12000, scoped, tag = 'internal scratch']
  #allocation2 [shape = 'f32[8,16,1]{2,1,0:T(8,128)}', space=vmem, size = 0x10000, scoped, tag = 'scratch operand']
  #allocation3 [shape = 'f32[8,16,1]{2,1,0:T(8,128)}', space=vmem, size = 0x10000, scoped, tag = 'scratch operand']
  #allocation4 [shape = 'f32[8,16,8]{2,1,0:T(8,128)}', space=vmem, size = 0x10000, scoped, tag = 'scratch operand']
  %s0 = inlined_call_operand.vmem [shape: bf16[2,8,16,8], index: 0, kind: input, shape index: {}]
  %s1 = inlined_call_operand.vmem [shape: bf16[2,8,16,8], index: 1, kind: input, shape index: {}]
  %s2 = inlined_call_operand.vmem [shape: bf16[2,8,16,8], index: 2, kind: input, shape index: {}]
  %s3 = inlined_call_operand.vmem [shape: bf16[2,16,64], index: 3, kind: output, shape index: {}]
  %s4 = sld [smem:[#allocation0]]
  $region53: #{attention_forward.4} parent=0
    _
  %s6 = ssub.s32 1, %s4
  %s7 = scalar_select 0, %s6, %s4
  loop: start=0, step=1, limit=4
  $region2: #{attention_forward.4} parent=0 // loop_pre_header
    _
  $region3: #{attention_forward.4} parent=0 // loop_header
    %s9 = sphi 0, %s13
    %p10 = scmp.ge.s32.totalorder %s9, 4
    %s16 = sphi 0, %s35
    %s17 = sphi 0, %s31
    %s18 = sphi 0, %s27
    %s19 = sphi 0, %s16
    %s20 = sphi 0, %s17
    %s21 = sphi 0, %s18
    %s22 = sphi 0, %s19
    %s23 = sphi 0, %s20
    %s24 = sphi 0, %s21
    %s40 = sphi 0, %s42
    %s43 = sphi 0, %s40
    %s44 = sphi 0, %s43
    %s60 = sphi 0, %s44
    %s68 = sphi 0, %s70
    %s71 = sphi 0, %s68
    %s72 = sphi 0, %s71
    %s88 = sphi 0, %s72
    %s96 = sphi 0, %s98
    %s99 = sphi 0, %s96
    %s100 = sphi 0, %s99
    %s116 = sphi 0, %s100
    %s124 = sphi 0, %s126
    %s127 = sphi 0, %s124
    %s128 = sphi 0, %s127
    %s144 = sphi 0, %s128
  $region4: #{attention_forward.4} parent=0 // loop_header_branch
    %12 = sbr.rel (%p10) target = $region8
  $region5: #{attention_forward.4} parent=0 // loop_body
    %s14 = ssub.s32 %s9, 1
    %s15 = ssub.s32 %s9, 2
    %s25 = sadd.s32 1, %s18
    %p26 = scmp.ge.s32.totalorder %s25, 1
    %s27 = scalar_select %p26, 0, %s25
    %s28 = sadd.s32 1, %s17
    %s29 = scalar_select %p26, %s28, %s17
    %p30 = scmp.ge.s32.totalorder %s29, 1
    %s31 = scalar_select %p30, 0, %s29
    %s32 = sadd.s32 1, %s16
    %s33 = scalar_select %p30, %s32, %s16
    %p34 = scmp.ge.s32.totalorder %s33, 2
    %s35 = scalar_select %p34, 0, %s33
    %s36 = ssub.s32 %s16, %s35
    %s37 = ssub.s32 %s17, %s31
    %s38 = sor.u32 %s36, %s37
    %p39 = scmp.eq.s32.totalorder %s38, 0
    %s41 = sadd.s32 %s40, 1
    %s42 = scalar_select %p39, %s40, %s41
    %p45 = pneg %p39
    %p46 = scmp.eq.s32.totalorder %s9, 1
    %p47 = por %p45, %p46
    %p48 = scmp.ne.s32.totalorder %s40, %s43
    %p49 = scmp.eq.s32.totalorder %s9, 0
    %p50 = por %p48, %p49
    %p51 = scmp.ne.s32.totalorder %s40, %s43
    %p52 = scmp.eq.s32.totalorder %s14, 1
    %p53 = por %p51, %p52
    %p54 = scmp.ne.s32.totalorder %s43, %s44
    %p55 = scmp.eq.s32.totalorder %s14, 0
    %p56 = por %p54, %p55
    %p57 = scmp.ne.s32.totalorder %s43, %s44
    %p58 = scmp.eq.s32.totalorder %s15, 1
    %p59 = por %p57, %p58
    %p61 = scmp.ne.s32.totalorder %s44, %s60
    %p62 = scmp.eq.s32.totalorder %s15, 0
    %p63 = por %p61, %p62
    %s64 = ssub.s32 %s16, %s35
    %s65 = ssub.s32 %s18, %s27
    %s66 = sor.u32 %s64, %s65
    %p67 = scmp.eq.s32.totalorder %s66, 0
    %s69 = sadd.s32 %s68, 1
    %s70 = scalar_select %p67, %s68, %s69
    %p73 = pneg %p67
    %p74 = scmp.eq.s32.totalorder %s9, 1
    %p75 = por %p73, %p74
    %p76 = scmp.ne.s32.totalorder %s68, %s71
    %p77 = scmp.eq.s32.totalorder %s9, 0
    %p78 = por %p76, %p77
    %p79 = scmp.ne.s32.totalorder %s68, %s71
    %p80 = scmp.eq.s32.totalorder %s14, 1
    %p81 = por %p79, %p80
    %p82 = scmp.ne.s32.totalorder %s71, %s72
    %p83 = scmp.eq.s32.totalorder %s14, 0
    %p84 = por %p82, %p83
    %p85 = scmp.ne.s32.totalorder %s71, %s72
    %p86 = scmp.eq.s32.totalorder %s15, 1
    %p87 = por %p85, %p86
    %p89 = scmp.ne.s32.totalorder %s72, %s88
    %p90 = scmp.eq.s32.totalorder %s15, 0
    %p91 = por %p89, %p90
    %s92 = ssub.s32 %s16, %s35
    %s93 = ssub.s32 %s18, %s27
    %s94 = sor.u32 %s92, %s93
    %p95 = scmp.eq.s32.totalorder %s94, 0
    %s97 = sadd.s32 %s96, 1
    %s98 = scalar_select %p95, %s96, %s97
    %p101 = pneg %p95
    %p102 = scmp.eq.s32.totalorder %s9, 1
    %p103 = por %p101, %p102
    %p104 = scmp.ne.s32.totalorder %s96, %s99
    %p105 = scmp.eq.s32.totalorder %s9, 0
    %p106 = por %p104, %p105
    %p107 = scmp.ne.s32.totalorder %s96, %s99
    %p108 = scmp.eq.s32.totalorder %s14, 1
    %p109 = por %p107, %p108
    %p110 = scmp.ne.s32.totalorder %s99, %s100
    %p111 = scmp.eq.s32.totalorder %s14, 0
    %p112 = por %p110, %p111
    %p113 = scmp.ne.s32.totalorder %s99, %s100
    %p114 = scmp.eq.s32.totalorder %s15, 1
    %p115 = por %p113, %p114
    %p117 = scmp.ne.s32.totalorder %s100, %s116
    %p118 = scmp.eq.s32.totalorder %s15, 0
    %p119 = por %p117, %p118
    %s120 = ssub.s32 %s16, %s35
    %s121 = ssub.s32 %s17, %s31
    %s122 = sor.u32 %s120, %s121
    %p123 = scmp.eq.s32.totalorder %s122, 0
    %s125 = sadd.s32 %s124, 1
    %s126 = scalar_select %p123, %s124, %s125
    %p129 = pneg %p123
    %p130 = scmp.eq.s32.totalorder %s9, 1
    %p131 = por %p129, %p130
    %p132 = scmp.ne.s32.totalorder %s124, %s127
    %p133 = scmp.eq.s32.totalorder %s9, 0
    %p134 = por %p132, %p133
    %p135 = scmp.ne.s32.totalorder %s124, %s127
    %p136 = scmp.eq.s32.totalorder %s14, 1
    %p137 = por %p135, %p136
    %p138 = scmp.ne.s32.totalorder %s127, %s128
    %p139 = scmp.eq.s32.totalorder %s14, 0
    %p140 = por %p138, %p139
    %p141 = scmp.ne.s32.totalorder %s127, %s128
    %p142 = scmp.eq.s32.totalorder %s15, 1
    %p143 = por %p141, %p142
    %p145 = scmp.ne.s32.totalorder %s128, %s144
    %p146 = scmp.eq.s32.totalorder %s15, 0
    %p147 = por %p145, %p146
    %p148 = scmp.le.s32.totalorder 1, %s9
    %p149 = scmp.lt.s32.totalorder %s9, 3
    %p150 = pnand %p148, %p149
    %p151 = pneg %p150
    // Predicated region
    $region9: #{attention_forward.4} parent=5 // pred_check
      _
    $region10: #{attention_forward.4} parent=5 // pred_check_branch
      %153 = sbr.rel (%p150) target = $region12
    $region11: #{attention_forward.4} parent=5 // pred_region
      %s154 = ssub.s32 %s9, 1
    $region12: #{attention_forward.4} parent=5 // pred_fallthru
      _
    %p155 = scmp.lt.s32.totalorder %s9, 2
    // Predicated region
    $region13: #{attention_forward.4} parent=5 // pred_check
      %p156 = pneg %p155
    $region14: #{attention_forward.4} parent=5 // pred_check_branch
      %158 = sbr.rel (%p156) target = $region16
    $region15: #{attention_forward.4} parent=5 // pred_region
      // Predicated region
      $region17: #{attention_forward.4} parent=15 // pred_check
        %p159 = pneg %p50
      $region18: #{attention_forward.4} parent=15 // pred_check_branch
        %161 = sbr.rel (%p159) target = $region20
      $region19: #{attention_forward.4} parent=15 // pred_region
        %s162 = smul.u32 2, %s17
        %p163 = scmp.lt.s32.totalorder %s16, 1
        %s164 = scalar_select %p163, %s16, 1
        %p165 = scmp.lt.s32.totalorder %s162, 1
        %s166 = scalar_select %p165, %s162, 1
        %s167 = smul.addr %s164, 16
        %s168 = sadd.s32 %s166, %s167
        %s169 = smul.addr %s168, 4
        %s170 = scalar_lea.vmem %s0, %s169
        %s171 = smul.u32 2, %s17
      $region20: #{attention_forward.4} parent=15 // pred_fallthru
        _
      // Predicated region
      $region21: #{attention_forward.4} parent=15 // pred_check
        %p172 = pneg %p78
      $region22: #{attention_forward.4} parent=15 // pred_check_branch
        %174 = sbr.rel (%p172) target = $region24
      $region23: #{attention_forward.4} parent=15 // pred_region
        %s175 = smul.u32 2, %s18
        %p176 = scmp.lt.s32.totalorder %s16, 1
        %s177 = scalar_select %p176, %s16, 1
        %p178 = scmp.lt.s32.totalorder %s175, 1
        %s179 = scalar_select %p178, %s175, 1
        %s180 = smul.addr %s177, 16
        %s181 = sadd.s32 %s179, %s180
        %s182 = smul.addr %s181, 4
        %s183 = scalar_lea.vmem %s1, %s182
        %s184 = smul.u32 2, %s18
      $region24: #{attention_forward.4} parent=15 // pred_fallthru
        _
      // Predicated region
      $region25: #{attention_forward.4} parent=15 // pred_check
        %p185 = pneg %p106
      $region26: #{attention_forward.4} parent=15 // pred_check_branch
        %187 = sbr.rel (%p185) target = $region28
      $region27: #{attention_forward.4} parent=15 // pred_region
        %s188 = smul.u32 2, %s18
        %p189 = scmp.lt.s32.totalorder %s16, 1
        %s190 = scalar_select %p189, %s16, 1
        %p191 = scmp.lt.s32.totalorder %s188, 1
        %s192 = scalar_select %p191, %s188, 1
        %s193 = smul.addr %s190, 16
        %s194 = sadd.s32 %s192, %s193
        %s195 = smul.addr %s194, 4
        %s196 = scalar_lea.vmem %s2, %s195
        %s197 = smul.u32 2, %s18
      $region28: #{attention_forward.4} parent=15 // pred_fallthru
        _
    $region16: #{attention_forward.4} parent=5 // pred_fallthru
      _
    %p198 = scmp.le.s32.totalorder 1, %s9
    %p199 = scmp.lt.s32.totalorder %s9, 3
    %p200 = pnand %p198, %p199
    %p201 = pneg %p200
    // Predicated region
    $region29: #{attention_forward.4} parent=5 // pred_check
      _
    $region30: #{attention_forward.4} parent=5 // pred_check_branch
      %203 = sbr.rel (%p200) target = $region32
    $region31: #{attention_forward.4} parent=5 // pred_region
      %s204 = ssub.s32 %s9, 1
      %s205 = smul.u32 2, %s20
      %p206 = scmp.lt.s32.totalorder %s19, 1
      %s207 = scalar_select %p206, %s19, 1
      %p208 = scmp.lt.s32.totalorder %s205, 1
      %s209 = scalar_select %p208, %s205, 1
      %s210 = smul.addr %s207, 16
      %s211 = sadd.s32 %s209, %s210
      %s212 = smul.addr %s211, 4
      %s213 = scalar_lea.vmem %s0, %s212
      %p214 = pneg %p56
      %p215 = pneg %p53
      %s216 = smul.u32 2, %s21
      %p217 = scmp.lt.s32.totalorder %s19, 1
      %s218 = scalar_select %p217, %s19, 1
      %p219 = scmp.lt.s32.totalorder %s216, 1
      %s220 = scalar_select %p219, %s216, 1
      %s221 = smul.addr %s218, 16
      %s222 = sadd.s32 %s220, %s221
      %s223 = smul.addr %s222, 4
      %s224 = scalar_lea.vmem %s1, %s223
      %p225 = pneg %p84
      %p226 = pneg %p81
      %s227 = smul.u32 2, %s21
      %p228 = scmp.lt.s32.totalorder %s19, 1
      %s229 = scalar_select %p228, %s19, 1
      %p230 = scmp.lt.s32.totalorder %s227, 1
      %s231 = scalar_select %p230, %s227, 1
      %s232 = smul.addr %s229, 16
      %s233 = sadd.s32 %s231, %s232
      %s234 = smul.addr %s233, 4
      %s235 = scalar_lea.vmem %s2, %s234
      %p236 = pneg %p112
      %p237 = pneg %p109
      %p238 = pneg %p140
      %p239 = pneg %p137
      %s240 = smul.u32 2, %s20
      %p241 = scmp.lt.s32.totalorder %s19, 1
      %s242 = scalar_select %p241, %s19, 1
      %p243 = scmp.lt.s32.totalorder %s240, 1
      %s244 = scalar_select %p243, %s240, 1
      %s245 = smul.addr %s242, 2
      %s246 = sadd.s32 %s244, %s245
      %s247 = smul.addr %s246, 4
      %s248 = scalar_lea.vmem %s3, %s247
      %s249 = smul.u32 2, %s20
      %p250 = scmp.lt.s32.totalorder %s19, 1
      %s251 = scalar_select %p250, %s19, 1
      %p252 = scmp.lt.s32.totalorder %s249, 1
      %s253 = scalar_select %p252, %s249, 1
      %s254 = smul.addr %s251, 16
      %s255 = sadd.s32 %s253, %s254
      %s256 = smul.addr %s255, 4
      %s257 = scalar_lea.vmem %s0, %s256
      %s258 = smul.u32 2, %s20
      %s259 = smul.u32 2, %s21
      %p260 = scmp.lt.s32.totalorder %s19, 1
      %s261 = scalar_select %p260, %s19, 1
      %p262 = scmp.lt.s32.totalorder %s259, 1
      %s263 = scalar_select %p262, %s259, 1
      %s264 = smul.addr %s261, 16
      %s265 = sadd.s32 %s263, %s264
      %s266 = smul.addr %s265, 4
      %s267 = scalar_lea.vmem %s1, %s266
      %s268 = smul.u32 2, %s21
      %s269 = smul.u32 2, %s21
      %p270 = scmp.lt.s32.totalorder %s19, 1
      %s271 = scalar_select %p270, %s19, 1
      %p272 = scmp.lt.s32.totalorder %s269, 1
      %s273 = scalar_select %p272, %s269, 1
      %s274 = smul.addr %s271, 16
      %s275 = sadd.s32 %s273, %s274
      %s276 = smul.addr %s275, 4
      %s277 = scalar_lea.vmem %s2, %s276
      %s278 = smul.u32 2, %s21
      %s279 = smul.u32 2, %s20
      %p280 = scmp.lt.s32.totalorder %s19, 1
      %s281 = scalar_select %p280, %s19, 1
      %p282 = scmp.lt.s32.totalorder %s279, 1
      %s283 = scalar_select %p282, %s279, 1
      %s284 = smul.addr %s281, 2
      %s285 = sadd.s32 %s283, %s284
      %s286 = smul.addr %s285, 4
      %s287 = scalar_lea.vmem %s3, %s286
      %s288 = smul.u32 2, %s20
      %p290 = scmp.eq.s32.totalorder %s21, 0
      // Predicated region
      $region33: #{attention_forward.4} parent=31 // pred_check
        %p291 = pneg %p290
      $region34: #{attention_forward.4} parent=31 // pred_check_branch
        %293 = sbr.rel (%p291) target = $region36
      $region35: #{attention_forward.4} parent=31 // pred_region
        %vm294 = vcmask 7168
        %295 = vst.msk [vmem:[#allocation2] sm:$0xff] %vm294, -inf
        %296 = vst.msk [vmem:[#allocation2 + $0x8] sm:$0xff] %vm294, -inf
        %297 = vst.msk [vmem:[#allocation2 + $0x10] sm:$0xff] %vm294, -inf
        %298 = vst.msk [vmem:[#allocation2 + $0x18] sm:$0xff] %vm294, -inf
        %299 = vst.msk [vmem:[#allocation2 + $0x20] sm:$0xff] %vm294, -inf
        %300 = vst.msk [vmem:[#allocation2 + $0x28] sm:$0xff] %vm294, -inf
        %301 = vst.msk [vmem:[#allocation2 + $0x30] sm:$0xff] %vm294, -inf
        %302 = vst.msk [vmem:[#allocation2 + $0x38] sm:$0xff] %vm294, -inf
        %303 = vst.msk [vmem:[#allocation2 + $0x40] sm:$0xff] %vm294, -inf
        %304 = vst.msk [vmem:[#allocation2 + $0x48] sm:$0xff] %vm294, -inf
        %305 = vst.msk [vmem:[#allocation2 + $0x50] sm:$0xff] %vm294, -inf
        %306 = vst.msk [vmem:[#allocation2 + $0x58] sm:$0xff] %vm294, -inf
        %307 = vst.msk [vmem:[#allocation2 + $0x60] sm:$0xff] %vm294, -inf
        %308 = vst.msk [vmem:[#allocation2 + $0x68] sm:$0xff] %vm294, -inf
        %309 = vst.msk [vmem:[#allocation2 + $0x70] sm:$0xff] %vm294, -inf
        %310 = vst.msk [vmem:[#allocation2 + $0x78] sm:$0xff] %vm294, -inf
        %311 = vst.msk [vmem:[#allocation3] sm:$0xff] %vm294, 0.0
        %312 = vst.msk [vmem:[#allocation3 + $0x8] sm:$0xff] %vm294, 0.0
        %313 = vst.msk [vmem:[#allocation3 + $0x10] sm:$0xff] %vm294, 0.0
        %314 = vst.msk [vmem:[#allocation3 + $0x18] sm:$0xff] %vm294, 0.0
        %315 = vst.msk [vmem:[#allocation3 + $0x20] sm:$0xff] %vm294, 0.0
        %316 = vst.msk [vmem:[#allocation3 + $0x28] sm:$0xff] %vm294, 0.0
        %317 = vst.msk [vmem:[#allocation3 + $0x30] sm:$0xff] %vm294, 0.0
        %318 = vst.msk [vmem:[#allocation3 + $0x38] sm:$0xff] %vm294, 0.0
        %319 = vst.msk [vmem:[#allocation3 + $0x40] sm:$0xff] %vm294, 0.0
        %320 = vst.msk [vmem:[#allocation3 + $0x48] sm:$0xff] %vm294, 0.0
        %321 = vst.msk [vmem:[#allocation3 + $0x50] sm:$0xff] %vm294, 0.0
        %322 = vst.msk [vmem:[#allocation3 + $0x58] sm:$0xff] %vm294, 0.0
        %323 = vst.msk [vmem:[#allocation3 + $0x60] sm:$0xff] %vm294, 0.0
        %324 = vst.msk [vmem:[#allocation3 + $0x68] sm:$0xff] %vm294, 0.0
        %325 = vst.msk [vmem:[#allocation3 + $0x70] sm:$0xff] %vm294, 0.0
        %326 = vst.msk [vmem:[#allocation3 + $0x78] sm:$0xff] %vm294, 0.0
        %vm327 = vcmask 64512
        %328 = vst.msk [vmem:[#allocation4] sm:$0xff] %vm327, 0.0
        %329 = vst.msk [vmem:[#allocation4 + $0x8] sm:$0xff] %vm327, 0.0
        %330 = vst.msk [vmem:[#allocation4 + $0x10] sm:$0xff] %vm327, 0.0
        %331 = vst.msk [vmem:[#allocation4 + $0x18] sm:$0xff] %vm327, 0.0
        %332 = vst.msk [vmem:[#allocation4 + $0x20] sm:$0xff] %vm327, 0.0
        %333 = vst.msk [vmem:[#allocation4 + $0x28] sm:$0xff] %vm327, 0.0
        %334 = vst.msk [vmem:[#allocation4 + $0x30] sm:$0xff] %vm327, 0.0
        %335 = vst.msk [vmem:[#allocation4 + $0x38] sm:$0xff] %vm327, 0.0
        %336 = vst.msk [vmem:[#allocation4 + $0x40] sm:$0xff] %vm327, 0.0
        %337 = vst.msk [vmem:[#allocation4 + $0x48] sm:$0xff] %vm327, 0.0
        %338 = vst.msk [vmem:[#allocation4 + $0x50] sm:$0xff] %vm327, 0.0
        %339 = vst.msk [vmem:[#allocation4 + $0x58] sm:$0xff] %vm327, 0.0
        %340 = vst.msk [vmem:[#allocation4 + $0x60] sm:$0xff] %vm327, 0.0
        %341 = vst.msk [vmem:[#allocation4 + $0x68] sm:$0xff] %vm327, 0.0
        %342 = vst.msk [vmem:[#allocation4 + $0x70] sm:$0xff] %vm327, 0.0
        %343 = vst.msk [vmem:[#allocation4 + $0x78] sm:$0xff] %vm327, 0.0
      $region36: #{attention_forward.4} parent=31 // pred_fallthru
        _
      %v344 = vld [vmem:[%s257] sm:$0xf]
      %v345 = vld [vmem:[%s257 + $0x4] sm:$0xf]
      %v346 = vld [vmem:[%s257 + $0x8] sm:$0xf]
      %v347 = vld [vmem:[%s257 + $0xc] sm:$0xf]
      %v348 = vld [vmem:[%s257 + $0x10] sm:$0xf]
      %v349 = vld [vmem:[%s257 + $0x14] sm:$0xf]
      %v350 = vld [vmem:[%s257 + $0x18] sm:$0xf]
      %v351 = vld [vmem:[%s257 + $0x1c] sm:$0xf]
      %v352 = vld [vmem:[%s257 + $0x20] sm:$0xf]
      %v353 = vld [vmem:[%s257 + $0x24] sm:$0xf]
      %v354 = vld [vmem:[%s257 + $0x28] sm:$0xf]
      %v355 = vld [vmem:[%s257 + $0x2c] sm:$0xf]
      %v356 = vld [vmem:[%s257 + $0x30] sm:$0xf]
      %v357 = vld [vmem:[%s257 + $0x34] sm:$0xf]
      %v358 = vld [vmem:[%s257 + $0x38] sm:$0xf]
      %v359 = vld [vmem:[%s257 + $0x3c] sm:$0xf]
      %v360 = vld [vmem:[%s267] sm:$0xf]
      %v361 = vld [vmem:[%s267 + $0x4] sm:$0xf]
      %v362 = vld [vmem:[%s267 + $0x8] sm:$0xf]
      %v363 = vld [vmem:[%s267 + $0xc] sm:$0xf]
      %v364 = vld [vmem:[%s267 + $0x10] sm:$0xf]
      %v365 = vld [vmem:[%s267 + $0x14] sm:$0xf]
      %v366 = vld [vmem:[%s267 + $0x18] sm:$0xf]
      %v367 = vld [vmem:[%s267 + $0x1c] sm:$0xf]
      %v368 = vld [vmem:[%s267 + $0x20] sm:$0xf]
      %v369 = vld [vmem:[%s267 + $0x24] sm:$0xf]
      %v370 = vld [vmem:[%s267 + $0x28] sm:$0xf]
      %v371 = vld [vmem:[%s267 + $0x2c] sm:$0xf]
      %v372 = vld [vmem:[%s267 + $0x30] sm:$0xf]
      %v373 = vld [vmem:[%s267 + $0x34] sm:$0xf]
      %v374 = vld [vmem:[%s267 + $0x38] sm:$0xf]
      %v375 = vld [vmem:[%s267 + $0x3c] sm:$0xf]
      %v376 = vld [vmem:[%s277] sm:$0xf]
      %v377 = vld [vmem:[%s277 + $0x4] sm:$0xf]
      %v378 = vld [vmem:[%s277 + $0x8] sm:$0xf]
      %v379 = vld [vmem:[%s277 + $0xc] sm:$0xf]
      %v380 = vld [vmem:[%s277 + $0x10] sm:$0xf]
      %v381 = vld [vmem:[%s277 + $0x14] sm:$0xf]
      %v382 = vld [vmem:[%s277 + $0x18] sm:$0xf]
      %v383 = vld [vmem:[%s277 + $0x1c] sm:$0xf]
      %v384 = vld [vmem:[%s277 + $0x20] sm:$0xf]
      %v385 = vld [vmem:[%s277 + $0x24] sm:$0xf]
      %v386 = vld [vmem:[%s277 + $0x28] sm:$0xf]
      %v387 = vld [vmem:[%s277 + $0x2c] sm:$0xf]
      %v388 = vld [vmem:[%s277 + $0x30] sm:$0xf]
      %v389 = vld [vmem:[%s277 + $0x34] sm:$0xf]
      %v390 = vld [vmem:[%s277 + $0x38] sm:$0xf]
      %v391 = vld [vmem:[%s277 + $0x3c] sm:$0xf]
      %v394 = vunpack.c.l.b16 %v344
      %v395 = vunpack.c.l.b16 %v345
      %v396 = vpack.c.b16 %v395, %v394
      %v399 = vunpack.c.l.b16 %v360
      %v400 = vunpack.c.l.b16 %v361
      %v401 = vpack.c.b16 %v400, %v399
      %vm402 = vcmask 64512
      %v404 = vsel %vm402, %v396, 0
      %v407 = vsel %vm402, %v401, 0
      %409 = vmatprep.subr.bf16.mxu0 0
      %410 = vmatpush1.bf16.xpose.msra.mxu0 %v407
      %411 = vmatprep.subr.bf16.mxu0 0
      %412 = vmatpush1.bf16.xpose.msra.mxu0 0
      %413 = vmatprep.subr.bf16.mxu0 0
      %414 = vmatpush1.bf16.xpose.msra.mxu0 0
      %415 = vmatprep.subr.bf16.mxu0 0
      %416 = vmatpush1.bf16.xpose.msra.mxu0 0
      %417 = vmatprep.subr.bf16.mxu0 0
      %418 = vmatpush1.bf16.xpose.msra.mxu0 0
      %419 = vmatprep.subr.bf16.mxu0 0
      %420 = vmatpush1.bf16.xpose.msra.mxu0 0
      %421 = vmatprep.subr.bf16.mxu0 0
      %422 = vmatpush1.bf16.xpose.msra.mxu0 0
      %423 = vmatprep.subr.bf16.mxu0 0
      %424 = vmatpush1.bf16.xpose.msra.mxu0 0
      %425 = vmatprep.subr.bf16.mxu0 0
      %426 = vmatpush1.bf16.xpose.msra.mxu0 0
      %427 = vmatprep.subr.bf16.mxu0 0
      %428 = vmatpush1.bf16.xpose.msra.mxu0 0
      %429 = vmatprep.subr.bf16.mxu0 0
      %430 = vmatpush1.bf16.xpose.msra.mxu0 0
      %431 = vmatprep.subr.bf16.mxu0 0
      %432 = vmatpush1.bf16.xpose.msra.mxu0 0
      %433 = vmatprep.subr.bf16.mxu0 0
      %434 = vmatpush1.bf16.xpose.msra.mxu0 0
      %435 = vmatprep.subr.bf16.mxu0 0
      %436 = vmatpush1.bf16.xpose.msra.mxu0 0
      %437 = vmatprep.subr.bf16.mxu0 0
      %438 = vmatpush1.bf16.xpose.msra.mxu0 0
      %439 = vmatprep.subr.bf16.mxu0 0
      %440 = vmatpush1.bf16.xpose.msra.mxu0 0
      %441 = vmatprep.mubr.bf16.mxu0 0
      %442 = vmatmul.mubr.bf16.gmra.mrb[0].mxu0 %v404
      %v443 = vpop.f32.mrb[0].mxu0
      %v444 = vadd.f32 0.0, %v443
      %v445 = vpop.f32.mrb[0].mxu0
      %v446 = vpop.f32.mrb[0].mxu0
      %v447 = vadd.f32 0.0, %v446
      %v448 = vpop.f32.mrb[0].mxu0
      %449 = vdwg.mxu0
      %v452 = vunpack.c.l.b16 %v346
      %v453 = vunpack.c.l.b16 %v347
      %v454 = vpack.c.b16 %v453, %v452
      %v457 = vunpack.c.l.b16 %v362
      %v458 = vunpack.c.l.b16 %v363
      %v459 = vpack.c.b16 %v458, %v457
      %v461 = vsel %vm402, %v454, 0
      %v464 = vsel %vm402, %v459, 0
      %466 = vmatprep.subr.bf16.mxu0 0
      %467 = vmatpush1.bf16.xpose.msra.mxu0 %v464
      %468 = vmatprep.subr.bf16.mxu0 0
      %469 = vmatpush1.bf16.xpose.msra.mxu0 0
      %470 = vmatprep.subr.bf16.mxu0 0
      %471 = vmatpush1.bf16.xpose.msra.mxu0 0
      %472 = vmatprep.subr.bf16.mxu0 0
      %473 = vmatpush1.bf16.xpose.msra.mxu0 0
      %474 = vmatprep.subr.bf16.mxu0 0
      %475 = vmatpush1.bf16.xpose.msra.mxu0 0
      %476 = vmatprep.subr.bf16.mxu0 0
      %477 = vmatpush1.bf16.xpose.msra.mxu0 0
      %478 = vmatprep.subr.bf16.mxu0 0
      %479 = vmatpush1.bf16.xpose.msra.mxu0 0
      %480 = vmatprep.subr.bf16.mxu0 0
      %481 = vmatpush1.bf16.xpose.msra.mxu0 0
      %482 = vmatprep.subr.bf16.mxu0 0
      %483 = vmatpush1.bf16.xpose.msra.mxu0 0
      %484 = vmatprep.subr.bf16.mxu0 0
      %485 = vmatpush1.bf16.xpose.msra.mxu0 0
      %486 = vmatprep.subr.bf16.mxu0 0
      %487 = vmatpush1.bf16.xpose.msra.mxu0 0
      %488 = vmatprep.subr.bf16.mxu0 0
      %489 = vmatpush1.bf16.xpose.msra.mxu0 0
      %490 = vmatprep.subr.bf16.mxu0 0
      %491 = vmatpush1.bf16.xpose.msra.mxu0 0
      %492 = vmatprep.subr.bf16.mxu0 0
      %493 = vmatpush1.bf16.xpose.msra.mxu0 0
      %494 = vmatprep.subr.bf16.mxu0 0
      %495 = vmatpush1.bf16.xpose.msra.mxu0 0
      %496 = vmatprep.subr.bf16.mxu0 0
      %497 = vmatpush1.bf16.xpose.msra.mxu0 0
      %498 = vmatprep.mubr.bf16.mxu0 0
      %499 = vmatmul.mubr.bf16.gmra.mrb[0].mxu0 %v461
      %v500 = vpop.f32.mrb[0].mxu0
      %v501 = vadd.f32 0.0, %v500
      %v502 = vpop.f32.mrb[0].mxu0
      %v503 = vpop.f32.mrb[0].mxu0
      %v504 = vadd.f32 0.0, %v503
      %v505 = vpop.f32.mrb[0].mxu0
      %506 = vdwg.mxu0
      %v509 = vunpack.c.l.b16 %v348
      %v510 = vunpack.c.l.b16 %v349
      %v511 = vpack.c.b16 %v510, %v509
      %v514 = vunpack.c.l.b16 %v364
      %v515 = vunpack.c.l.b16 %v365
      %v516 = vpack.c.b16 %v515, %v514
      %v518 = vsel %vm402, %v511, 0
      %v521 = vsel %vm402, %v516, 0
      %523 = vmatprep.subr.bf16.mxu0 0
      %524 = vmatpush1.bf16.xpose.msra.mxu0 %v521
      %525 = vmatprep.subr.bf16.mxu0 0
      %526 = vmatpush1.bf16.xpose.msra.mxu0 0
      %527 = vmatprep.subr.bf16.mxu0 0
      %528 = vmatpush1.bf16.xpose.msra.mxu0 0
      %529 = vmatprep.subr.bf16.mxu0 0
      %530 = vmatpush1.bf16.xpose.msra.mxu0 0
      %531 = vmatprep.subr.bf16.mxu0 0
      %532 = vmatpush1.bf16.xpose.msra.mxu0 0
      %533 = vmatprep.subr.bf16.mxu0 0
      %534 = vmatpush1.bf16.xpose.msra.mxu0 0
      %535 = vmatprep.subr.bf16.mxu0 0
      %536 = vmatpush1.bf16.xpose.msra.mxu0 0
      %537 = vmatprep.subr.bf16.mxu0 0
      %538 = vmatpush1.bf16.xpose.msra.mxu0 0
      %539 = vmatprep.subr.bf16.mxu0 0
      %540 = vmatpush1.bf16.xpose.msra.mxu0 0
      %541 = vmatprep.subr.bf16.mxu0 0
      %542 = vmatpush1.bf16.xpose.msra.mxu0 0
      %543 = vmatprep.subr.bf16.mxu0 0
      %544 = vmatpush1.bf16.xpose.msra.mxu0 0
      %545 = vmatprep.subr.bf16.mxu0 0
      %546 = vmatpush1.bf16.xpose.msra.mxu0 0
      %547 = vmatprep.subr.bf16.mxu0 0
      %548 = vmatpush1.bf16.xpose.msra.mxu0 0
      %549 = vmatprep.subr.bf16.mxu0 0
      %550 = vmatpush1.bf16.xpose.msra.mxu0 0
      %551 = vmatprep.subr.bf16.mxu0 0
      %552 = vmatpush1.bf16.xpose.msra.mxu0 0
      %553 = vmatprep.subr.bf16.mxu0 0
      %554 = vmatpush1.bf16.xpose.msra.mxu0 0
      %555 = vmatprep.mubr.bf16.mxu0 0
      %556 = vmatmul.mubr.bf16.gmra.mrb[0].mxu0 %v518
      %v557 = vpop.f32.mrb[0].mxu0
      %v558 = vadd.f32 0.0, %v557
      %v559 = vpop.f32.mrb[0].mxu0
      %v560 = vpop.f32.mrb[0].mxu0
      %v561 = vadd.f32 0.0, %v560
      %v562 = vpop.f32.mrb[0].mxu0
      %563 = vdwg.mxu0
      %v566 = vunpack.c.l.b16 %v350
      %v567 = vunpack.c.l.b16 %v351
      %v568 = vpack.c.b16 %v567, %v566
      %v571 = vunpack.c.l.b16 %v366
      %v572 = vunpack.c.l.b16 %v367
      %v573 = vpack.c.b16 %v572, %v571
      %v575 = vsel %vm402, %v568, 0
      %v578 = vsel %vm402, %v573, 0
      %580 = vmatprep.subr.bf16.mxu0 0
      %581 = vmatpush1.bf16.xpose.msra.mxu0 %v578
      %582 = vmatprep.subr.bf16.mxu0 0
      %583 = vmatpush1.bf16.xpose.msra.mxu0 0
      %584 = vmatprep.subr.bf16.mxu0 0
      %585 = vmatpush1.bf16.xpose.msra.mxu0 0
      %586 = vmatprep.subr.bf16.mxu0 0
      %587 = vmatpush1.bf16.xpose.msra.mxu0 0
      %588 = vmatprep.subr.bf16.mxu0 0
      %589 = vmatpush1.bf16.xpose.msra.mxu0 0
      %590 = vmatprep.subr.bf16.mxu0 0
      %591 = vmatpush1.bf16.xpose.msra.mxu0 0
      %592 = vmatprep.subr.bf16.mxu0 0
      %593 = vmatpush1.bf16.xpose.msra.mxu0 0
      %594 = vmatprep.subr.bf16.mxu0 0
      %595 = vmatpush1.bf16.xpose.msra.mxu0 0
      %596 = vmatprep.subr.bf16.mxu0 0
      %597 = vmatpush1.bf16.xpose.msra.mxu0 0
      %598 = vmatprep.subr.bf16.mxu0 0
      %599 = vmatpush1.bf16.xpose.msra.mxu0 0
      %600 = vmatprep.subr.bf16.mxu0 0
      %601 = vmatpush1.bf16.xpose.msra.mxu0 0
      %602 = vmatprep.subr.bf16.mxu0 0
      %603 = vmatpush1.bf16.xpose.msra.mxu0 0
      %604 = vmatprep.subr.bf16.mxu0 0
      %605 = vmatpush1.bf16.xpose.msra.mxu0 0
      %606 = vmatprep.subr.bf16.mxu0 0
      %607 = vmatpush1.bf16.xpose.msra.mxu0 0
      %608 = vmatprep.subr.bf16.mxu0 0
      %609 = vmatpush1.bf16.xpose.msra.mxu0 0
      %610 = vmatprep.subr.bf16.mxu0 0
      %611 = vmatpush1.bf16.xpose.msra.mxu0 0
      %612 = vmatprep.mubr.bf16.mxu0 0
      %613 = vmatmul.mubr.bf16.gmra.mrb[0].mxu0 %v575
      %v614 = vpop.f32.mrb[0].mxu0
      %v615 = vadd.f32 0.0, %v614
      %v616 = vpop.f32.mrb[0].mxu0
      %v617 = vpop.f32.mrb[0].mxu0
      %v618 = vadd.f32 0.0, %v617
      %v619 = vpop.f32.mrb[0].mxu0
      %620 = vdwg.mxu0
      %v623 = vunpack.c.l.b16 %v352
      %v624 = vunpack.c.l.b16 %v353
      %v625 = vpack.c.b16 %v624, %v623
      %v628 = vunpack.c.l.b16 %v368
      %v629 = vunpack.c.l.b16 %v369
      %v630 = vpack.c.b16 %v629, %v628
      %v632 = vsel %vm402, %v625, 0
      %v635 = vsel %vm402, %v630, 0
      %637 = vmatprep.subr.bf16.mxu0 0
      %638 = vmatpush1.bf16.xpose.msra.mxu0 %v635
      %639 = vmatprep.subr.bf16.mxu0 0
      %640 = vmatpush1.bf16.xpose.msra.mxu0 0
      %641 = vmatprep.subr.bf16.mxu0 0
      %642 = vmatpush1.bf16.xpose.msra.mxu0 0
      %643 = vmatprep.subr.bf16.mxu0 0
      %644 = vmatpush1.bf16.xpose.msra.mxu0 0
      %645 = vmatprep.subr.bf16.mxu0 0
      %646 = vmatpush1.bf16.xpose.msra.mxu0 0
      %647 = vmatprep.subr.bf16.mxu0 0
      %648 = vmatpush1.bf16.xpose.msra.mxu0 0
      %649 = vmatprep.subr.bf16.mxu0 0
      %650 = vmatpush1.bf16.xpose.msra.mxu0 0
      %651 = vmatprep.subr.bf16.mxu0 0
      %652 = vmatpush1.bf16.xpose.msra.mxu0 0
      %653 = vmatprep.subr.bf16.mxu0 0
      %654 = vmatpush1.bf16.xpose.msra.mxu0 0
      %655 = vmatprep.subr.bf16.mxu0 0
      %656 = vmatpush1.bf16.xpose.msra.mxu0 0
      %657 = vmatprep.subr.bf16.mxu0 0
      %658 = vmatpush1.bf16.xpose.msra.mxu0 0
      %659 = vmatprep.subr.bf16.mxu0 0
      %660 = vmatpush1.bf16.xpose.msra.mxu0 0
      %661 = vmatprep.subr.bf16.mxu0 0
      %662 = vmatpush1.bf16.xpose.msra.mxu0 0
      %663 = vmatprep.subr.bf16.mxu0 0
      %664 = vmatpush1.bf16.xpose.msra.mxu0 0
      %665 = vmatprep.subr.bf16.mxu0 0
      %666 = vmatpush1.bf16.xpose.msra.mxu0 0
      %667 = vmatprep.subr.bf16.mxu0 0
      %668 = vmatpush1.bf16.xpose.msra.mxu0 0
      %669 = vmatprep.mubr.bf16.mxu0 0
      %670 = vmatmul.mubr.bf16.gmra.mrb[0].mxu0 %v632
      %v671 = vpop.f32.mrb[0].mxu0
      %v672 = vadd.f32 0.0, %v671
      %v673 = vpop.f32.mrb[0].mxu0
      %v674 = vpop.f32.mrb[0].mxu0
      %v675 = vadd.f32 0.0, %v674
      %v676 = vpop.f32.mrb[0].mxu0
      %677 = vdwg.mxu0
      %v680 = vunpack.c.l.b16 %v354
      %v681 = vunpack.c.l.b16 %v355
      %v682 = vpack.c.b16 %v681, %v680
      %v685 = vunpack.c.l.b16 %v370
      %v686 = vunpack.c.l.b16 %v371
      %v687 = vpack.c.b16 %v686, %v685
      %v689 = vsel %vm402, %v682, 0
      %v692 = vsel %vm402, %v687, 0
      %694 = vmatprep.subr.bf16.mxu0 0
      %695 = vmatpush1.bf16.xpose.msra.mxu0 %v692
      %696 = vmatprep.subr.bf16.mxu0 0
      %697 = vmatpush1.bf16.xpose.msra.mxu0 0
      %698 = vmatprep.subr.bf16.mxu0 0
      %699 = vmatpush1.bf16.xpose.msra.mxu0 0
      %700 = vmatprep.subr.bf16.mxu0 0
      %701 = vmatpush1.bf16.xpose.msra.mxu0 0
      %702 = vmatprep.subr.bf16.mxu0 0
      %703 = vmatpush1.bf16.xpose.msra.mxu0 0
      %704 = vmatprep.subr.bf16.mxu0 0
      %705 = vmatpush1.bf16.xpose.msra.mxu0 0
      %706 = vmatprep.subr.bf16.mxu0 0
      %707 = vmatpush1.bf16.xpose.msra.mxu0 0
      %708 = vmatprep.subr.bf16.mxu0 0
      %709 = vmatpush1.bf16.xpose.msra.mxu0 0
      %710 = vmatprep.subr.bf16.mxu0 0
      %711 = vmatpush1.bf16.xpose.msra.mxu0 0
      %712 = vmatprep.subr.bf16.mxu0 0
      %713 = vmatpush1.bf16.xpose.msra.mxu0 0
      %714 = vmatprep.subr.bf16.mxu0 0
      %715 = vmatpush1.bf16.xpose.msra.mxu0 0
      %716 = vmatprep.subr.bf16.mxu0 0
      %717 = vmatpush1.bf16.xpose.msra.mxu0 0
      %718 = vmatprep.subr.bf16.mxu0 0
      %719 = vmatpush1.bf16.xpose.msra.mxu0 0
      %720 = vmatprep.subr.bf16.mxu0 0
      %721 = vmatpush1.bf16.xpose.msra.mxu0 0
      %722 = vmatprep.subr.bf16.mxu0 0
      %723 = vmatpush1.bf16.xpose.msra.mxu0 0
      %724 = vmatprep.subr.bf16.mxu0 0
      %725 = vmatpush1.bf16.xpose.msra.mxu0 0
      %726 = vmatprep.mubr.bf16.mxu0 0
      %727 = vmatmul.mubr.bf16.gmra.mrb[0].mxu0 %v689
      %v728 = vpop.f32.mrb[0].mxu0
      %v729 = vadd.f32 0.0, %v728
      %v730 = vpop.f32.mrb[0].mxu0
      %v731 = vpop.f32.mrb[0].mxu0
      %v732 = vadd.f32 0.0, %v731
      %v733 = vpop.f32.mrb[0].mxu0
      %734 = vdwg.mxu0
      %v737 = vunpack.c.l.b16 %v356
      %v738 = vunpack.c.l.b16 %v357
      %v739 = vpack.c.b16 %v738, %v737
      %v742 = vunpack.c.l.b16 %v372
      %v743 = vunpack.c.l.b16 %v373
      %v744 = vpack.c.b16 %v743, %v742
      %v746 = vsel %vm402, %v739, 0
      %v749 = vsel %vm402, %v744, 0
      %751 = vmatprep.subr.bf16.mxu0 0
      %752 = vmatpush1.bf16.xpose.msra.mxu0 %v749
      %753 = vmatprep.subr.bf16.mxu0 0
      %754 = vmatpush1.bf16.xpose.msra.mxu0 0
      %755 = vmatprep.subr.bf16.mxu0 0
      %756 = vmatpush1.bf16.xpose.msra.mxu0 0
      %757 = vmatprep.subr.bf16.mxu0 0
      %758 = vmatpush1.bf16.xpose.msra.mxu0 0
      %759 = vmatprep.subr.bf16.mxu0 0
      %760 = vmatpush1.bf16.xpose.msra.mxu0 0
      %761 = vmatprep.subr.bf16.mxu0 0
      %762 = vmatpush1.bf16.xpose.msra.mxu0 0
      %763 = vmatprep.subr.bf16.mxu0 0
      %764 = vmatpush1.bf16.xpose.msra.mxu0 0
      %765 = vmatprep.subr.bf16.mxu0 0
      %766 = vmatpush1.bf16.xpose.msra.mxu0 0
      %767 = vmatprep.subr.bf16.mxu0 0
      %768 = vmatpush1.bf16.xpose.msra.mxu0 0
      %769 = vmatprep.subr.bf16.mxu0 0
      %770 = vmatpush1.bf16.xpose.msra.mxu0 0
      %771 = vmatprep.subr.bf16.mxu0 0
      %772 = vmatpush1.bf16.xpose.msra.mxu0 0
      %773 = vmatprep.subr.bf16.mxu0 0
      %774 = vmatpush1.bf16.xpose.msra.mxu0 0
      %775 = vmatprep.subr.bf16.mxu0 0
      %776 = vmatpush1.bf16.xpose.msra.mxu0 0
      %777 = vmatprep.subr.bf16.mxu0 0
      %778 = vmatpush1.bf16.xpose.msra.mxu0 0
      %779 = vmatprep.subr.bf16.mxu0 0
      %780 = vmatpush1.bf16.xpose.msra.mxu0 0
      %781 = vmatprep.subr.bf16.mxu0 0
      %782 = vmatpush1.bf16.xpose.msra.mxu0 0
      %783 = vmatprep.mubr.bf16.mxu0 0
      %784 = vmatmul.mubr.bf16.gmra.mrb[0].mxu0 %v746
      %v785 = vpop.f32.mrb[0].mxu0
      %v786 = vadd.f32 0.0, %v785
      %v787 = vpop.f32.mrb[0].mxu0
      %v788 = vpop.f32.mrb[0].mxu0
      %v789 = vadd.f32 0.0, %v788
      %v790 = vpop.f32.mrb[0].mxu0
      %791 = vdwg.mxu0
      %v794 = vunpack.c.l.b16 %v358
      %v795 = vunpack.c.l.b16 %v359
      %v796 = vpack.c.b16 %v795, %v794
      %v799 = vunpack.c.l.b16 %v374
      %v800 = vunpack.c.l.b16 %v375
      %v801 = vpack.c.b16 %v800, %v799
      %v803 = vsel %vm402, %v796, 0
      %v806 = vsel %vm402, %v801, 0
      %808 = vmatprep.subr.bf16.mxu0 0
      %809 = vmatpush1.bf16.xpose.msra.mxu0 %v806
      %810 = vmatprep.subr.bf16.mxu0 0
      %811 = vmatpush1.bf16.xpose.msra.mxu0 0
      %812 = vmatprep.subr.bf16.mxu0 0
      %813 = vmatpush1.bf16.xpose.msra.mxu0 0
      %814 = vmatprep.subr.bf16.mxu0 0
      %815 = vmatpush1.bf16.xpose.msra.mxu0 0
      %816 = vmatprep.subr.bf16.mxu0 0
      %817 = vmatpush1.bf16.xpose.msra.mxu0 0
      %818 = vmatprep.subr.bf16.mxu0 0
      %819 = vmatpush1.bf16.xpose.msra.mxu0 0
      %820 = vmatprep.subr.bf16.mxu0 0
      %821 = vmatpush1.bf16.xpose.msra.mxu0 0
      %822 = vmatprep.subr.bf16.mxu0 0
      %823 = vmatpush1.bf16.xpose.msra.mxu0 0
      %824 = vmatprep.subr.bf16.mxu0 0
      %825 = vmatpush1.bf16.xpose.msra.mxu0 0
      %826 = vmatprep.subr.bf16.mxu0 0
      %827 = vmatpush1.bf16.xpose.msra.mxu0 0
      %828 = vmatprep.subr.bf16.mxu0 0
      %829 = vmatpush1.bf16.xpose.msra.mxu0 0
      %830 = vmatprep.subr.bf16.mxu0 0
      %831 = vmatpush1.bf16.xpose.msra.mxu0 0
      %832 = vmatprep.subr.bf16.mxu0 0
      %833 = vmatpush1.bf16.xpose.msra.mxu0 0
      %834 = vmatprep.subr.bf16.mxu0 0
      %835 = vmatpush1.bf16.xpose.msra.mxu0 0
      %836 = vmatprep.subr.bf16.mxu0 0
      %837 = vmatpush1.bf16.xpose.msra.mxu0 0
      %838 = vmatprep.subr.bf16.mxu0 0
      %839 = vmatpush1.bf16.xpose.msra.mxu0 0
      %840 = vmatprep.mubr.bf16.mxu0 0
      %841 = vmatmul.mubr.bf16.gmra.mrb[0].mxu0 %v803
      %v842 = vpop.f32.mrb[0].mxu0
      %v843 = vadd.f32 0.0, %v842
      %v844 = vpop.f32.mrb[0].mxu0
      %v845 = vpop.f32.mrb[0].mxu0
      %v846 = vadd.f32 0.0, %v845
      %v847 = vpop.f32.mrb[0].mxu0
      %848 = vdwg.mxu0
      %v849 = vld [vmem:[#allocation2] sm:$0xff]
      %v850 = vld [vmem:[#allocation2 + $0x8] sm:$0xff]
      %v851 = vld [vmem:[#allocation2 + $0x10] sm:$0xff]
      %v852 = vld [vmem:[#allocation2 + $0x18] sm:$0xff]
      %v853 = vld [vmem:[#allocation2 + $0x20] sm:$0xff]
      %v854 = vld [vmem:[#allocation2 + $0x28] sm:$0xff]
      %v855 = vld [vmem:[#allocation2 + $0x30] sm:$0xff]
      %v856 = vld [vmem:[#allocation2 + $0x38] sm:$0xff]
      %v857 = vld [vmem:[#allocation2 + $0x40] sm:$0xff]
      %v858 = vld [vmem:[#allocation2 + $0x48] sm:$0xff]
      %v859 = vld [vmem:[#allocation2 + $0x50] sm:$0xff]
      %v860 = vld [vmem:[#allocation2 + $0x58] sm:$0xff]
      %v861 = vld [vmem:[#allocation2 + $0x60] sm:$0xff]
      %v862 = vld [vmem:[#allocation2 + $0x68] sm:$0xff]
      %v863 = vld [vmem:[#allocation2 + $0x70] sm:$0xff]
      %v864 = vld [vmem:[#allocation2 + $0x78] sm:$0xff]
      %vm865 = vcmask 130048
      %v866 = vsel %vm865, %v444, -inf
      %867 = vmax.xlane.f32.xlu0 %v866
      %v868 = vpop.xlane.xlu0 %867
      %v869 = vsel %vm865, %v447, -inf
      %870 = vmax.xlane.f32.xlu0 %v869
      %v871 = vpop.xlane.xlu0 %870
      %v872 = vsel %vm865, %v501, -inf
      %873 = vmax.xlane.f32.xlu0 %v872
      %v874 = vpop.xlane.xlu0 %873
      %v875 = vsel %vm865, %v504, -inf
      %876 = vmax.xlane.f32.xlu0 %v875
      %v877 = vpop.xlane.xlu0 %876
      %v878 = vsel %vm865, %v558, -inf
      %879 = vmax.xlane.f32.xlu0 %v878
      %v880 = vpop.xlane.xlu0 %879
      %v881 = vsel %vm865, %v561, -inf
      %882 = vmax.xlane.f32.xlu0 %v881
      %v883 = vpop.xlane.xlu0 %882
      %v884 = vsel %vm865, %v615, -inf
      %885 = vmax.xlane.f32.xlu0 %v884
      %v886 = vpop.xlane.xlu0 %885
      %v887 = vsel %vm865, %v618, -inf
      %888 = vmax.xlane.f32.xlu0 %v887
      %v889 = vpop.xlane.xlu0 %888
      %v890 = vsel %vm865, %v672, -inf
      %891 = vmax.xlane.f32.xlu0 %v890
      %v892 = vpop.xlane.xlu0 %891
      %v893 = vsel %vm865, %v675, -inf
      %894 = vmax.xlane.f32.xlu0 %v893
      %v895 = vpop.xlane.xlu0 %894
      %v896 = vsel %vm865, %v729, -inf
      %897 = vmax.xlane.f32.xlu0 %v896
      %v898 = vpop.xlane.xlu0 %897
      %v899 = vsel %vm865, %v732, -inf
      %900 = vmax.xlane.f32.xlu0 %v899
      %v901 = vpop.xlane.xlu0 %900
      %v902 = vsel %vm865, %v786, -inf
      %903 = vmax.xlane.f32.xlu0 %v902
      %v904 = vpop.xlane.xlu0 %903
      %v905 = vsel %vm865, %v789, -inf
      %906 = vmax.xlane.f32.xlu0 %v905
      %v907 = vpop.xlane.xlu0 %906
      %v908 = vsel %vm865, %v843, -inf
      %909 = vmax.xlane.f32.xlu0 %v908
      %v910 = vpop.xlane.xlu0 %909
      %v911 = vsel %vm865, %v846, -inf
      %912 = vmax.xlane.f32.xlu0 %v911
      %v913 = vpop.xlane.xlu0 %912
      %v914 = vmax.f32 %v849, %v868
      %v915 = vmax.f32 %v850, %v871
      %v916 = vmax.f32 %v851, %v874
      %v917 = vmax.f32 %v852, %v877
      %v918 = vmax.f32 %v853, %v880
      %v919 = vmax.f32 %v854, %v883
      %v920 = vmax.f32 %v855, %v886
      %v921 = vmax.f32 %v856, %v889
      %v922 = vmax.f32 %v857, %v892
      %v923 = vmax.f32 %v858, %v895
      %v924 = vmax.f32 %v859, %v898
      %v925 = vmax.f32 %v860, %v901
      %v926 = vmax.f32 %v861, %v904
      %v927 = vmax.f32 %v862, %v907
      %v928 = vmax.f32 %v863, %v910
      %v929 = vmax.f32 %v864, %v913
      %v930 = vsub.f32 %v849, %v914
      %v931 = vsub.f32 %v850, %v915
      %v932 = vsub.f32 %v851, %v916
      %v933 = vsub.f32 %v852, %v917
      %v934 = vsub.f32 %v853, %v918
      %v935 = vsub.f32 %v854, %v919
      %v936 = vsub.f32 %v855, %v920
      %v937 = vsub.f32 %v856, %v921
      %v938 = vsub.f32 %v857, %v922
      %v939 = vsub.f32 %v858, %v923
      %v940 = vsub.f32 %v859, %v924
      %v941 = vsub.f32 %v860, %v925
      %v942 = vsub.f32 %v861, %v926
      %v943 = vsub.f32 %v862, %v927
      %v944 = vsub.f32 %v863, %v928
      %v945 = vsub.f32 %v864, %v929
      %v946 = vmul.f32 %v930, 1.442695
      %v947 = vpow.pop %v946
      %v948 = vmul.f32 %v931, 1.442695
      %v949 = vpow.pop %v948
      %v950 = vmul.f32 %v932, 1.442695
      %v951 = vpow.pop %v950
      %v952 = vmul.f32 %v933, 1.442695
      %v953 = vpow.pop %v952
      %v954 = vmul.f32 %v934, 1.442695
      %v955 = vpow.pop %v954
      %v956 = vmul.f32 %v935, 1.442695
      %v957 = vpow.pop %v956
      %v958 = vmul.f32 %v936, 1.442695
      %v959 = vpow.pop %v958
      %v960 = vmul.f32 %v937, 1.442695
      %v961 = vpow.pop %v960
      %v962 = vmul.f32 %v938, 1.442695
      %v963 = vpow.pop %v962
      %v964 = vmul.f32 %v939, 1.442695
      %v965 = vpow.pop %v964
      %v966 = vmul.f32 %v940, 1.442695
      %v967 = vpow.pop %v966
      %v968 = vmul.f32 %v941, 1.442695
      %v969 = vpow.pop %v968
      %v970 = vmul.f32 %v942, 1.442695
      %v971 = vpow.pop %v970
      %v972 = vmul.f32 %v943, 1.442695
      %v973 = vpow.pop %v972
      %v974 = vmul.f32 %v944, 1.442695
      %v975 = vpow.pop %v974
      %v976 = vmul.f32 %v945, 1.442695
      %v977 = vpow.pop %v976
      %979 = vset.pattern.permute.xlu0 0
      %980 = vperm.xlu0 %979, %v914
      %v981 = vpop.permute.xlu0 %980
      %984 = vset.pattern.permute.xlu0 0
      %985 = vperm.xlu0 %984, %v915
      %v986 = vpop.permute.xlu0 %985
      %989 = vset.pattern.permute.xlu0 0
      %990 = vperm.xlu0 %989, %v916
      %v991 = vpop.permute.xlu0 %990
      %994 = vset.pattern.permute.xlu0 0
      %995 = vperm.xlu0 %994, %v917
      %v996 = vpop.permute.xlu0 %995
      %999 = vset.pattern.permute.xlu0 0
      %1000 = vperm.xlu0 %999, %v918
      %v1001 = vpop.permute.xlu0 %1000
      %1004 = vset.pattern.permute.xlu0 0
      %1005 = vperm.xlu0 %1004, %v919
      %v1006 = vpop.permute.xlu0 %1005
      %1009 = vset.pattern.permute.xlu0 0
      %1010 = vperm.xlu0 %1009, %v920
      %v1011 = vpop.permute.xlu0 %1010
      %1014 = vset.pattern.permute.xlu0 0
      %1015 = vperm.xlu0 %1014, %v921
      %v1016 = vpop.permute.xlu0 %1015
      %1019 = vset.pattern.permute.xlu0 0
      %1020 = vperm.xlu0 %1019, %v922
      %v1021 = vpop.permute.xlu0 %1020
      %1024 = vset.pattern.permute.xlu0 0
      %1025 = vperm.xlu0 %1024, %v923
      %v1026 = vpop.permute.xlu0 %1025
      %1029 = vset.pattern.permute.xlu0 0
      %1030 = vperm.xlu0 %1029, %v924
      %v1031 = vpop.permute.xlu0 %1030
      %1034 = vset.pattern.permute.xlu0 0
      %1035 = vperm.xlu0 %1034, %v925
      %v1036 = vpop.permute.xlu0 %1035
      %1039 = vset.pattern.permute.xlu0 0
      %1040 = vperm.xlu0 %1039, %v926
      %v1041 = vpop.permute.xlu0 %1040
      %1044 = vset.pattern.permute.xlu0 0
      %1045 = vperm.xlu0 %1044, %v927
      %v1046 = vpop.permute.xlu0 %1045
      %1049 = vset.pattern.permute.xlu0 0
      %1050 = vperm.xlu0 %1049, %v928
      %v1051 = vpop.permute.xlu0 %1050
      %1054 = vset.pattern.permute.xlu0 0
      %1055 = vperm.xlu0 %1054, %v929
      %v1056 = vpop.permute.xlu0 %1055
      %v1058 = vsub.f32 %v444, %v981
      %v1059 = vsub.f32 %v447, %v986
      %v1060 = vsub.f32 %v501, %v991
      %v1061 = vsub.f32 %v504, %v996
      %v1062 = vsub.f32 %v558, %v1001
      %v1063 = vsub.f32 %v561, %v1006
      %v1064 = vsub.f32 %v615, %v1011
      %v1065 = vsub.f32 %v618, %v1016
      %v1066 = vsub.f32 %v672, %v1021
      %v1067 = vsub.f32 %v675, %v1026
      %v1068 = vsub.f32 %v729, %v1031
      %v1069 = vsub.f32 %v732, %v1036
      %v1070 = vsub.f32 %v786, %v1041
      %v1071 = vsub.f32 %v789, %v1046
      %v1072 = vsub.f32 %v843, %v1051
      %v1073 = vsub.f32 %v846, %v1056
      %v1074 = vmul.f32 %v1058, 1.442695
      %v1075 = vpow.pop %v1074
      %v1076 = vmul.f32 %v1059, 1.442695
      %v1077 = vpow.pop %v1076
      %v1078 = vmul.f32 %v1060, 1.442695
      %v1079 = vpow.pop %v1078
      %v1080 = vmul.f32 %v1061, 1.442695
      %v1081 = vpow.pop %v1080
      %v1082 = vmul.f32 %v1062, 1.442695
      %v1083 = vpow.pop %v1082
      %v1084 = vmul.f32 %v1063, 1.442695
      %v1085 = vpow.pop %v1084
      %v1086 = vmul.f32 %v1064, 1.442695
      %v1087 = vpow.pop %v1086
      %v1088 = vmul.f32 %v1065, 1.442695
      %v1089 = vpow.pop %v1088
      %v1090 = vmul.f32 %v1066, 1.442695
      %v1091 = vpow.pop %v1090
      %v1092 = vmul.f32 %v1067, 1.442695
      %v1093 = vpow.pop %v1092
      %v1094 = vmul.f32 %v1068, 1.442695
      %v1095 = vpow.pop %v1094
      %v1096 = vmul.f32 %v1069, 1.442695
      %v1097 = vpow.pop %v1096
      %v1098 = vmul.f32 %v1070, 1.442695
      %v1099 = vpow.pop %v1098
      %v1100 = vmul.f32 %v1071, 1.442695
      %v1101 = vpow.pop %v1100
      %v1102 = vmul.f32 %v1072, 1.442695
      %v1103 = vpow.pop %v1102
      %v1104 = vmul.f32 %v1073, 1.442695
      %v1105 = vpow.pop %v1104
      %v1106 = vld [vmem:[#allocation3] sm:$0xff]
      %v1107 = vld [vmem:[#allocation3 + $0x8] sm:$0xff]
      %v1108 = vld [vmem:[#allocation3 + $0x10] sm:$0xff]
      %v1109 = vld [vmem:[#allocation3 + $0x18] sm:$0xff]
      %v1110 = vld [vmem:[#allocation3 + $0x20] sm:$0xff]
      %v1111 = vld [vmem:[#allocation3 + $0x28] sm:$0xff]
      %v1112 = vld [vmem:[#allocation3 + $0x30] sm:$0xff]
      %v1113 = vld [vmem:[#allocation3 + $0x38] sm:$0xff]
      %v1114 = vld [vmem:[#allocation3 + $0x40] sm:$0xff]
      %v1115 = vld [vmem:[#allocation3 + $0x48] sm:$0xff]
      %v1116 = vld [vmem:[#allocation3 + $0x50] sm:$0xff]
      %v1117 = vld [vmem:[#allocation3 + $0x58] sm:$0xff]
      %v1118 = vld [vmem:[#allocation3 + $0x60] sm:$0xff]
      %v1119 = vld [vmem:[#allocation3 + $0x68] sm:$0xff]
      %v1120 = vld [vmem:[#allocation3 + $0x70] sm:$0xff]
      %v1121 = vld [vmem:[#allocation3 + $0x78] sm:$0xff]
      %v1122 = vmul.f32 %v947, %v1106
      %v1123 = vmul.f32 %v949, %v1107
      %v1124 = vmul.f32 %v951, %v1108
      %v1125 = vmul.f32 %v953, %v1109
      %v1126 = vmul.f32 %v955, %v1110
      %v1127 = vmul.f32 %v957, %v1111
      %v1128 = vmul.f32 %v959, %v1112
      %v1129 = vmul.f32 %v961, %v1113
      %v1130 = vmul.f32 %v963, %v1114
      %v1131 = vmul.f32 %v965, %v1115
      %v1132 = vmul.f32 %v967, %v1116
      %v1133 = vmul.f32 %v969, %v1117
      %v1134 = vmul.f32 %v971, %v1118
      %v1135 = vmul.f32 %v973, %v1119
      %v1136 = vmul.f32 %v975, %v1120
      %v1137 = vmul.f32 %v977, %v1121
      %v1138 = vsel %vm865, %v1075, 0.0
      %1139 = vadd.xlane.f32.xlu0 %v1138
      %v1140 = vpop.xlane.xlu0 %1139
      %v1141 = vsel %vm865, %v1077, 0.0
      %1142 = vadd.xlane.f32.xlu0 %v1141
      %v1143 = vpop.xlane.xlu0 %1142
      %v1144 = vsel %vm865, %v1079, 0.0
      %1145 = vadd.xlane.f32.xlu0 %v1144
      %v1146 = vpop.xlane.xlu0 %1145
      %v1147 = vsel %vm865, %v1081, 0.0
      %1148 = vadd.xlane.f32.xlu0 %v1147
      %v1149 = vpop.xlane.xlu0 %1148
      %v1150 = vsel %vm865, %v1083, 0.0
      %1151 = vadd.xlane.f32.xlu0 %v1150
      %v1152 = vpop.xlane.xlu0 %1151
      %v1153 = vsel %vm865, %v1085, 0.0
      %1154 = vadd.xlane.f32.xlu0 %v1153
      %v1155 = vpop.xlane.xlu0 %1154
      %v1156 = vsel %vm865, %v1087, 0.0
      %1157 = vadd.xlane.f32.xlu0 %v1156
      %v1158 = vpop.xlane.xlu0 %1157
      %v1159 = vsel %vm865, %v1089, 0.0
      %1160 = vadd.xlane.f32.xlu0 %v1159
      %v1161 = vpop.xlane.xlu0 %1160
      %v1162 = vsel %vm865, %v1091, 0.0
      %1163 = vadd.xlane.f32.xlu0 %v1162
      %v1164 = vpop.xlane.xlu0 %1163
      %v1165 = vsel %vm865, %v1093, 0.0
      %1166 = vadd.xlane.f32.xlu0 %v1165
      %v1167 = vpop.xlane.xlu0 %1166
      %v1168 = vsel %vm865, %v1095, 0.0
      %1169 = vadd.xlane.f32.xlu0 %v1168
      %v1170 = vpop.xlane.xlu0 %1169
      %v1171 = vsel %vm865, %v1097, 0.0
      %1172 = vadd.xlane.f32.xlu0 %v1171
      %v1173 = vpop.xlane.xlu0 %1172
      %v1174 = vsel %vm865, %v1099, 0.0
      %1175 = vadd.xlane.f32.xlu0 %v1174
      %v1176 = vpop.xlane.xlu0 %1175
      %v1177 = vsel %vm865, %v1101, 0.0
      %1178 = vadd.xlane.f32.xlu0 %v1177
      %v1179 = vpop.xlane.xlu0 %1178
      %v1180 = vsel %vm865, %v1103, 0.0
      %1181 = vadd.xlane.f32.xlu0 %v1180
      %v1182 = vpop.xlane.xlu0 %1181
      %v1183 = vsel %vm865, %v1105, 0.0
      %1184 = vadd.xlane.f32.xlu0 %v1183
      %v1185 = vpop.xlane.xlu0 %1184
      %v1186 = vadd.f32 %v1122, %v1140
      %v1187 = vadd.f32 %v1123, %v1143
      %v1188 = vadd.f32 %v1124, %v1146
      %v1189 = vadd.f32 %v1125, %v1149
      %v1190 = vadd.f32 %v1126, %v1152
      %v1191 = vadd.f32 %v1127, %v1155
      %v1192 = vadd.f32 %v1128, %v1158
      %v1193 = vadd.f32 %v1129, %v1161
      %v1194 = vadd.f32 %v1130, %v1164
      %v1195 = vadd.f32 %v1131, %v1167
      %v1196 = vadd.f32 %v1132, %v1170
      %v1197 = vadd.f32 %v1133, %v1173
      %v1198 = vadd.f32 %v1134, %v1176
      %v1199 = vadd.f32 %v1135, %v1179
      %v1200 = vadd.f32 %v1136, %v1182
      %v1201 = vadd.f32 %v1137, %v1185
      %vm1202 = vcmask 7168
      %1203 = vst.msk [vmem:[#allocation3] sm:$0xff] %vm1202, %v1186
      %1204 = vst.msk [vmem:[#allocation3 + $0x8] sm:$0xff] %vm1202, %v1187
      %1205 = vst.msk [vmem:[#allocation3 + $0x10] sm:$0xff] %vm1202, %v1188
      %1206 = vst.msk [vmem:[#allocation3 + $0x18] sm:$0xff] %vm1202, %v1189
      %1207 = vst.msk [vmem:[#allocation3 + $0x20] sm:$0xff] %vm1202, %v1190
      %1208 = vst.msk [vmem:[#allocation3 + $0x28] sm:$0xff] %vm1202, %v1191
      %1209 = vst.msk [vmem:[#allocation3 + $0x30] sm:$0xff] %vm1202, %v1192
      %1210 = vst.msk [vmem:[#allocation3 + $0x38] sm:$0xff] %vm1202, %v1193
      %1211 = vst.msk [vmem:[#allocation3 + $0x40] sm:$0xff] %vm1202, %v1194
      %1212 = vst.msk [vmem:[#allocation3 + $0x48] sm:$0xff] %vm1202, %v1195
      %1213 = vst.msk [vmem:[#allocation3 + $0x50] sm:$0xff] %vm1202, %v1196
      %1214 = vst.msk [vmem:[#allocation3 + $0x58] sm:$0xff] %vm1202, %v1197
      %1215 = vst.msk [vmem:[#allocation3 + $0x60] sm:$0xff] %vm1202, %v1198
      %1216 = vst.msk [vmem:[#allocation3 + $0x68] sm:$0xff] %vm1202, %v1199
      %1217 = vst.msk [vmem:[#allocation3 + $0x70] sm:$0xff] %vm1202, %v1200
      %1218 = vst.msk [vmem:[#allocation3 + $0x78] sm:$0xff] %vm1202, %v1201
      %v1219 = vld [vmem:[#allocation4] sm:$0xff]
      %v1220 = vld [vmem:[#allocation4 + $0x8] sm:$0xff]
      %v1221 = vld [vmem:[#allocation4 + $0x10] sm:$0xff]
      %v1222 = vld [vmem:[#allocation4 + $0x18] sm:$0xff]
      %v1223 = vld [vmem:[#allocation4 + $0x20] sm:$0xff]
      %v1224 = vld [vmem:[#allocation4 + $0x28] sm:$0xff]
      %v1225 = vld [vmem:[#allocation4 + $0x30] sm:$0xff]
      %v1226 = vld [vmem:[#allocation4 + $0x38] sm:$0xff]
      %v1227 = vld [vmem:[#allocation4 + $0x40] sm:$0xff]
      %v1228 = vld [vmem:[#allocation4 + $0x48] sm:$0xff]
      %v1229 = vld [vmem:[#allocation4 + $0x50] sm:$0xff]
      %v1230 = vld [vmem:[#allocation4 + $0x58] sm:$0xff]
      %v1231 = vld [vmem:[#allocation4 + $0x60] sm:$0xff]
      %v1232 = vld [vmem:[#allocation4 + $0x68] sm:$0xff]
      %v1233 = vld [vmem:[#allocation4 + $0x70] sm:$0xff]
      %v1234 = vld [vmem:[#allocation4 + $0x78] sm:$0xff]
      %1236 = vset.pattern.permute.xlu0 0
      %1237 = vperm.xlu0 %1236, %v947
      %v1238 = vpop.permute.xlu0 %1237
      %1241 = vset.pattern.permute.xlu0 0
      %1242 = vperm.xlu0 %1241, %v949
      %v1243 = vpop.permute.xlu0 %1242
      %1246 = vset.pattern.permute.xlu0 0
      %1247 = vperm.xlu0 %1246, %v951
      %v1248 = vpop.permute.xlu0 %1247
      %1251 = vset.pattern.permute.xlu0 0
      %1252 = vperm.xlu0 %1251, %v953
      %v1253 = vpop.permute.xlu0 %1252
      %1256 = vset.pattern.permute.xlu0 0
      %1257 = vperm.xlu0 %1256, %v955
      %v1258 = vpop.permute.xlu0 %1257
      %1261 = vset.pattern.permute.xlu0 0
      %1262 = vperm.xlu0 %1261, %v957
      %v1263 = vpop.permute.xlu0 %1262
      %1266 = vset.pattern.permute.xlu0 0
      %1267 = vperm.xlu0 %1266, %v959
      %v1268 = vpop.permute.xlu0 %1267
      %1271 = vset.pattern.permute.xlu0 0
      %1272 = vperm.xlu0 %1271, %v961
      %v1273 = vpop.permute.xlu0 %1272
      %1276 = vset.pattern.permute.xlu0 0
      %1277 = vperm.xlu0 %1276, %v963
      %v1278 = vpop.permute.xlu0 %1277
      %1281 = vset.pattern.permute.xlu0 0
      %1282 = vperm.xlu0 %1281, %v965
      %v1283 = vpop.permute.xlu0 %1282
      %1286 = vset.pattern.permute.xlu0 0
      %1287 = vperm.xlu0 %1286, %v967
      %v1288 = vpop.permute.xlu0 %1287
      %1291 = vset.pattern.permute.xlu0 0
      %1292 = vperm.xlu0 %1291, %v969
      %v1293 = vpop.permute.xlu0 %1292
      %1296 = vset.pattern.permute.xlu0 0
      %1297 = vperm.xlu0 %1296, %v971
      %v1298 = vpop.permute.xlu0 %1297
      %1301 = vset.pattern.permute.xlu0 0
      %1302 = vperm.xlu0 %1301, %v973
      %v1303 = vpop.permute.xlu0 %1302
      %1306 = vset.pattern.permute.xlu0 0
      %1307 = vperm.xlu0 %1306, %v975
      %v1308 = vpop.permute.xlu0 %1307
      %1311 = vset.pattern.permute.xlu0 0
      %1312 = vperm.xlu0 %1311, %v977
      %v1313 = vpop.permute.xlu0 %1312
      %v1315 = vmul.f32 %v1238, %v1219
      %v1316 = vmul.f32 %v1243, %v1220
      %v1317 = vmul.f32 %v1248, %v1221
      %v1318 = vmul.f32 %v1253, %v1222
      %v1319 = vmul.f32 %v1258, %v1223
      %v1320 = vmul.f32 %v1263, %v1224
      %v1321 = vmul.f32 %v1268, %v1225
      %v1322 = vmul.f32 %v1273, %v1226
      %v1323 = vmul.f32 %v1278, %v1227
      %v1324 = vmul.f32 %v1283, %v1228
      %v1325 = vmul.f32 %v1288, %v1229
      %v1326 = vmul.f32 %v1293, %v1230
      %v1327 = vmul.f32 %v1298, %v1231
      %v1328 = vmul.f32 %v1303, %v1232
      %v1329 = vmul.f32 %v1308, %v1233
      %v1330 = vmul.f32 %v1313, %v1234
      %v1331 = vpack.c.bf16 %v1077, %v1075
      %v1332 = vpack.c.bf16 %v1081, %v1079
      %v1333 = vpack.c.bf16 %v1085, %v1083
      %v1334 = vpack.c.bf16 %v1089, %v1087
      %v1335 = vpack.c.bf16 %v1093, %v1091
      %v1336 = vpack.c.bf16 %v1097, %v1095
      %v1337 = vpack.c.bf16 %v1101, %v1099
      %v1338 = vpack.c.bf16 %v1105, %v1103
      %v1341 = vunpack.c.l.b16 %v376
      %v1342 = vunpack.c.l.b16 %v377
      %v1343 = vpack.c.b16 %v1342, %v1341
      %v1346 = vsel %vm865, %v1331, 0
      %1348 = vmatprep.subr.bf16.mxu0 0
      %1349 = vmatpush1.bf16.msra.mxu0 %v1343
      %1350 = vmatprep.subr.bf16.mxu0 0
      %1351 = vmatpush1.bf16.msra.mxu0 0
      %1352 = vmatprep.subr.bf16.mxu0 0
      %1353 = vmatpush1.bf16.msra.mxu0 0
      %1354 = vmatprep.subr.bf16.mxu0 0
      %1355 = vmatpush1.bf16.msra.mxu0 0
      %1356 = vmatprep.subr.bf16.mxu0 0
      %1357 = vmatpush1.bf16.msra.mxu0 0
      %1358 = vmatprep.subr.bf16.mxu0 0
      %1359 = vmatpush1.bf16.msra.mxu0 0
      %1360 = vmatprep.subr.bf16.mxu0 0
      %1361 = vmatpush1.bf16.msra.mxu0 0
      %1362 = vmatprep.subr.bf16.mxu0 0
      %1363 = vmatpush1.bf16.msra.mxu0 0
      %1364 = vmatprep.subr.bf16.mxu0 0
      %1365 = vmatpush1.bf16.msra.mxu0 0
      %1366 = vmatprep.subr.bf16.mxu0 0
      %1367 = vmatpush1.bf16.msra.mxu0 0
      %1368 = vmatprep.subr.bf16.mxu0 0
      %1369 = vmatpush1.bf16.msra.mxu0 0
      %1370 = vmatprep.subr.bf16.mxu0 0
      %1371 = vmatpush1.bf16.msra.mxu0 0
      %1372 = vmatprep.subr.bf16.mxu0 0
      %1373 = vmatpush1.bf16.msra.mxu0 0
      %1374 = vmatprep.subr.bf16.mxu0 0
      %1375 = vmatpush1.bf16.msra.mxu0 0
      %1376 = vmatprep.subr.bf16.mxu0 0
      %1377 = vmatpush1.bf16.msra.mxu0 0
      %1378 = vmatprep.subr.bf16.mxu0 0
      %1379 = vmatpush1.bf16.msra.mxu0 0
      %1380 = vmatprep.mubr.bf16.mxu0 0
      %1381 = vmatmul.mubr.bf16.gmra.mrb[0].mxu0 %v1346
      %v1382 = vpop.f32.mrb[0].mxu0
      %v1383 = vadd.f32 0.0, %v1382
      %v1384 = vpop.f32.mrb[0].mxu0
      %v1385 = vpop.f32.mrb[0].mxu0
      %v1386 = vadd.f32 0.0, %v1385
      %v1387 = vpop.f32.mrb[0].mxu0
      %1388 = vdwg.mxu0
      %v1391 = vunpack.c.l.b16 %v378
      %v1392 = vunpack.c.l.b16 %v379
      %v1393 = vpack.c.b16 %v1392, %v1391
      %v1396 = vsel %vm865, %v1332, 0
      %1398 = vmatprep.subr.bf16.mxu0 0
      %1399 = vmatpush1.bf16.msra.mxu0 %v1393
      %1400 = vmatprep.subr.bf16.mxu0 0
      %1401 = vmatpush1.bf16.msra.mxu0 0
      %1402 = vmatprep.subr.bf16.mxu0 0
      %1403 = vmatpush1.bf16.msra.mxu0 0
      %1404 = vmatprep.subr.bf16.mxu0 0
      %1405 = vmatpush1.bf16.msra.mxu0 0
      %1406 = vmatprep.subr.bf16.mxu0 0
      %1407 = vmatpush1.bf16.msra.mxu0 0
      %1408 = vmatprep.subr.bf16.mxu0 0
      %1409 = vmatpush1.bf16.msra.mxu0 0
      %1410 = vmatprep.subr.bf16.mxu0 0
      %1411 = vmatpush1.bf16.msra.mxu0 0
      %1412 = vmatprep.subr.bf16.mxu0 0
      %1413 = vmatpush1.bf16.msra.mxu0 0
      %1414 = vmatprep.subr.bf16.mxu0 0
      %1415 = vmatpush1.bf16.msra.mxu0 0
      %1416 = vmatprep.subr.bf16.mxu0 0
      %1417 = vmatpush1.bf16.msra.mxu0 0
      %1418 = vmatprep.subr.bf16.mxu0 0
      %1419 = vmatpush1.bf16.msra.mxu0 0
      %1420 = vmatprep.subr.bf16.mxu0 0
      %1421 = vmatpush1.bf16.msra.mxu0 0
      %1422 = vmatprep.subr.bf16.mxu0 0
      %1423 = vmatpush1.bf16.msra.mxu0 0
      %1424 = vmatprep.subr.bf16.mxu0 0
      %1425 = vmatpush1.bf16.msra.mxu0 0
      %1426 = vmatprep.subr.bf16.mxu0 0
      %1427 = vmatpush1.bf16.msra.mxu0 0
      %1428 = vmatprep.subr.bf16.mxu0 0
      %1429 = vmatpush1.bf16.msra.mxu0 0
      %1430 = vmatprep.mubr.bf16.mxu0 0
      %1431 = vmatmul.mubr.bf16.gmra.mrb[0].mxu0 %v1396
      %v1432 = vpop.f32.mrb[0].mxu0
      %v1433 = vadd.f32 0.0, %v1432
      %v1434 = vpop.f32.mrb[0].mxu0
      %v1435 = vpop.f32.mrb[0].mxu0
      %v1436 = vadd.f32 0.0, %v1435
      %v1437 = vpop.f32.mrb[0].mxu0
      %1438 = vdwg.mxu0
      %v1441 = vunpack.c.l.b16 %v380
      %v1442 = vunpack.c.l.b16 %v381
      %v1443 = vpack.c.b16 %v1442, %v1441
      %v1446 = vsel %vm865, %v1333, 0
      %1448 = vmatprep.subr.bf16.mxu0 0
      %1449 = vmatpush1.bf16.msra.mxu0 %v1443
      %1450 = vmatprep.subr.bf16.mxu0 0
      %1451 = vmatpush1.bf16.msra.mxu0 0
      %1452 = vmatprep.subr.bf16.mxu0 0
      %1453 = vmatpush1.bf16.msra.mxu0 0
      %1454 = vmatprep.subr.bf16.mxu0 0
      %1455 = vmatpush1.bf16.msra.mxu0 0
      %1456 = vmatprep.subr.bf16.mxu0 0
      %1457 = vmatpush1.bf16.msra.mxu0 0
      %1458 = vmatprep.subr.bf16.mxu0 0
      %1459 = vmatpush1.bf16.msra.mxu0 0
      %1460 = vmatprep.subr.bf16.mxu0 0
      %1461 = vmatpush1.bf16.msra.mxu0 0
      %1462 = vmatprep.subr.bf16.mxu0 0
      %1463 = vmatpush1.bf16.msra.mxu0 0
      %1464 = vmatprep.subr.bf16.mxu0 0
      %1465 = vmatpush1.bf16.msra.mxu0 0
      %1466 = vmatprep.subr.bf16.mxu0 0
      %1467 = vmatpush1.bf16.msra.mxu0 0
      %1468 = vmatprep.subr.bf16.mxu0 0
      %1469 = vmatpush1.bf16.msra.mxu0 0
      %1470 = vmatprep.subr.bf16.mxu0 0
      %1471 = vmatpush1.bf16.msra.mxu0 0
      %1472 = vmatprep.subr.bf16.mxu0 0
      %1473 = vmatpush1.bf16.msra.mxu0 0
      %1474 = vmatprep.subr.bf16.mxu0 0
      %1475 = vmatpush1.bf16.msra.mxu0 0
      %1476 = vmatprep.subr.bf16.mxu0 0
      %1477 = vmatpush1.bf16.msra.mxu0 0
      %1478 = vmatprep.subr.bf16.mxu0 0
      %1479 = vmatpush1.bf16.msra.mxu0 0
      %1480 = vmatprep.mubr.bf16.mxu0 0
      %1481 = vmatmul.mubr.bf16.gmra.mrb[0].mxu0 %v1446
      %v1482 = vpop.f32.mrb[0].mxu0
      %v1483 = vadd.f32 0.0, %v1482
      %v1484 = vpop.f32.mrb[0].mxu0
      %v1485 = vpop.f32.mrb[0].mxu0
      %v1486 = vadd.f32 0.0, %v1485
      %v1487 = vpop.f32.mrb[0].mxu0
      %1488 = vdwg.mxu0
      %v1491 = vunpack.c.l.b16 %v382
      %v1492 = vunpack.c.l.b16 %v383
      %v1493 = vpack.c.b16 %v1492, %v1491
      %v1496 = vsel %vm865, %v1334, 0
      %1498 = vmatprep.subr.bf16.mxu0 0
      %1499 = vmatpush1.bf16.msra.mxu0 %v1493
      %1500 = vmatprep.subr.bf16.mxu0 0
      %1501 = vmatpush1.bf16.msra.mxu0 0
      %1502 = vmatprep.subr.bf16.mxu0 0
      %1503 = vmatpush1.bf16.msra.mxu0 0
      %1504 = vmatprep.subr.bf16.mxu0 0
      %1505 = vmatpush1.bf16.msra.mxu0 0
      %1506 = vmatprep.subr.bf16.mxu0 0
      %1507 = vmatpush1.bf16.msra.mxu0 0
      %1508 = vmatprep.subr.bf16.mxu0 0
      %1509 = vmatpush1.bf16.msra.mxu0 0
      %1510 = vmatprep.subr.bf16.mxu0 0
      %1511 = vmatpush1.bf16.msra.mxu0 0
      %1512 = vmatprep.subr.bf16.mxu0 0
      %1513 = vmatpush1.bf16.msra.mxu0 0
      %1514 = vmatprep.subr.bf16.mxu0 0
      %1515 = vmatpush1.bf16.msra.mxu0 0
      %1516 = vmatprep.subr.bf16.mxu0 0
      %1517 = vmatpush1.bf16.msra.mxu0 0
      %1518 = vmatprep.subr.bf16.mxu0 0
      %1519 = vmatpush1.bf16.msra.mxu0 0
      %1520 = vmatprep.subr.bf16.mxu0 0
      %1521 = vmatpush1.bf16.msra.mxu0 0
      %1522 = vmatprep.subr.bf16.mxu0 0
      %1523 = vmatpush1.bf16.msra.mxu0 0
      %1524 = vmatprep.subr.bf16.mxu0 0
      %1525 = vmatpush1.bf16.msra.mxu0 0
      %1526 = vmatprep.subr.bf16.mxu0 0
      %1527 = vmatpush1.bf16.msra.mxu0 0
      %1528 = vmatprep.subr.bf16.mxu0 0
      %1529 = vmatpush1.bf16.msra.mxu0 0
      %1530 = vmatprep.mubr.bf16.mxu0 0
      %1531 = vmatmul.mubr.bf16.gmra.mrb[0].mxu0 %v1496
      %v1532 = vpop.f32.mrb[0].mxu0
      %v1533 = vadd.f32 0.0, %v1532
      %v1534 = vpop.f32.mrb[0].mxu0
      %v1535 = vpop.f32.mrb[0].mxu0
      %v1536 = vadd.f32 0.0, %v1535
      %v1537 = vpop.f32.mrb[0].mxu0
      %1538 = vdwg.mxu0
      %v1541 = vunpack.c.l.b16 %v384
      %v1542 = vunpack.c.l.b16 %v385
      %v1543 = vpack.c.b16 %v1542, %v1541
      %v1546 = vsel %vm865, %v1335, 0
      %1548 = vmatprep.subr.bf16.mxu0 0
      %1549 = vmatpush1.bf16.msra.mxu0 %v1543
      %1550 = vmatprep.subr.bf16.mxu0 0
      %1551 = vmatpush1.bf16.msra.mxu0 0
      %1552 = vmatprep.subr.bf16.mxu0 0
      %1553 = vmatpush1.bf16.msra.mxu0 0
      %1554 = vmatprep.subr.bf16.mxu0 0
      %1555 = vmatpush1.bf16.msra.mxu0 0
      %1556 = vmatprep.subr.bf16.mxu0 0
      %1557 = vmatpush1.bf16.msra.mxu0 0
      %1558 = vmatprep.subr.bf16.mxu0 0
      %1559 = vmatpush1.bf16.msra.mxu0 0
      %1560 = vmatprep.subr.bf16.mxu0 0
      %1561 = vmatpush1.bf16.msra.mxu0 0
      %1562 = vmatprep.subr.bf16.mxu0 0
      %1563 = vmatpush1.bf16.msra.mxu0 0
      %1564 = vmatprep.subr.bf16.mxu0 0
      %1565 = vmatpush1.bf16.msra.mxu0 0
      %1566 = vmatprep.subr.bf16.mxu0 0
      %1567 = vmatpush1.bf16.msra.mxu0 0
      %1568 = vmatprep.subr.bf16.mxu0 0
      %1569 = vmatpush1.bf16.msra.mxu0 0
      %1570 = vmatprep.subr.bf16.mxu0 0
      %1571 = vmatpush1.bf16.msra.mxu0 0
      %1572 = vmatprep.subr.bf16.mxu0 0
      %1573 = vmatpush1.bf16.msra.mxu0 0
      %1574 = vmatprep.subr.bf16.mxu0 0
      %1575 = vmatpush1.bf16.msra.mxu0 0
      %1576 = vmatprep.subr.bf16.mxu0 0
      %1577 = vmatpush1.bf16.msra.mxu0 0
      %1578 = vmatprep.subr.bf16.mxu0 0
      %1579 = vmatpush1.bf16.msra.mxu0 0
      %1580 = vmatprep.mubr.bf16.mxu0 0
      %1581 = vmatmul.mubr.bf16.gmra.mrb[0].mxu0 %v1546
      %v1582 = vpop.f32.mrb[0].mxu0
      %v1583 = vadd.f32 0.0, %v1582
      %v1584 = vpop.f32.mrb[0].mxu0
      %v1585 = vpop.f32.mrb[0].mxu0
      %v1586 = vadd.f32 0.0, %v1585
      %v1587 = vpop.f32.mrb[0].mxu0
      %1588 = vdwg.mxu0
      %v1591 = vunpack.c.l.b16 %v386
      %v1592 = vunpack.c.l.b16 %v387
      %v1593 = vpack.c.b16 %v1592, %v1591
      %v1596 = vsel %vm865, %v1336, 0
      %1598 = vmatprep.subr.bf16.mxu0 0
      %1599 = vmatpush1.bf16.msra.mxu0 %v1593
      %1600 = vmatprep.subr.bf16.mxu0 0
      %1601 = vmatpush1.bf16.msra.mxu0 0
      %1602 = vmatprep.subr.bf16.mxu0 0
      %1603 = vmatpush1.bf16.msra.mxu0 0
      %1604 = vmatprep.subr.bf16.mxu0 0
      %1605 = vmatpush1.bf16.msra.mxu0 0
      %1606 = vmatprep.subr.bf16.mxu0 0
      %1607 = vmatpush1.bf16.msra.mxu0 0
      %1608 = vmatprep.subr.bf16.mxu0 0
      %1609 = vmatpush1.bf16.msra.mxu0 0
      %1610 = vmatprep.subr.bf16.mxu0 0
      %1611 = vmatpush1.bf16.msra.mxu0 0
      %1612 = vmatprep.subr.bf16.mxu0 0
      %1613 = vmatpush1.bf16.msra.mxu0 0
      %1614 = vmatprep.subr.bf16.mxu0 0
      %1615 = vmatpush1.bf16.msra.mxu0 0
      %1616 = vmatprep.subr.bf16.mxu0 0
      %1617 = vmatpush1.bf16.msra.mxu0 0
      %1618 = vmatprep.subr.bf16.mxu0 0
      %1619 = vmatpush1.bf16.msra.mxu0 0
      %1620 = vmatprep.subr.bf16.mxu0 0
      %1621 = vmatpush1.bf16.msra.mxu0 0
      %1622 = vmatprep.subr.bf16.mxu0 0
      %1623 = vmatpush1.bf16.msra.mxu0 0
      %1624 = vmatprep.subr.bf16.mxu0 0
      %1625 = vmatpush1.bf16.msra.mxu0 0
      %1626 = vmatprep.subr.bf16.mxu0 0
      %1627 = vmatpush1.bf16.msra.mxu0 0
      %1628 = vmatprep.subr.bf16.mxu0 0
      %1629 = vmatpush1.bf16.msra.mxu0 0
      %1630 = vmatprep.mubr.bf16.mxu0 0
      %1631 = vmatmul.mubr.bf16.gmra.mrb[0].mxu0 %v1596
      %v1632 = vpop.f32.mrb[0].mxu0
      %v1633 = vadd.f32 0.0, %v1632
      %v1634 = vpop.f32.mrb[0].mxu0
      %v1635 = vpop.f32.mrb[0].mxu0
      %v1636 = vadd.f32 0.0, %v1635
      %v1637 = vpop.f32.mrb[0].mxu0
      %1638 = vdwg.mxu0
      %v1641 = vunpack.c.l.b16 %v388
      %v1642 = vunpack.c.l.b16 %v389
      %v1643 = vpack.c.b16 %v1642, %v1641
      %v1646 = vsel %vm865, %v1337, 0
      %1648 = vmatprep.subr.bf16.mxu0 0
      %1649 = vmatpush1.bf16.msra.mxu0 %v1643
      %1650 = vmatprep.subr.bf16.mxu0 0
      %1651 = vmatpush1.bf16.msra.mxu0 0
      %1652 = vmatprep.subr.bf16.mxu0 0
      %1653 = vmatpush1.bf16.msra.mxu0 0
      %1654 = vmatprep.subr.bf16.mxu0 0
      %1655 = vmatpush1.bf16.msra.mxu0 0
      %1656 = vmatprep.subr.bf16.mxu0 0
      %1657 = vmatpush1.bf16.msra.mxu0 0
      %1658 = vmatprep.subr.bf16.mxu0 0
      %1659 = vmatpush1.bf16.msra.mxu0 0
      %1660 = vmatprep.subr.bf16.mxu0 0
      %1661 = vmatpush1.bf16.msra.mxu0 0
      %1662 = vmatprep.subr.bf16.mxu0 0
      %1663 = vmatpush1.bf16.msra.mxu0 0
      %1664 = vmatprep.subr.bf16.mxu0 0
      %1665 = vmatpush1.bf16.msra.mxu0 0
      %1666 = vmatprep.subr.bf16.mxu0 0
      %1667 = vmatpush1.bf16.msra.mxu0 0
      %1668 = vmatprep.subr.bf16.mxu0 0
      %1669 = vmatpush1.bf16.msra.mxu0 0
      %1670 = vmatprep.subr.bf16.mxu0 0
      %1671 = vmatpush1.bf16.msra.mxu0 0
      %1672 = vmatprep.subr.bf16.mxu0 0
      %1673 = vmatpush1.bf16.msra.mxu0 0
      %1674 = vmatprep.subr.bf16.mxu0 0
      %1675 = vmatpush1.bf16.msra.mxu0 0
      %1676 = vmatprep.subr.bf16.mxu0 0
      %1677 = vmatpush1.bf16.msra.mxu0 0
      %1678 = vmatprep.subr.bf16.mxu0 0
      %1679 = vmatpush1.bf16.msra.mxu0 0
      %1680 = vmatprep.mubr.bf16.mxu0 0
      %1681 = vmatmul.mubr.bf16.gmra.mrb[0].mxu0 %v1646
      %v1682 = vpop.f32.mrb[0].mxu0
      %v1683 = vadd.f32 0.0, %v1682
      %v1684 = vpop.f32.mrb[0].mxu0
      %v1685 = vpop.f32.mrb[0].mxu0
      %v1686 = vadd.f32 0.0, %v1685
      %v1687 = vpop.f32.mrb[0].mxu0
      %1688 = vdwg.mxu0
      %v1691 = vunpack.c.l.b16 %v390
      %v1692 = vunpack.c.l.b16 %v391
      %v1693 = vpack.c.b16 %v1692, %v1691
      %v1696 = vsel %vm865, %v1338, 0
      %1698 = vmatprep.subr.bf16.mxu0 0
      %1699 = vmatpush1.bf16.msra.mxu0 %v1693
      %1700 = vmatprep.subr.bf16.mxu0 0
      %1701 = vmatpush1.bf16.msra.mxu0 0
      %1702 = vmatprep.subr.bf16.mxu0 0
      %1703 = vmatpush1.bf16.msra.mxu0 0
      %1704 = vmatprep.subr.bf16.mxu0 0
      %1705 = vmatpush1.bf16.msra.mxu0 0
      %1706 = vmatprep.subr.bf16.mxu0 0
      %1707 = vmatpush1.bf16.msra.mxu0 0
      %1708 = vmatprep.subr.bf16.mxu0 0
      %1709 = vmatpush1.bf16.msra.mxu0 0
      %1710 = vmatprep.subr.bf16.mxu0 0
      %1711 = vmatpush1.bf16.msra.mxu0 0
      %1712 = vmatprep.subr.bf16.mxu0 0
      %1713 = vmatpush1.bf16.msra.mxu0 0
      %1714 = vmatprep.subr.bf16.mxu0 0
      %1715 = vmatpush1.bf16.msra.mxu0 0
      %1716 = vmatprep.subr.bf16.mxu0 0
      %1717 = vmatpush1.bf16.msra.mxu0 0
      %1718 = vmatprep.subr.bf16.mxu0 0
      %1719 = vmatpush1.bf16.msra.mxu0 0
      %1720 = vmatprep.subr.bf16.mxu0 0
      %1721 = vmatpush1.bf16.msra.mxu0 0
      %1722 = vmatprep.subr.bf16.mxu0 0
      %1723 = vmatpush1.bf16.msra.mxu0 0
      %1724 = vmatprep.subr.bf16.mxu0 0
      %1725 = vmatpush1.bf16.msra.mxu0 0
      %1726 = vmatprep.subr.bf16.mxu0 0
      %1727 = vmatpush1.bf16.msra.mxu0 0
      %1728 = vmatprep.subr.bf16.mxu0 0
      %1729 = vmatpush1.bf16.msra.mxu0 0
      %1730 = vmatprep.mubr.bf16.mxu0 0
      %1731 = vmatmul.mubr.bf16.gmra.mrb[0].mxu0 %v1696
      %v1732 = vpop.f32.mrb[0].mxu0
      %v1733 = vadd.f32 0.0, %v1732
      %v1734 = vpop.f32.mrb[0].mxu0
      %v1735 = vpop.f32.mrb[0].mxu0
      %v1736 = vadd.f32 0.0, %v1735
      %v1737 = vpop.f32.mrb[0].mxu0
      %1738 = vdwg.mxu0
      %v1739 = vadd.f32 %v1315, %v1383
      %v1740 = vadd.f32 %v1316, %v1386
      %v1741 = vadd.f32 %v1317, %v1433
      %v1742 = vadd.f32 %v1318, %v1436
      %v1743 = vadd.f32 %v1319, %v1483
      %v1744 = vadd.f32 %v1320, %v1486
      %v1745 = vadd.f32 %v1321, %v1533
      %v1746 = vadd.f32 %v1322, %v1536
      %v1747 = vadd.f32 %v1323, %v1583
      %v1748 = vadd.f32 %v1324, %v1586
      %v1749 = vadd.f32 %v1325, %v1633
      %v1750 = vadd.f32 %v1326, %v1636
      %v1751 = vadd.f32 %v1327, %v1683
      %v1752 = vadd.f32 %v1328, %v1686
      %v1753 = vadd.f32 %v1329, %v1733
      %v1754 = vadd.f32 %v1330, %v1736
      %1755 = vst.msk [vmem:[#allocation4] sm:$0xff] %vm402, %v1739
      %1756 = vst.msk [vmem:[#allocation4 + $0x8] sm:$0xff] %vm402, %v1740
      %1757 = vst.msk [vmem:[#allocation4 + $0x10] sm:$0xff] %vm402, %v1741
      %1758 = vst.msk [vmem:[#allocation4 + $0x18] sm:$0xff] %vm402, %v1742
      %1759 = vst.msk [vmem:[#allocation4 + $0x20] sm:$0xff] %vm402, %v1743
      %1760 = vst.msk [vmem:[#allocation4 + $0x28] sm:$0xff] %vm402, %v1744
      %1761 = vst.msk [vmem:[#allocation4 + $0x30] sm:$0xff] %vm402, %v1745
      %1762 = vst.msk [vmem:[#allocation4 + $0x38] sm:$0xff] %vm402, %v1746
      %1763 = vst.msk [vmem:[#allocation4 + $0x40] sm:$0xff] %vm402, %v1747
      %1764 = vst.msk [vmem:[#allocation4 + $0x48] sm:$0xff] %vm402, %v1748
      %1765 = vst.msk [vmem:[#allocation4 + $0x50] sm:$0xff] %vm402, %v1749
      %1766 = vst.msk [vmem:[#allocation4 + $0x58] sm:$0xff] %vm402, %v1750
      %1767 = vst.msk [vmem:[#allocation4 + $0x60] sm:$0xff] %vm402, %v1751
      %1768 = vst.msk [vmem:[#allocation4 + $0x68] sm:$0xff] %vm402, %v1752
      %1769 = vst.msk [vmem:[#allocation4 + $0x70] sm:$0xff] %vm402, %v1753
      %1770 = vst.msk [vmem:[#allocation4 + $0x78] sm:$0xff] %vm402, %v1754
      %1771 = vst.msk [vmem:[#allocation2] sm:$0xff] %vm1202, %v914
      %1772 = vst.msk [vmem:[#allocation2 + $0x8] sm:$0xff] %vm1202, %v915
      %1773 = vst.msk [vmem:[#allocation2 + $0x10] sm:$0xff] %vm1202, %v916
      %1774 = vst.msk [vmem:[#allocation2 + $0x18] sm:$0xff] %vm1202, %v917
      %1775 = vst.msk [vmem:[#allocation2 + $0x20] sm:$0xff] %vm1202, %v918
      %1776 = vst.msk [vmem:[#allocation2 + $0x28] sm:$0xff] %vm1202, %v919
      %1777 = vst.msk [vmem:[#allocation2 + $0x30] sm:$0xff] %vm1202, %v920
      %1778 = vst.msk [vmem:[#allocation2 + $0x38] sm:$0xff] %vm1202, %v921
      %1779 = vst.msk [vmem:[#allocation2 + $0x40] sm:$0xff] %vm1202, %v922
      %1780 = vst.msk [vmem:[#allocation2 + $0x48] sm:$0xff] %vm1202, %v923
      %1781 = vst.msk [vmem:[#allocation2 + $0x50] sm:$0xff] %vm1202, %v924
      %1782 = vst.msk [vmem:[#allocation2 + $0x58] sm:$0xff] %vm1202, %v925
      %1783 = vst.msk [vmem:[#allocation2 + $0x60] sm:$0xff] %vm1202, %v926
      %1784 = vst.msk [vmem:[#allocation2 + $0x68] sm:$0xff] %vm1202, %v927
      %1785 = vst.msk [vmem:[#allocation2 + $0x70] sm:$0xff] %vm1202, %v928
      %1786 = vst.msk [vmem:[#allocation2 + $0x78] sm:$0xff] %vm1202, %v929
      // Predicated region
      $region37: #{attention_forward.4} parent=31 // pred_check
        %p1787 = pneg %p290
      $region38: #{attention_forward.4} parent=31 // pred_check_branch
        %1789 = sbr.rel (%p1787) target = $region40
      $region39: #{attention_forward.4} parent=31 // pred_region
        %v1790 = vld [vmem:[#allocation3] sm:$0xff]
        %v1791 = vld [vmem:[#allocation3 + $0x8] sm:$0xff]
        %v1792 = vld [vmem:[#allocation3 + $0x10] sm:$0xff]
        %v1793 = vld [vmem:[#allocation3 + $0x18] sm:$0xff]
        %v1794 = vld [vmem:[#allocation3 + $0x20] sm:$0xff]
        %v1795 = vld [vmem:[#allocation3 + $0x28] sm:$0xff]
        %v1796 = vld [vmem:[#allocation3 + $0x30] sm:$0xff]
        %v1797 = vld [vmem:[#allocation3 + $0x38] sm:$0xff]
        %v1798 = vld [vmem:[#allocation3 + $0x40] sm:$0xff]
        %v1799 = vld [vmem:[#allocation3 + $0x48] sm:$0xff]
        %v1800 = vld [vmem:[#allocation3 + $0x50] sm:$0xff]
        %v1801 = vld [vmem:[#allocation3 + $0x58] sm:$0xff]
        %v1802 = vld [vmem:[#allocation3 + $0x60] sm:$0xff]
        %v1803 = vld [vmem:[#allocation3 + $0x68] sm:$0xff]
        %v1804 = vld [vmem:[#allocation3 + $0x70] sm:$0xff]
        %v1805 = vld [vmem:[#allocation3 + $0x78] sm:$0xff]
        %v1806 = vrcp.pop %v1790
        %v1807 = vrcp.pop %v1791
        %v1808 = vrcp.pop %v1792
        %v1809 = vrcp.pop %v1793
        %v1810 = vrcp.pop %v1794
        %v1811 = vrcp.pop %v1795
        %v1812 = vrcp.pop %v1796
        %v1813 = vrcp.pop %v1797
        %v1814 = vrcp.pop %v1798
        %v1815 = vrcp.pop %v1799
        %v1816 = vrcp.pop %v1800
        %v1817 = vrcp.pop %v1801
        %v1818 = vrcp.pop %v1802
        %v1819 = vrcp.pop %v1803
        %v1820 = vrcp.pop %v1804
        %v1821 = vrcp.pop %v1805
        %v1822 = vld [vmem:[#allocation4] sm:$0xff]
        %v1823 = vld [vmem:[#allocation4 + $0x8] sm:$0xff]
        %v1824 = vld [vmem:[#allocation4 + $0x10] sm:$0xff]
        %v1825 = vld [vmem:[#allocation4 + $0x18] sm:$0xff]
        %v1826 = vld [vmem:[#allocation4 + $0x20] sm:$0xff]
        %v1827 = vld [vmem:[#allocation4 + $0x28] sm:$0xff]
        %v1828 = vld [vmem:[#allocation4 + $0x30] sm:$0xff]
        %v1829 = vld [vmem:[#allocation4 + $0x38] sm:$0xff]
        %v1830 = vld [vmem:[#allocation4 + $0x40] sm:$0xff]
        %v1831 = vld [vmem:[#allocation4 + $0x48] sm:$0xff]
        %v1832 = vld [vmem:[#allocation4 + $0x50] sm:$0xff]
        %v1833 = vld [vmem:[#allocation4 + $0x58] sm:$0xff]
        %v1834 = vld [vmem:[#allocation4 + $0x60] sm:$0xff]
        %v1835 = vld [vmem:[#allocation4 + $0x68] sm:$0xff]
        %v1836 = vld [vmem:[#allocation4 + $0x70] sm:$0xff]
        %v1837 = vld [vmem:[#allocation4 + $0x78] sm:$0xff]
        %1839 = vset.pattern.permute.xlu0 0
        %1840 = vperm.xlu0 %1839, %v1806
        %v1841 = vpop.permute.xlu0 %1840
        %1844 = vset.pattern.permute.xlu0 0
        %1845 = vperm.xlu0 %1844, %v1807
        %v1846 = vpop.permute.xlu0 %1845
        %1849 = vset.pattern.permute.xlu0 0
        %1850 = vperm.xlu0 %1849, %v1808
        %v1851 = vpop.permute.xlu0 %1850
        %1854 = vset.pattern.permute.xlu0 0
        %1855 = vperm.xlu0 %1854, %v1809
        %v1856 = vpop.permute.xlu0 %1855
        %1859 = vset.pattern.permute.xlu0 0
        %1860 = vperm.xlu0 %1859, %v1810
        %v1861 = vpop.permute.xlu0 %1860
        %1864 = vset.pattern.permute.xlu0 0
        %1865 = vperm.xlu0 %1864, %v1811
        %v1866 = vpop.permute.xlu0 %1865
        %1869 = vset.pattern.permute.xlu0 0
        %1870 = vperm.xlu0 %1869, %v1812
        %v1871 = vpop.permute.xlu0 %1870
        %1874 = vset.pattern.permute.xlu0 0
        %1875 = vperm.xlu0 %1874, %v1813
        %v1876 = vpop.permute.xlu0 %1875
        %1879 = vset.pattern.permute.xlu0 0
        %1880 = vperm.xlu0 %1879, %v1814
        %v1881 = vpop.permute.xlu0 %1880
        %1884 = vset.pattern.permute.xlu0 0
        %1885 = vperm.xlu0 %1884, %v1815
        %v1886 = vpop.permute.xlu0 %1885
        %1889 = vset.pattern.permute.xlu0 0
        %1890 = vperm.xlu0 %1889, %v1816
        %v1891 = vpop.permute.xlu0 %1890
        %1894 = vset.pattern.permute.xlu0 0
        %1895 = vperm.xlu0 %1894, %v1817
        %v1896 = vpop.permute.xlu0 %1895
        %1899 = vset.pattern.permute.xlu0 0
        %1900 = vperm.xlu0 %1899, %v1818
        %v1901 = vpop.permute.xlu0 %1900
        %1904 = vset.pattern.permute.xlu0 0
        %1905 = vperm.xlu0 %1904, %v1819
        %v1906 = vpop.permute.xlu0 %1905
        %1909 = vset.pattern.permute.xlu0 0
        %1910 = vperm.xlu0 %1909, %v1820
        %v1911 = vpop.permute.xlu0 %1910
        %1914 = vset.pattern.permute.xlu0 0
        %1915 = vperm.xlu0 %1914, %v1821
        %v1916 = vpop.permute.xlu0 %1915
        %v1918 = vmul.f32 %v1822, %v1841
        %v1919 = vmul.f32 %v1823, %v1846
        %v1920 = vmul.f32 %v1824, %v1851
        %v1921 = vmul.f32 %v1825, %v1856
        %v1922 = vmul.f32 %v1826, %v1861
        %v1923 = vmul.f32 %v1827, %v1866
        %v1924 = vmul.f32 %v1828, %v1871
        %v1925 = vmul.f32 %v1829, %v1876
        %v1926 = vmul.f32 %v1830, %v1881
        %v1927 = vmul.f32 %v1831, %v1886
        %v1928 = vmul.f32 %v1832, %v1891
        %v1929 = vmul.f32 %v1833, %v1896
        %v1930 = vmul.f32 %v1834, %v1901
        %v1931 = vmul.f32 %v1835, %v1906
        %v1932 = vmul.f32 %v1836, %v1911
        %v1933 = vmul.f32 %v1837, %v1916
        %1936 = vrot.lane.b32.xlu0 %v1920, 8
        %v1937 = vpop.permute.xlu0 %1936
        %1938 = vrot.lane.b32.xlu0 %v1921, 8
        %v1939 = vpop.permute.xlu0 %1938
        %1944 = vrot.lane.b32.xlu0 %v1922, 16
        %v1945 = vpop.permute.xlu0 %1944
        %1946 = vrot.lane.b32.xlu0 %v1923, 16
        %v1947 = vpop.permute.xlu0 %1946
        %1952 = vrot.lane.b32.xlu0 %v1924, 24
        %v1953 = vpop.permute.xlu0 %1952
        %1954 = vrot.lane.b32.xlu0 %v1925, 24
        %v1955 = vpop.permute.xlu0 %1954
        %1960 = vrot.lane.b32.xlu0 %v1926, 32
        %v1961 = vpop.permute.xlu0 %1960
        %1962 = vrot.lane.b32.xlu0 %v1927, 32
        %v1963 = vpop.permute.xlu0 %1962
        %1968 = vrot.lane.b32.xlu0 %v1928, 40
        %v1969 = vpop.permute.xlu0 %1968
        %1970 = vrot.lane.b32.xlu0 %v1929, 40
        %v1971 = vpop.permute.xlu0 %1970
        %1976 = vrot.lane.b32.xlu0 %v1930, 48
        %v1977 = vpop.permute.xlu0 %1976
        %1978 = vrot.lane.b32.xlu0 %v1931, 48
        %v1979 = vpop.permute.xlu0 %1978
        %1984 = vrot.lane.b32.xlu0 %v1932, 56
        %v1985 = vpop.permute.xlu0 %1984
        %1986 = vrot.lane.b32.xlu0 %v1933, 56
        %v1987 = vpop.permute.xlu0 %1986
        %v1990 = vsel %vm402, %v1918, %v1937
        %v1991 = vsel %vm402, %v1919, %v1939
        %v1992 = vsel %vm865, %v1990, %v1945
        %v1993 = vsel %vm865, %v1991, %v1947
        %vm1994 = vcmask 195584
        %v1995 = vsel %vm1994, %v1992, %v1953
        %v1996 = vsel %vm1994, %v1993, %v1955
        %vm1997 = vcmask 261120
        %v1998 = vsel %vm1997, %v1995, %v1961
        %v1999 = vsel %vm1997, %v1996, %v1963
        %vm2000 = vcmask 326656
        %v2001 = vsel %vm2000, %v1998, %v1969
        %v2002 = vsel %vm2000, %v1999, %v1971
        %vm2003 = vcmask 392192
        %v2004 = vsel %vm2003, %v2001, %v1977
        %v2005 = vsel %vm2003, %v2002, %v1979
        %vm2006 = vcmask 457728
        %v2007 = vsel %vm2006, %v2004, %v1985
        %v2008 = vsel %vm2006, %v2005, %v1987
        %v2009 = vpack.c.bf16 %v2008, %v2007
        %v2011 = vunpack.c.l.b16 %v2009
        %v2012 = vunpack.c.h.b16 %v2009
        %v2013 = vpack.c.b16 %v2011, %v2011
        %v2014 = vpack.c.b16 %v2012, %v2012
        %vm2017 = vcmask 519168
        %2018 = vst.msk [vmem:[%s287] sm:$0xf] %vm2017, %v2013
        %2019 = vst.msk [vmem:[%s287 + $0x4] sm:$0xf] %vm2017, %v2014
      $region40: #{attention_forward.4} parent=31 // pred_fallthru
        _
      %s2020 = smul.u32 2, %s20
      %p2021 = scmp.lt.s32.totalorder %s19, 1
      %s2022 = scalar_select %p2021, %s19, 1
      %p2023 = scmp.lt.s32.totalorder %s2020, 1
      %s2024 = scalar_select %p2023, %s2020, 1
      %s2025 = smul.addr %s2022, 2
      %s2026 = sadd.s32 %s2024, %s2025
      %s2027 = smul.addr %s2026, 4
      %s2028 = scalar_lea.vmem %s3, %s2027
      // Predicated region
      $region41: #{attention_forward.4} parent=31 // pred_check
        %p2029 = pneg %p137
      $region42: #{attention_forward.4} parent=31 // pred_check_branch
        %2031 = sbr.rel (%p2029) target = $region44
      $region43: #{attention_forward.4} parent=31 // pred_region
        %s2032 = smul.u32 2, %s20
      $region44: #{attention_forward.4} parent=31 // pred_fallthru
        _
    $region32: #{attention_forward.4} parent=5 // pred_fallthru
      _
    %p2033 = scmp.le.s32.totalorder 2, %s9
    // Predicated region
    $region45: #{attention_forward.4} parent=5 // pred_check
      %p2034 = pneg %p2033
    $region46: #{attention_forward.4} parent=5 // pred_check_branch
      %2036 = sbr.rel (%p2034) target = $region48
    $region47: #{attention_forward.4} parent=5 // pred_region
      %s2037 = ssub.s32 %s9, 2
      // Predicated region
      $region49: #{attention_forward.4} parent=47 // pred_check
        %p2038 = pneg %p143
      $region50: #{attention_forward.4} parent=47 // pred_check_branch
        %2040 = sbr.rel (%p2038) target = $region52
      $region51: #{attention_forward.4} parent=47 // pred_region
        %s2041 = smul.u32 2, %s23
        %p2042 = scmp.lt.s32.totalorder %s22, 1
        %s2043 = scalar_select %p2042, %s22, 1
        %p2044 = scmp.lt.s32.totalorder %s2041, 1
        %s2045 = scalar_select %p2044, %s2041, 1
        %s2046 = smul.addr %s2043, 2
        %s2047 = sadd.s32 %s2045, %s2046
        %s2048 = smul.addr %s2047, 4
        %s2049 = scalar_lea.vmem %s3, %s2048
      $region52: #{attention_forward.4} parent=47 // pred_fallthru
        _
    $region48: #{attention_forward.4} parent=5 // pred_fallthru
      _
  $region6: #{attention_forward.4} parent=0 // loop_footer
    %s13 = sadd.s32 1, %s9
  $region7: #{attention_forward.4} parent=0 // loop_footer_branch
    %8 = sbr.rel target = $region3
  $region8: #{attention_forward.4} parent=0 // loop_exit
    _

</llo_original>
